<compile_context>
chip_gen: v7x
topology: tpu7x:2x2x1
jax: 0.10.0
libtpu: 0.0.40
codegen_flags: <defaults>
</compile_context>

<pallas_src>
import functools

import jax
import jax.numpy as jnp
from jax import lax
from jax.experimental import pallas as pl
from jax.experimental.pallas import tpu as pltpu

EPS = 1e-5

#   c_in, c_out, kernel_w, stride_w   (c_out=None -> fea_size)
CONV_CFG = [
    (2,   32,  64, 8),
    (32,  64,   5, 4),
    (64,  128,  6, 4),
    (128, 128,  3, 2),
    (128, None, 9, 1),
]


def _out_widths(w_in):
    ws, w = [], w_in
    for _, _, k, s in CONV_CFG:
        w = (w - k) // s + 1
        ws.append(w)
    return ws


def _round_up(x, m):
    return ((x + m - 1) // m) * m


# ------------------------------ fused Pallas kernel ---------------------------

def _fused_encoder_kernel(xp_ref, w0_ref, w1a_ref, w1b_ref, w2a_ref, w2b_ref,
                          w3a_ref, w3b_ref, w4_ref,
                          s0_ref, s1_ref, s2_ref, s3_ref, s4_ref,
                          o_ref,
                          a0g_ref, o1_ref, o1g_ref, o2_ref, o2g_ref, o3_ref, *, cfg):
    """Whole 5-stage encoder for one group of rows, fully VMEM-resident.

    xp_ref : (rows*p0, 4*128) bf16  grouped stage-0 im2col patches
    w*_ref : folded conv weights (bf16; stage 4 f32).
    s*_ref : (1, C) f32 shift = conv bias + eval-BN shift (stage 0 also folds the
             leading BatchNorm2d(2) constant term, tiled over the 4 lane groups).
    o_ref  : (rows*wo4, fea) single lane-contiguous output slab for this step.
    """
    (rows, p0, wo1, wo2, wo3, wo4, st2, st3, p3) = cfg
    c1 = w1b_ref.shape[0]          # 32   stage-1 input channels
    c2 = o1_ref.shape[1]           # 64   stage-2 input channels
    c3 = o2_ref.shape[1]           # 128  stage-3/4 input channels
    kb2 = w2b_ref.shape[0]         # (kw2 - st2) * c2 = 128
    kb3 = w3b_ref.shape[0]         # (kw3 - st3) * c3 = 128
    kw4 = w4_ref.shape[0]          # 9
    f32, bf16 = jnp.float32, jnp.bfloat16

    # ---- stage 0: one fat matmul for every row of this step --------------------
    # Block-diagonal weight => the result rows are already the stage-1 grouped
    # layout  a0g[g, q*32:(q+1)*32] = relu(conv0 out)[4g + q, :].
    h0 = jnp.dot(xp_ref[...], w0_ref[...], preferred_element_type=f32)
    a0g_ref[...] = jnp.maximum(h0 + s0_ref[...], 0.0).astype(bf16)

    # ---- stages 1-3, per row (static unroll, rows <= 6) ------------------------
    for r in range(rows):
        base = r * p0

        # stage 1: grouped conv (k=5, s=4) -> 2 matmuls, K = 4*32 and 1*32
        h1 = jnp.dot(a0g_ref[pl.ds(base, wo1), :], w1a_ref[...],
                     preferred_element_type=f32)
        h1 += jnp.dot(a0g_ref[pl.ds(base + 1, wo1), 0:c1], w1b_ref[...],
                      preferred_element_type=f32)
        o1_ref[pl.ds(0, wo1), :] = jnp.maximum(h1 + s1_ref[...], 0.0)

        # stage 2: regroup (W,64)->(W/4, 256) then 2 matmuls, K = 256 and 128
        for q in range(st2):
            o1g_ref[pl.ds(0, wo2 + 1), q * c2:(q + 1) * c2] = (
                o1_ref[pl.ds(q, wo2 + 1, stride=st2), :].astype(bf16))
        h2 = jnp.dot(o1g_ref[pl.ds(0, wo2), :], w2a_ref[...],
                     preferred_element_type=f32)
        h2 += jnp.dot(o1g_ref[pl.ds(1, wo2), 0:kb2], w2b_ref[...],
                      preferred_element_type=f32)
        o2_ref[pl.ds(0, wo2), :] = jnp.maximum(h2 + s2_ref[...], 0.0)

        # stage 3: regroup (W,128)->(W/2, 256) then 2 matmuls, K = 256 and 128
        for q in range(st3):
            o2g_ref[pl.ds(0, wo3 + 1), q * c3:(q + 1) * c3] = (
                o2_ref[pl.ds(q, wo3 + 1, stride=st3), :].astype(bf16))
        h3 = jnp.dot(o2g_ref[pl.ds(0, wo3), :], w3a_ref[...],
                     preferred_element_type=f32)
        h3 += jnp.dot(o2g_ref[pl.ds(1, wo3), 0:kb3], w3b_ref[...],
                      preferred_element_type=f32)
        o3_ref[pl.ds(r * p3, wo3), :] = jnp.maximum(h3 + s3_ref[...], 0.0)

    # ---- stage 4 (k=9, s=1) + tanh: batched across rows, one output store ------
    if wo4 == 1:
        acc = jnp.dot(o3_ref[pl.ds(0, rows, stride=p3), :], w4_ref[0],
                      preferred_element_type=f32)
        for j in range(1, kw4):
            acc += jnp.dot(o3_ref[pl.ds(j, rows, stride=p3), :], w4_ref[j],
                           preferred_element_type=f32)
        o_ref[...] = jnp.tanh(acc + s4_ref[...])
    else:
        for r in range(rows):
            acc = jnp.dot(o3_ref[pl.ds(r * p3, wo4), :], w4_ref[0],
                          preferred_element_type=f32)
            for j in range(1, kw4):
                acc += jnp.dot(o3_ref[pl.ds(r * p3 + j, wo4), :], w4_ref[j],
                               preferred_element_type=f32)
            o_ref[pl.ds(r * wo4, wo4), :] = jnp.tanh(acc + s4_ref[...])


def fused_time_encoder(patches, ws, shifts, *, widths, rows_per_step, p0):
    """patches: (n_steps, rows_per_step*p0, 512) bf16 -> (n_steps, rows*wo4, fea)."""
    n_steps = patches.shape[0]
    wo1, wo2, wo3, wo4 = widths[1], widths[2], widths[3], widths[4]
    c1, c2, c3 = CONV_CFG[1][0], CONV_CFG[2][0], CONV_CFG[3][0]
    st1, st2, st3 = CONV_CFG[1][3], CONV_CFG[2][3], CONV_CFG[3][3]
    fea = ws[-1].shape[-1]

    rows1 = _round_up(max(wo1, st2 * (wo2 + 1)), 8)     # 80
    rows2 = _round_up(max(wo2, st3 * (wo3 + 1)), 8)     # 24
    g2 = _round_up(wo2 + 1, 8)                          # 24
    g3 = _round_up(wo3 + 1, 8)                          # 16
    p3 = _round_up(wo3, 8)                              # 16

    cfg = (rows_per_step, p0, wo1, wo2, wo3, wo4, st2, st3, p3)
    kernel = functools.partial(_fused_encoder_kernel, cfg=cfg)

    def _const_spec(a):
        nd = a.ndim
        return pl.BlockSpec(a.shape, lambda g, _nd=nd: (0,) * _nd)

    def _nbytes(a):
        return int(a.size) * a.dtype.itemsize

    flops = 2 * n_steps * rows_per_step * (
        p0 * patches.shape[-1] * ws[0].shape[-1]
        + wo1 * (ws[1].shape[0] + ws[2].shape[0]) * c2
        + wo2 * (ws[3].shape[0] + ws[4].shape[0]) * c3
        + wo3 * (ws[5].shape[0] + ws[6].shape[0]) * c3
        + wo4 * ws[7].shape[0] * c3 * fea)
    bytes_accessed = (_nbytes(patches) + sum(_nbytes(w) for w in ws)
                      + sum(_nbytes(s) for s in shifts)
                      + n_steps * rows_per_step * wo4 * fea * 4)

    return pl.pallas_call(
        kernel,
        out_shape=jax.ShapeDtypeStruct((n_steps, rows_per_step * wo4, fea), jnp.float32),
        grid=(n_steps,),
        in_specs=([pl.BlockSpec((None,) + patches.shape[1:], lambda g: (g, 0, 0))]
                  + [_const_spec(w) for w in ws]
                  + [_const_spec(s) for s in shifts]),
        out_specs=pl.BlockSpec((None, rows_per_step * wo4, fea), lambda g: (g, 0, 0)),
        scratch_shapes=[
            pltpu.VMEM((rows_per_step * p0, st1 * c1), jnp.bfloat16),  # a0 grouped
            pltpu.VMEM((rows1, c2), jnp.float32),                      # stage-1 out
            pltpu.VMEM((g2, st2 * c2), jnp.bfloat16),                  # stage-2 grouped in
            pltpu.VMEM((rows2, c3), jnp.float32),                      # stage-2 out
            pltpu.VMEM((g3, st3 * c3), jnp.bfloat16),                  # stage-3 grouped in
            pltpu.VMEM((rows_per_step * p3, c3), jnp.float32),         # stage-3 out (all rows)
        ],
        compiler_params=pltpu.CompilerParams(dimension_semantics=("parallel",)),
        cost_estimate=pl.CostEstimate(
            flops=int(flops),
            transcendentals=int(n_steps * rows_per_step * wo4 * fea),
            bytes_accessed=int(bytes_accessed)),
    )(patches, *ws, *shifts)


# ------------------------------ parameter handling ----------------------------

def bn_affine(gamma, beta, mean, var):
    s = gamma / jnp.sqrt(var + EPS)
    return s, beta - mean * s


def init_raw_params(key, fea_size):
    cfg = [(ci, co if co is not None else fea_size, k, s) for ci, co, k, s in CONV_CFG]
    keys = iter(jax.random.split(key, 64))

    def bn(c):
        g = jax.random.uniform(next(keys), (c,), jnp.float32, 0.5, 1.5)
        b = 0.1 * jax.random.normal(next(keys), (c,), jnp.float32)
        m = 0.1 * jax.random.normal(next(keys), (c,), jnp.float32)
        v = jax.random.uniform(next(keys), (c,), jnp.float32, 0.5, 1.5)
        return g, b, m, v

    raw = {"cfg": cfg, "bn_in": bn(cfg[0][0]), "convs": []}
    for ci, co, k, s in cfg:
        wt = jax.random.normal(next(keys), (co, ci, k), jnp.float32) / jnp.sqrt(ci * k)
        b = 0.1 * jax.random.normal(next(keys), (co,), jnp.float32)
        raw["convs"].append({"w": wt, "b": b, "bn": bn(co), "stride": s})
    return raw


def kernel_params_from_raw(raw):
    """Fold BatchNorm2d(2), conv biases and every eval-BN into weights + shifts."""
    ps, pb = bn_affine(*raw["bn_in"])
    convs = raw["convs"]
    st1 = convs[1]["stride"]

    # stage 0: (C_out, C_in, K) -> (K*C_in, C_out) im2col matrix with the input
    # affine folded in, then block-diagonal expanded so one matmul emits its output
    # directly in stage-1's grouped (W/st1, st1*C_out) layout.
    s0, t0 = bn_affine(*convs[0]["bn"])
    w0_t = jnp.transpose(convs[0]["w"], (2, 1, 0))             # (K, C_in, C_out)
    w0_mat = (w0_t * ps[None, :, None] * s0[None, None, :]).reshape(-1, w0_t.shape[-1])
    shift0 = (convs[0]["b"] + jnp.einsum("kco,c->o", w0_t, pb)) * s0 + t0
    w0_blk = jnp.kron(jnp.eye(st1, dtype=w0_mat.dtype), w0_mat)           # (512, 128)
    s0_blk = jnp.tile(shift0, st1)[None, :]                               # (1, 128)

    ws = [w0_blk.astype(jnp.bfloat16)]
    shifts = [s0_blk]

    # stages 1-3: grouped im2col weights (taps 0..s-1 stacked, taps s..k-1 stacked).
    for conv in convs[1:4]:
        cout, cin, kw = conv["w"].shape
        stride = conv["stride"]
        s, t = bn_affine(*conv["bn"])
        w_t = jnp.transpose(conv["w"], (2, 1, 0)) * s[None, None, :]      # (K, Cin, Cout)
        ws.append(w_t[:stride].reshape(stride * cin, cout).astype(jnp.bfloat16))
        ws.append(w_t[stride:].reshape((kw - stride) * cin, cout).astype(jnp.bfloat16))
        shifts.append((conv["b"] * s + t)[None, :])

    # stage 4 (k=9, stride=1): per-tap, f32 (contracts the f32 stage-3 scratch).
    conv = convs[4]
    s, t = bn_affine(*conv["bn"])
    ws.append((jnp.transpose(conv["w"], (2, 1, 0)) * s[None, None, :]).astype(jnp.float32))
    shifts.append((conv["b"] * s + t)[None, :])
    return {"w": ws, "shift": shifts}


# --------------------------------- forward ------------------------------------

def time_encoder_forward(x_nchw, kp):
    b, c, h, w = x_nchw.shape
    widths = _out_widths(w)
    wo0, wo4 = widths[0], widths[4]
    k0, st0 = CONV_CFG[0][2], CONV_CFG[0][3]
    st1 = CONV_CFG[1][3]
    assert wo4 >= 1, "input width too small for the conv stack"

    # NCHW -> channels-last rows (B*H, W, C): kernel height is 1 for every conv,
    # so each (batch, height) row is an independent 1-D sequence.
    rows = jnp.transpose(x_nchw, (0, 2, 3, 1)).reshape(b * h, w, c)

    # Grouped stage-0 im2col (layout plumbing only): grouped row g, lane block q
    # holds the whole K0*C_in patch of output position st1*g + q, matching the
    # block-diagonal stage-0 weight.  Padding slots are clamped to the last valid
    # position (finite values; never contracted with nonzero weights).
    p0 = _round_up(-(-wo0 // st1), 8)
    pos = jnp.minimum(jnp.arange(p0)[:, None] * st1 + jnp.arange(st1)[None, :], wo0 - 1)
    widx = pos[..., None] * st0 + jnp.arange(k0)[None, None, :]          # (p0, st1, k0)
    patches = rows[:, widx, :].reshape(b * h, p0, st1 * k0 * c)

    n = b * h
    n_steps = 2 if (n % 2 == 0 and n >= 2) else 1       # 2 parallel steps -> both v7x TCs
    rows_per_step = n // n_steps
    patches = patches.reshape(n_steps, rows_per_step * p0, st1 * k0 * c).astype(jnp.bfloat16)

    y = fused_time_encoder(patches, kp["w"], kp["shift"],
                           widths=widths, rows_per_step=rows_per_step, p0=p0)
    fea = y.shape[-1]
    # matches encoder(x).view(B, fea, -1).transpose(2, 1) -> (B, H*W_out4, fea)
    return y.reshape(b, h * wo4, fea)


# ----------------------------- pure-JAX reference ------------------------------

def reference_forward(x, raw):
    def bn4(hh, p):
        g, b, m, v = p
        return ((hh - m[None, :, None, None])
                / jnp.sqrt(v[None, :, None, None] + EPS)
                * g[None, :, None, None] + b[None, :, None, None])

    h = bn4(x, raw["bn_in"])
    n_conv = len(raw["convs"])
    for i, conv in enumerate(raw["convs"]):
        w4 = conv["w"][:, :, None, :]                          # OIHW, kernel height 1
        h = lax.conv_general_dilated(
            h, w4, window_strides=(1, conv["stride"]), padding="VALID",
            dimension_numbers=("NCHW", "OIHW", "NCHW"),
            precision=lax.Precision.HIGHEST)
        h = h + conv["b"][None, :, None, None]
        h = bn4(h, conv["bn"])
        h = jnp.maximum(h, 0.0) if i < n_conv - 1 else jnp.tanh(h)
    b = x.shape[0]
    fea = h.shape[1]
    return jnp.transpose(h.reshape(b, fea, -1), (0, 2, 1))


# ----------------------------------- main --------------------------------------

if __name__ == "__main__":
    fea_size = 16
    B, C_IN, H, W = 2, 2, 3, 2560   # W=2560 is the minimum width the conv stack accepts

    key = jax.random.PRNGKey(0)
    k_param, k_x = jax.random.split(key)
    raw = init_raw_params(k_param, fea_size)
    kp = kernel_params_from_raw(raw)
    x = jax.random.normal(k_x, (B, C_IN, H, W), jnp.float32)

    fwd = jax.jit(time_encoder_forward)
    out = jax.block_until_ready(fwd(x, kp))

    ref = reference_forward(x, raw)
    assert out.shape == ref.shape, (out.shape, ref.shape)
    err_max = float(jnp.max(jnp.abs(out - ref)))
    err_mean = float(jnp.mean(jnp.abs(out - ref)))
    # Kernel uses bf16 MXU operands (f32 accumulation) vs the f32 HIGHEST-precision
    # reference: tanh outputs agree to ~1e-2 absolute.
    if err_max > 0.1 or err_mean > 0.02:
        raise AssertionError(
            f"Pallas TimeEncoder mismatch vs reference: max={err_max} mean={err_mean}")
    print("KERNEL_OK")
</pallas_src>

<mosaic_0001>
module attributes {stable_mosaic.version = 11 : i64} {
  func.func @_fused_encoder_kernel(%arg0: i32, %arg1: memref<1x240x512xbf16, #tpu.memory_space<vmem>>, %arg2: memref<512x128xbf16, #tpu.memory_space<vmem>>, %arg3: memref<128x64xbf16, #tpu.memory_space<vmem>>, %arg4: memref<32x64xbf16, #tpu.memory_space<vmem>>, %arg5: memref<256x128xbf16, #tpu.memory_space<vmem>>, %arg6: memref<128x128xbf16, #tpu.memory_space<vmem>>, %arg7: memref<256x128xbf16, #tpu.memory_space<vmem>>, %arg8: memref<128x128xbf16, #tpu.memory_space<vmem>>, %arg9: memref<9x128x16xf32, #tpu.memory_space<vmem>>, %arg10: memref<1x128xf32, #tpu.memory_space<vmem>>, %arg11: memref<1x64xf32, #tpu.memory_space<vmem>>, %arg12: memref<1x128xf32, #tpu.memory_space<vmem>>, %arg13: memref<1x128xf32, #tpu.memory_space<vmem>>, %arg14: memref<1x16xf32, #tpu.memory_space<vmem>>, %arg15: memref<1x3x16xf32, #tpu.memory_space<vmem>>, %arg16: memref<240x128xbf16, #tpu.memory_space<vmem>>, %arg17: memref<80x64xf32, #tpu.memory_space<vmem>>, %arg18: memref<24x256xbf16, #tpu.memory_space<vmem>>, %arg19: memref<24x128xf32, #tpu.memory_space<vmem>>, %arg20: memref<16x256xbf16, #tpu.memory_space<vmem>>, %arg21: memref<48x128xf32, #tpu.memory_space<vmem>>) attributes {dimension_semantics = [#tpu.dimension_semantics<parallel>], iteration_bounds = array<i64: 2>, scalar_prefetch = 0 : i64, scratch_operands = 6 : i64, tpu.core_type = #tpu.core_type<tc>, window_params = [{transform_indices = @transform_0, window_bounds = array<i64: 1, 240, 512>}, {pipeline_mode = #tpu.pipeline_mode<synchronous>, transform_indices = @transform_1, window_bounds = array<i64: 512, 128>}, {pipeline_mode = #tpu.pipeline_mode<synchronous>, transform_indices = @transform_2, window_bounds = array<i64: 128, 64>}, {pipeline_mode = #tpu.pipeline_mode<synchronous>, transform_indices = @transform_3, window_bounds = array<i64: 32, 64>}, {pipeline_mode = #tpu.pipeline_mode<synchronous>, transform_indices = @transform_4, window_bounds = array<i64: 256, 128>}, {pipeline_mode = #tpu.pipeline_mode<synchronous>, transform_indices = @transform_5, window_bounds = array<i64: 128, 128>}, {pipeline_mode = #tpu.pipeline_mode<synchronous>, transform_indices = @transform_6, window_bounds = array<i64: 256, 128>}, {pipeline_mode = #tpu.pipeline_mode<synchronous>, transform_indices = @transform_7, window_bounds = array<i64: 128, 128>}, {pipeline_mode = #tpu.pipeline_mode<synchronous>, transform_indices = @transform_8, window_bounds = array<i64: 9, 128, 16>}, {pipeline_mode = #tpu.pipeline_mode<synchronous>, transform_indices = @transform_9, window_bounds = array<i64: 1, 128>}, {pipeline_mode = #tpu.pipeline_mode<synchronous>, transform_indices = @transform_10, window_bounds = array<i64: 1, 64>}, {pipeline_mode = #tpu.pipeline_mode<synchronous>, transform_indices = @transform_11, window_bounds = array<i64: 1, 128>}, {pipeline_mode = #tpu.pipeline_mode<synchronous>, transform_indices = @transform_12, window_bounds = array<i64: 1, 128>}, {pipeline_mode = #tpu.pipeline_mode<synchronous>, transform_indices = @transform_13, window_bounds = array<i64: 1, 16>}, {transform_indices = @transform_14, window_bounds = array<i64: 1, 3, 16>}]} {
    %c0 = arith.constant 0 : index
    %c0_0 = arith.constant 0 : index
    %c0_1 = arith.constant 0 : index
    %0 = vector.load %arg1[%c0, %c0_0, %c0_1] : memref<1x240x512xbf16, #tpu.memory_space<vmem>>, vector<1x240x512xbf16>
    %1 = vector.shape_cast %0 : vector<1x240x512xbf16> to vector<240x512xbf16>
    %c0_2 = arith.constant 0 : index
    %c0_3 = arith.constant 0 : index
    %2 = vector.load %arg2[%c0_2, %c0_3] : memref<512x128xbf16, #tpu.memory_space<vmem>>, vector<512x128xbf16>
    %cst = arith.constant dense<0.000000e+00> : vector<240x128xf32>
    %3 = tpu.matmul %1, %2, %cst {dimension_numbers = #tpu.dot_dimension_numbers<[1], [0], [0], [1], [0, 0, 1, 1], [], []>} : vector<240x512xbf16>, vector<512x128xbf16>, vector<240x128xf32> -> vector<240x128xf32>
    %c0_4 = arith.constant 0 : index
    %c0_5 = arith.constant 0 : index
    %4 = vector.load %arg10[%c0_4, %c0_5] : memref<1x128xf32, #tpu.memory_space<vmem>>, vector<1x128xf32>
    %5 = vector.broadcast %4 : vector<1x128xf32> to vector<240x128xf32>
    %6 = arith.addf %3, %5 : vector<240x128xf32>
    %cst_6 = arith.constant 0.000000e+00 : f32
    %7 = vector.broadcast %cst_6 : f32 to vector<240x128xf32>
    %8 = arith.maximumf %6, %7 : vector<240x128xf32>
    %9 = arith.truncf %8 : vector<240x128xf32> to vector<240x128xbf16>
    %c0_7 = arith.constant 0 : index
    %c0_8 = arith.constant 0 : index
    %10 = vector.load %arg16[%c0_7, %c0_8] : memref<240x128xbf16, #tpu.memory_space<vmem>>, vector<240x128xbf16>
    tpu.vector_store %arg16[%c0_7, %c0_8], %9 {strides = array<i32>} : memref<240x128xbf16, #tpu.memory_space<vmem>>, vector<240x128xbf16>,
    %c0_9 = arith.constant 0 : index
    %c0_10 = arith.constant 0 : index
    %11 = vector.load %arg16[%c0_9, %c0_10] : memref<240x128xbf16, #tpu.memory_space<vmem>>, vector<78x128xbf16>
    %c0_11 = arith.constant 0 : index
    %c0_12 = arith.constant 0 : index
    %12 = vector.load %arg3[%c0_11, %c0_12] : memref<128x64xbf16, #tpu.memory_space<vmem>>, vector<128x64xbf16>
    %cst_13 = arith.constant dense<0.000000e+00> : vector<78x64xf32>
    %13 = tpu.matmul %11, %12, %cst_13 {dimension_numbers = #tpu.dot_dimension_numbers<[1], [0], [0], [1], [0, 0, 1, 1], [], []>} : vector<78x128xbf16>, vector<128x64xbf16>, vector<78x64xf32> -> vector<78x64xf32>
    %c1 = arith.constant 1 : index
    %c0_14 = arith.constant 0 : index
    %14 = vector.load %arg16[%c1, %c0_14] : memref<240x128xbf16, #tpu.memory_space<vmem>>, vector<78x32xbf16>
    %c0_15 = arith.constant 0 : index
    %c0_16 = arith.constant 0 : index
    %15 = vector.load %arg4[%c0_15, %c0_16] : memref<32x64xbf16, #tpu.memory_space<vmem>>, vector<32x64xbf16>
    %cst_17 = arith.constant dense<0.000000e+00> : vector<78x64xf32>
    %16 = tpu.matmul %14, %15, %cst_17 {dimension_numbers = #tpu.dot_dimension_numbers<[1], [0], [0], [1], [0, 0, 1, 1], [], []>} : vector<78x32xbf16>, vector<32x64xbf16>, vector<78x64xf32> -> vector<78x64xf32>
    %17 = arith.addf %13, %16 : vector<78x64xf32>
    %c0_18 = arith.constant 0 : index
    %c0_19 = arith.constant 0 : index
    %18 = vector.load %arg11[%c0_18, %c0_19] : memref<1x64xf32, #tpu.memory_space<vmem>>, vector<1x64xf32>
    %19 = vector.broadcast %18 : vector<1x64xf32> to vector<78x64xf32>
    %20 = arith.addf %17, %19 : vector<78x64xf32>
    %cst_20 = arith.constant 0.000000e+00 : f32
    %21 = vector.broadcast %cst_20 : f32 to vector<78x64xf32>
    %22 = arith.maximumf %20, %21 : vector<78x64xf32>
    %c0_21 = arith.constant 0 : index
    %c0_22 = arith.constant 0 : index
    %23 = vector.load %arg17[%c0_21, %c0_22] : memref<80x64xf32, #tpu.memory_space<vmem>>, vector<78x64xf32>
    tpu.vector_store %arg17[%c0_21, %c0_22], %22 {strides = array<i32>} : memref<80x64xf32, #tpu.memory_space<vmem>>, vector<78x64xf32>,
    %c0_23 = arith.constant 0 : index
    %c0_24 = arith.constant 0 : index
    %24 = tpu.strided_load %arg17[%c0_23, %c0_24] {strides = array<i32: 4, 1>} : memref<80x64xf32, #tpu.memory_space<vmem>>, vector<20x64xf32>
    %25 = arith.truncf %24 : vector<20x64xf32> to vector<20x64xbf16>
    %c0_25 = arith.constant 0 : index
    %c0_26 = arith.constant 0 : index
    %26 = vector.load %arg18[%c0_25, %c0_26] : memref<24x256xbf16, #tpu.memory_space<vmem>>, vector<20x64xbf16>
    tpu.vector_store %arg18[%c0_25, %c0_26], %25 {strides = array<i32>} : memref<24x256xbf16, #tpu.memory_space<vmem>>, vector<20x64xbf16>,
    %c1_27 = arith.constant 1 : index
    %c0_28 = arith.constant 0 : index
    %27 = tpu.strided_load %arg17[%c1_27, %c0_28] {strides = array<i32: 4, 1>} : memref<80x64xf32, #tpu.memory_space<vmem>>, vector<20x64xf32>
    %28 = arith.truncf %27 : vector<20x64xf32> to vector<20x64xbf16>
    %c0_29 = arith.constant 0 : index
    %c64 = arith.constant 64 : index
    %29 = vector.load %arg18[%c0_29, %c64] : memref<24x256xbf16, #tpu.memory_space<vmem>>, vector<20x64xbf16>
    tpu.vector_store %arg18[%c0_29, %c64], %28 {strides = array<i32>} : memref<24x256xbf16, #tpu.memory_space<vmem>>, vector<20x64xbf16>,
    %c2 = arith.constant 2 : index
    %c0_30 = arith.constant 0 : index
    %30 = tpu.strided_load %arg17[%c2, %c0_30] {strides = array<i32: 4, 1>} : memref<80x64xf32, #tpu.memory_space<vmem>>, vector<20x64xf32>
    %31 = arith.truncf %30 : vector<20x64xf32> to vector<20x64xbf16>
    %c0_31 = arith.constant 0 : index
    %c128 = arith.constant 128 : index
    %32 = vector.load %arg18[%c0_31, %c128] : memref<24x256xbf16, #tpu.memory_space<vmem>>, vector<20x64xbf16>
    tpu.vector_store %arg18[%c0_31, %c128], %31 {strides = array<i32>} : memref<24x256xbf16, #tpu.memory_space<vmem>>, vector<20x64xbf16>,
    %c3 = arith.constant 3 : index
    %c0_32 = arith.constant 0 : index
    %33 = tpu.strided_load %arg17[%c3, %c0_32] {strides = array<i32: 4, 1>} : memref<80x64xf32, #tpu.memory_space<vmem>>, vector<20x64xf32>
    %34 = arith.truncf %33 : vector<20x64xf32> to vector<20x64xbf16>
    %c0_33 = arith.constant 0 : index
    %c192 = arith.constant 192 : index
    %35 = vector.load %arg18[%c0_33, %c192] : memref<24x256xbf16, #tpu.memory_space<vmem>>, vector<20x64xbf16>
    tpu.vector_store %arg18[%c0_33, %c192], %34 {strides = array<i32>} : memref<24x256xbf16, #tpu.memory_space<vmem>>, vector<20x64xbf16>,
    %c0_34 = arith.constant 0 : index
    %c0_35 = arith.constant 0 : index
    %36 = vector.load %arg18[%c0_34, %c0_35] : memref<24x256xbf16, #tpu.memory_space<vmem>>, vector<19x256xbf16>
    %c0_36 = arith.constant 0 : index
    %c0_37 = arith.constant 0 : index
    %37 = vector.load %arg5[%c0_36, %c0_37] : memref<256x128xbf16, #tpu.memory_space<vmem>>, vector<256x128xbf16>
    %cst_38 = arith.constant dense<0.000000e+00> : vector<19x128xf32>
    %38 = tpu.matmul %36, %37, %cst_38 {dimension_numbers = #tpu.dot_dimension_numbers<[1], [0], [0], [1], [0, 0, 1, 1], [], []>} : vector<19x256xbf16>, vector<256x128xbf16>, vector<19x128xf32> -> vector<19x128xf32>
    %c1_39 = arith.constant 1 : index
    %c0_40 = arith.constant 0 : index
    %39 = vector.load %arg18[%c1_39, %c0_40] : memref<24x256xbf16, #tpu.memory_space<vmem>>, vector<19x128xbf16>
    %c0_41 = arith.constant 0 : index
    %c0_42 = arith.constant 0 : index
    %40 = vector.load %arg6[%c0_41, %c0_42] : memref<128x128xbf16, #tpu.memory_space<vmem>>, vector<128x128xbf16>
    %cst_43 = arith.constant dense<0.000000e+00> : vector<19x128xf32>
    %41 = tpu.matmul %39, %40, %cst_43 {dimension_numbers = #tpu.dot_dimension_numbers<[1], [0], [0], [1], [0, 0, 1, 1], [], []>} : vector<19x128xbf16>, vector<128x128xbf16>, vector<19x128xf32> -> vector<19x128xf32>
    %42 = arith.addf %38, %41 : vector<19x128xf32>
    %c0_44 = arith.constant 0 : index
    %c0_45 = arith.constant 0 : index
    %43 = vector.load %arg12[%c0_44, %c0_45] : memref<1x128xf32, #tpu.memory_space<vmem>>, vector<1x128xf32>
    %44 = vector.broadcast %43 : vector<1x128xf32> to vector<19x128xf32>
    %45 = arith.addf %42, %44 : vector<19x128xf32>
    %cst_46 = arith.constant 0.000000e+00 : f32
    %46 = vector.broadcast %cst_46 : f32 to vector<19x128xf32>
    %47 = arith.maximumf %45, %46 : vector<19x128xf32>
    %c0_47 = arith.constant 0 : index
    %c0_48 = arith.constant 0 : index
    %48 = vector.load %arg19[%c0_47, %c0_48] : memref<24x128xf32, #tpu.memory_space<vmem>>, vector<19x128xf32>
    tpu.vector_store %arg19[%c0_47, %c0_48], %47 {strides = array<i32>} : memref<24x128xf32, #tpu.memory_space<vmem>>, vector<19x128xf32>,
    %c0_49 = arith.constant 0 : index
    %c0_50 = arith.constant 0 : index
    %49 = tpu.strided_load %arg19[%c0_49, %c0_50] {strides = array<i32: 2, 1>} : memref<24x128xf32, #tpu.memory_space<vmem>>, vector<10x128xf32>
    %50 = arith.truncf %49 : vector<10x128xf32> to vector<10x128xbf16>
    %c0_51 = arith.constant 0 : index
    %c0_52 = arith.constant 0 : index
    %51 = vector.load %arg20[%c0_51, %c0_52] : memref<16x256xbf16, #tpu.memory_space<vmem>>, vector<10x128xbf16>
    tpu.vector_store %arg20[%c0_51, %c0_52], %50 {strides = array<i32>} : memref<16x256xbf16, #tpu.memory_space<vmem>>, vector<10x128xbf16>,
    %c1_53 = arith.constant 1 : index
    %c0_54 = arith.constant 0 : index
    %52 = tpu.strided_load %arg19[%c1_53, %c0_54] {strides = array<i32: 2, 1>} : memref<24x128xf32, #tpu.memory_space<vmem>>, vector<10x128xf32>
    %53 = arith.truncf %52 : vector<10x128xf32> to vector<10x128xbf16>
    %c0_55 = arith.constant 0 : index
    %c128_56 = arith.constant 128 : index
    %54 = vector.load %arg20[%c0_55, %c128_56] : memref<16x256xbf16, #tpu.memory_space<vmem>>, vector<10x128xbf16>
    tpu.vector_store %arg20[%c0_55, %c128_56], %53 {strides = array<i32>} : memref<16x256xbf16, #tpu.memory_space<vmem>>, vector<10x128xbf16>,
    %c0_57 = arith.constant 0 : index
    %c0_58 = arith.constant 0 : index
    %55 = vector.load %arg20[%c0_57, %c0_58] : memref<16x256xbf16, #tpu.memory_space<vmem>>, vector<9x256xbf16>
    %c0_59 = arith.constant 0 : index
    %c0_60 = arith.constant 0 : index
    %56 = vector.load %arg7[%c0_59, %c0_60] : memref<256x128xbf16, #tpu.memory_space<vmem>>, vector<256x128xbf16>
    %cst_61 = arith.constant dense<0.000000e+00> : vector<9x128xf32>
    %57 = tpu.matmul %55, %56, %cst_61 {dimension_numbers = #tpu.dot_dimension_numbers<[1], [0], [0], [1], [0, 0, 1, 1], [], []>} : vector<9x256xbf16>, vector<256x128xbf16>, vector<9x128xf32> -> vector<9x128xf32>
    %c1_62 = arith.constant 1 : index
    %c0_63 = arith.constant 0 : index
    %58 = vector.load %arg20[%c1_62, %c0_63] : memref<16x256xbf16, #tpu.memory_space<vmem>>, vector<9x128xbf16>
    %c0_64 = arith.constant 0 : index
    %c0_65 = arith.constant 0 : index
    %59 = vector.load %arg8[%c0_64, %c0_65] : memref<128x128xbf16, #tpu.memory_space<vmem>>, vector<128x128xbf16>
    %cst_66 = arith.constant dense<0.000000e+00> : vector<9x128xf32>
    %60 = tpu.matmul %58, %59, %cst_66 {dimension_numbers = #tpu.dot_dimension_numbers<[1], [0], [0], [1], [0, 0, 1, 1], [], []>} : vector<9x128xbf16>, vector<128x128xbf16>, vector<9x128xf32> -> vector<9x128xf32>
    %61 = arith.addf %57, %60 : vector<9x128xf32>
    %c0_67 = arith.constant 0 : index
    %c0_68 = arith.constant 0 : index
    %62 = vector.load %arg13[%c0_67, %c0_68] : memref<1x128xf32, #tpu.memory_space<vmem>>, vector<1x128xf32>
    %63 = vector.broadcast %62 : vector<1x128xf32> to vector<9x128xf32>
    %64 = arith.addf %61, %63 : vector<9x128xf32>
    %cst_69 = arith.constant 0.000000e+00 : f32
    %65 = vector.broadcast %cst_69 : f32 to vector<9x128xf32>
    %66 = arith.maximumf %64, %65 : vector<9x128xf32>
    %c0_70 = arith.constant 0 : index
    %c0_71 = arith.constant 0 : index
    %67 = vector.load %arg21[%c0_70, %c0_71] : memref<48x128xf32, #tpu.memory_space<vmem>>, vector<9x128xf32>
    tpu.vector_store %arg21[%c0_70, %c0_71], %66 {strides = array<i32>} : memref<48x128xf32, #tpu.memory_space<vmem>>, vector<9x128xf32>,
    %c80 = arith.constant 80 : index
    %c0_72 = arith.constant 0 : index
    %68 = vector.load %arg16[%c80, %c0_72] : memref<240x128xbf16, #tpu.memory_space<vmem>>, vector<78x128xbf16>
    %c0_73 = arith.constant 0 : index
    %c0_74 = arith.constant 0 : index
    %69 = vector.load %arg3[%c0_73, %c0_74] : memref<128x64xbf16, #tpu.memory_space<vmem>>, vector<128x64xbf16>
    %cst_75 = arith.constant dense<0.000000e+00> : vector<78x64xf32>
    %70 = tpu.matmul %68, %69, %cst_75 {dimension_numbers = #tpu.dot_dimension_numbers<[1], [0], [0], [1], [0, 0, 1, 1], [], []>} : vector<78x128xbf16>, vector<128x64xbf16>, vector<78x64xf32> -> vector<78x64xf32>
    %c81 = arith.constant 81 : index
    %c0_76 = arith.constant 0 : index
    %71 = vector.load %arg16[%c81, %c0_76] : memref<240x128xbf16, #tpu.memory_space<vmem>>, vector<78x32xbf16>
    %c0_77 = arith.constant 0 : index
    %c0_78 = arith.constant 0 : index
    %72 = vector.load %arg4[%c0_77, %c0_78] : memref<32x64xbf16, #tpu.memory_space<vmem>>, vector<32x64xbf16>
    %cst_79 = arith.constant dense<0.000000e+00> : vector<78x64xf32>
    %73 = tpu.matmul %71, %72, %cst_79 {dimension_numbers = #tpu.dot_dimension_numbers<[1], [0], [0], [1], [0, 0, 1, 1], [], []>} : vector<78x32xbf16>, vector<32x64xbf16>, vector<78x64xf32> -> vector<78x64xf32>
    %74 = arith.addf %70, %73 : vector<78x64xf32>
    %c0_80 = arith.constant 0 : index
    %c0_81 = arith.constant 0 : index
    %75 = vector.load %arg11[%c0_80, %c0_81] : memref<1x64xf32, #tpu.memory_space<vmem>>, vector<1x64xf32>
    %76 = vector.broadcast %75 : vector<1x64xf32> to vector<78x64xf32>
    %77 = arith.addf %74, %76 : vector<78x64xf32>
    %cst_82 = arith.constant 0.000000e+00 : f32
    %78 = vector.broadcast %cst_82 : f32 to vector<78x64xf32>
    %79 = arith.maximumf %77, %78 : vector<78x64xf32>
    %c0_83 = arith.constant 0 : index
    %c0_84 = arith.constant 0 : index
    %80 = vector.load %arg17[%c0_83, %c0_84] : memref<80x64xf32, #tpu.memory_space<vmem>>, vector<78x64xf32>
    tpu.vector_store %arg17[%c0_83, %c0_84], %79 {strides = array<i32>} : memref<80x64xf32, #tpu.memory_space<vmem>>, vector<78x64xf32>,
    %c0_85 = arith.constant 0 : index
    %c0_86 = arith.constant 0 : index
    %81 = tpu.strided_load %arg17[%c0_85, %c0_86] {strides = array<i32: 4, 1>} : memref<80x64xf32, #tpu.memory_space<vmem>>, vector<20x64xf32>
    %82 = arith.truncf %81 : vector<20x64xf32> to vector<20x64xbf16>
    %c0_87 = arith.constant 0 : index
    %c0_88 = arith.constant 0 : index
    %83 = vector.load %arg18[%c0_87, %c0_88] : memref<24x256xbf16, #tpu.memory_space<vmem>>, vector<20x64xbf16>
    tpu.vector_store %arg18[%c0_87, %c0_88], %82 {strides = array<i32>} : memref<24x256xbf16, #tpu.memory_space<vmem>>, vector<20x64xbf16>,
    %c1_89 = arith.constant 1 : index
    %c0_90 = arith.constant 0 : index
    %84 = tpu.strided_load %arg17[%c1_89, %c0_90] {strides = array<i32: 4, 1>} : memref<80x64xf32, #tpu.memory_space<vmem>>, vector<20x64xf32>
    %85 = arith.truncf %84 : vector<20x64xf32> to vector<20x64xbf16>
    %c0_91 = arith.constant 0 : index
    %c64_92 = arith.constant 64 : index
    %86 = vector.load %arg18[%c0_91, %c64_92] : memref<24x256xbf16, #tpu.memory_space<vmem>>, vector<20x64xbf16>
    tpu.vector_store %arg18[%c0_91, %c64_92], %85 {strides = array<i32>} : memref<24x256xbf16, #tpu.memory_space<vmem>>, vector<20x64xbf16>,
    %c2_93 = arith.constant 2 : index
    %c0_94 = arith.constant 0 : index
    %87 = tpu.strided_load %arg17[%c2_93, %c0_94] {strides = array<i32: 4, 1>} : memref<80x64xf32, #tpu.memory_space<vmem>>, vector<20x64xf32>
    %88 = arith.truncf %87 : vector<20x64xf32> to vector<20x64xbf16>
    %c0_95 = arith.constant 0 : index
    %c128_96 = arith.constant 128 : index
    %89 = vector.load %arg18[%c0_95, %c128_96] : memref<24x256xbf16, #tpu.memory_space<vmem>>, vector<20x64xbf16>
    tpu.vector_store %arg18[%c0_95, %c128_96], %88 {strides = array<i32>} : memref<24x256xbf16, #tpu.memory_space<vmem>>, vector<20x64xbf16>,
    %c3_97 = arith.constant 3 : index
    %c0_98 = arith.constant 0 : index
    %90 = tpu.strided_load %arg17[%c3_97, %c0_98] {strides = array<i32: 4, 1>} : memref<80x64xf32, #tpu.memory_space<vmem>>, vector<20x64xf32>
    %91 = arith.truncf %90 : vector<20x64xf32> to vector<20x64xbf16>
    %c0_99 = arith.constant 0 : index
    %c192_100 = arith.constant 192 : index
    %92 = vector.load %arg18[%c0_99, %c192_100] : memref<24x256xbf16, #tpu.memory_space<vmem>>, vector<20x64xbf16>
    tpu.vector_store %arg18[%c0_99, %c192_100], %91 {strides = array<i32>} : memref<24x256xbf16, #tpu.memory_space<vmem>>, vector<20x64xbf16>,
    %c0_101 = arith.constant 0 : index
    %c0_102 = arith.constant 0 : index
    %93 = vector.load %arg18[%c0_101, %c0_102] : memref<24x256xbf16, #tpu.memory_space<vmem>>, vector<19x256xbf16>
    %c0_103 = arith.constant 0 : index
    %c0_104 = arith.constant 0 : index
    %94 = vector.load %arg5[%c0_103, %c0_104] : memref<256x128xbf16, #tpu.memory_space<vmem>>, vector<256x128xbf16>
    %cst_105 = arith.constant dense<0.000000e+00> : vector<19x128xf32>
    %95 = tpu.matmul %93, %94, %cst_105 {dimension_numbers = #tpu.dot_dimension_numbers<[1], [0], [0], [1], [0, 0, 1, 1], [], []>} : vector<19x256xbf16>, vector<256x128xbf16>, vector<19x128xf32> -> vector<19x128xf32>
    %c1_106 = arith.constant 1 : index
    %c0_107 = arith.constant 0 : index
    %96 = vector.load %arg18[%c1_106, %c0_107] : memref<24x256xbf16, #tpu.memory_space<vmem>>, vector<19x128xbf16>
    %c0_108 = arith.constant 0 : index
    %c0_109 = arith.constant 0 : index
    %97 = vector.load %arg6[%c0_108, %c0_109] : memref<128x128xbf16, #tpu.memory_space<vmem>>, vector<128x128xbf16>
    %cst_110 = arith.constant dense<0.000000e+00> : vector<19x128xf32>
    %98 = tpu.matmul %96, %97, %cst_110 {dimension_numbers = #tpu.dot_dimension_numbers<[1], [0], [0], [1], [0, 0, 1, 1], [], []>} : vector<19x128xbf16>, vector<128x128xbf16>, vector<19x128xf32> -> vector<19x128xf32>
    %99 = arith.addf %95, %98 : vector<19x128xf32>
    %c0_111 = arith.constant 0 : index
    %c0_112 = arith.constant 0 : index
    %100 = vector.load %arg12[%c0_111, %c0_112] : memref<1x128xf32, #tpu.memory_space<vmem>>, vector<1x128xf32>
    %101 = vector.broadcast %100 : vector<1x128xf32> to vector<19x128xf32>
    %102 = arith.addf %99, %101 : vector<19x128xf32>
    %cst_113 = arith.constant 0.000000e+00 : f32
    %103 = vector.broadcast %cst_113 : f32 to vector<19x128xf32>
    %104 = arith.maximumf %102, %103 : vector<19x128xf32>
    %c0_114 = arith.constant 0 : index
    %c0_115 = arith.constant 0 : index
    %105 = vector.load %arg19[%c0_114, %c0_115] : memref<24x128xf32, #tpu.memory_space<vmem>>, vector<19x128xf32>
    tpu.vector_store %arg19[%c0_114, %c0_115], %104 {strides = array<i32>} : memref<24x128xf32, #tpu.memory_space<vmem>>, vector<19x128xf32>,
    %c0_116 = arith.constant 0 : index
    %c0_117 = arith.constant 0 : index
    %106 = tpu.strided_load %arg19[%c0_116, %c0_117] {strides = array<i32: 2, 1>} : memref<24x128xf32, #tpu.memory_space<vmem>>, vector<10x128xf32>
    %107 = arith.truncf %106 : vector<10x128xf32> to vector<10x128xbf16>
    %c0_118 = arith.constant 0 : index
    %c0_119 = arith.constant 0 : index
    %108 = vector.load %arg20[%c0_118, %c0_119] : memref<16x256xbf16, #tpu.memory_space<vmem>>, vector<10x128xbf16>
    tpu.vector_store %arg20[%c0_118, %c0_119], %107 {strides = array<i32>} : memref<16x256xbf16, #tpu.memory_space<vmem>>, vector<10x128xbf16>,
    %c1_120 = arith.constant 1 : index
    %c0_121 = arith.constant 0 : index
    %109 = tpu.strided_load %arg19[%c1_120, %c0_121] {strides = array<i32: 2, 1>} : memref<24x128xf32, #tpu.memory_space<vmem>>, vector<10x128xf32>
    %110 = arith.truncf %109 : vector<10x128xf32> to vector<10x128xbf16>
    %c0_122 = arith.constant 0 : index
    %c128_123 = arith.constant 128 : index
    %111 = vector.load %arg20[%c0_122, %c128_123] : memref<16x256xbf16, #tpu.memory_space<vmem>>, vector<10x128xbf16>
    tpu.vector_store %arg20[%c0_122, %c128_123], %110 {strides = array<i32>} : memref<16x256xbf16, #tpu.memory_space<vmem>>, vector<10x128xbf16>,
    %c0_124 = arith.constant 0 : index
    %c0_125 = arith.constant 0 : index
    %112 = vector.load %arg20[%c0_124, %c0_125] : memref<16x256xbf16, #tpu.memory_space<vmem>>, vector<9x256xbf16>
    %c0_126 = arith.constant 0 : index
    %c0_127 = arith.constant 0 : index
    %113 = vector.load %arg7[%c0_126, %c0_127] : memref<256x128xbf16, #tpu.memory_space<vmem>>, vector<256x128xbf16>
    %cst_128 = arith.constant dense<0.000000e+00> : vector<9x128xf32>
    %114 = tpu.matmul %112, %113, %cst_128 {dimension_numbers = #tpu.dot_dimension_numbers<[1], [0], [0], [1], [0, 0, 1, 1], [], []>} : vector<9x256xbf16>, vector<256x128xbf16>, vector<9x128xf32> -> vector<9x128xf32>
    %c1_129 = arith.constant 1 : index
    %c0_130 = arith.constant 0 : index
    %115 = vector.load %arg20[%c1_129, %c0_130] : memref<16x256xbf16, #tpu.memory_space<vmem>>, vector<9x128xbf16>
    %c0_131 = arith.constant 0 : index
    %c0_132 = arith.constant 0 : index
    %116 = vector.load %arg8[%c0_131, %c0_132] : memref<128x128xbf16, #tpu.memory_space<vmem>>, vector<128x128xbf16>
    %cst_133 = arith.constant dense<0.000000e+00> : vector<9x128xf32>
    %117 = tpu.matmul %115, %116, %cst_133 {dimension_numbers = #tpu.dot_dimension_numbers<[1], [0], [0], [1], [0, 0, 1, 1], [], []>} : vector<9x128xbf16>, vector<128x128xbf16>, vector<9x128xf32> -> vector<9x128xf32>
    %118 = arith.addf %114, %117 : vector<9x128xf32>
    %c0_134 = arith.constant 0 : index
    %c0_135 = arith.constant 0 : index
    %119 = vector.load %arg13[%c0_134, %c0_135] : memref<1x128xf32, #tpu.memory_space<vmem>>, vector<1x128xf32>
    %120 = vector.broadcast %119 : vector<1x128xf32> to vector<9x128xf32>
    %121 = arith.addf %118, %120 : vector<9x128xf32>
    %cst_136 = arith.constant 0.000000e+00 : f32
    %122 = vector.broadcast %cst_136 : f32 to vector<9x128xf32>
    %123 = arith.maximumf %121, %122 : vector<9x128xf32>
    %c16 = arith.constant 16 : index
    %c0_137 = arith.constant 0 : index
    %124 = vector.load %arg21[%c16, %c0_137] : memref<48x128xf32, #tpu.memory_space<vmem>>, vector<9x128xf32>
    tpu.vector_store %arg21[%c16, %c0_137], %123 {strides = array<i32>} : memref<48x128xf32, #tpu.memory_space<vmem>>, vector<9x128xf32>,
    %c160 = arith.constant 160 : index
    %c0_138 = arith.constant 0 : index
    %125 = vector.load %arg16[%c160, %c0_138] : memref<240x128xbf16, #tpu.memory_space<vmem>>, vector<78x128xbf16>
    %c0_139 = arith.constant 0 : index
    %c0_140 = arith.constant 0 : index
    %126 = vector.load %arg3[%c0_139, %c0_140] : memref<128x64xbf16, #tpu.memory_space<vmem>>, vector<128x64xbf16>
    %cst_141 = arith.constant dense<0.000000e+00> : vector<78x64xf32>
    %127 = tpu.matmul %125, %126, %cst_141 {dimension_numbers = #tpu.dot_dimension_numbers<[1], [0], [0], [1], [0, 0, 1, 1], [], []>} : vector<78x128xbf16>, vector<128x64xbf16>, vector<78x64xf32> -> vector<78x64xf32>
    %c161 = arith.constant 161 : index
    %c0_142 = arith.constant 0 : index
    %128 = vector.load %arg16[%c161, %c0_142] : memref<240x128xbf16, #tpu.memory_space<vmem>>, vector<78x32xbf16>
    %c0_143 = arith.constant 0 : index
    %c0_144 = arith.constant 0 : index
    %129 = vector.load %arg4[%c0_143, %c0_144] : memref<32x64xbf16, #tpu.memory_space<vmem>>, vector<32x64xbf16>
    %cst_145 = arith.constant dense<0.000000e+00> : vector<78x64xf32>
    %130 = tpu.matmul %128, %129, %cst_145 {dimension_numbers = #tpu.dot_dimension_numbers<[1], [0], [0], [1], [0, 0, 1, 1], [], []>} : vector<78x32xbf16>, vector<32x64xbf16>, vector<78x64xf32> -> vector<78x64xf32>
    %131 = arith.addf %127, %130 : vector<78x64xf32>
    %c0_146 = arith.constant 0 : index
    %c0_147 = arith.constant 0 : index
    %132 = vector.load %arg11[%c0_146, %c0_147] : memref<1x64xf32, #tpu.memory_space<vmem>>, vector<1x64xf32>
    %133 = vector.broadcast %132 : vector<1x64xf32> to vector<78x64xf32>
    %134 = arith.addf %131, %133 : vector<78x64xf32>
    %cst_148 = arith.constant 0.000000e+00 : f32
    %135 = vector.broadcast %cst_148 : f32 to vector<78x64xf32>
    %136 = arith.maximumf %134, %135 : vector<78x64xf32>
    %c0_149 = arith.constant 0 : index
    %c0_150 = arith.constant 0 : index
    %137 = vector.load %arg17[%c0_149, %c0_150] : memref<80x64xf32, #tpu.memory_space<vmem>>, vector<78x64xf32>
    tpu.vector_store %arg17[%c0_149, %c0_150], %136 {strides = array<i32>} : memref<80x64xf32, #tpu.memory_space<vmem>>, vector<78x64xf32>,
    %c0_151 = arith.constant 0 : index
    %c0_152 = arith.constant 0 : index
    %138 = tpu.strided_load %arg17[%c0_151, %c0_152] {strides = array<i32: 4, 1>} : memref<80x64xf32, #tpu.memory_space<vmem>>, vector<20x64xf32>
    %139 = arith.truncf %138 : vector<20x64xf32> to vector<20x64xbf16>
    %c0_153 = arith.constant 0 : index
    %c0_154 = arith.constant 0 : index
    %140 = vector.load %arg18[%c0_153, %c0_154] : memref<24x256xbf16, #tpu.memory_space<vmem>>, vector<20x64xbf16>
    tpu.vector_store %arg18[%c0_153, %c0_154], %139 {strides = array<i32>} : memref<24x256xbf16, #tpu.memory_space<vmem>>, vector<20x64xbf16>,
    %c1_155 = arith.constant 1 : index
    %c0_156 = arith.constant 0 : index
    %141 = tpu.strided_load %arg17[%c1_155, %c0_156] {strides = array<i32: 4, 1>} : memref<80x64xf32, #tpu.memory_space<vmem>>, vector<20x64xf32>
    %142 = arith.truncf %141 : vector<20x64xf32> to vector<20x64xbf16>
    %c0_157 = arith.constant 0 : index
    %c64_158 = arith.constant 64 : index
    %143 = vector.load %arg18[%c0_157, %c64_158] : memref<24x256xbf16, #tpu.memory_space<vmem>>, vector<20x64xbf16>
    tpu.vector_store %arg18[%c0_157, %c64_158], %142 {strides = array<i32>} : memref<24x256xbf16, #tpu.memory_space<vmem>>, vector<20x64xbf16>,
    %c2_159 = arith.constant 2 : index
    %c0_160 = arith.constant 0 : index
    %144 = tpu.strided_load %arg17[%c2_159, %c0_160] {strides = array<i32: 4, 1>} : memref<80x64xf32, #tpu.memory_space<vmem>>, vector<20x64xf32>
    %145 = arith.truncf %144 : vector<20x64xf32> to vector<20x64xbf16>
    %c0_161 = arith.constant 0 : index
    %c128_162 = arith.constant 128 : index
    %146 = vector.load %arg18[%c0_161, %c128_162] : memref<24x256xbf16, #tpu.memory_space<vmem>>, vector<20x64xbf16>
    tpu.vector_store %arg18[%c0_161, %c128_162], %145 {strides = array<i32>} : memref<24x256xbf16, #tpu.memory_space<vmem>>, vector<20x64xbf16>,
    %c3_163 = arith.constant 3 : index
    %c0_164 = arith.constant 0 : index
    %147 = tpu.strided_load %arg17[%c3_163, %c0_164] {strides = array<i32: 4, 1>} : memref<80x64xf32, #tpu.memory_space<vmem>>, vector<20x64xf32>
    %148 = arith.truncf %147 : vector<20x64xf32> to vector<20x64xbf16>
    %c0_165 = arith.constant 0 : index
    %c192_166 = arith.constant 192 : index
    %149 = vector.load %arg18[%c0_165, %c192_166] : memref<24x256xbf16, #tpu.memory_space<vmem>>, vector<20x64xbf16>
    tpu.vector_store %arg18[%c0_165, %c192_166], %148 {strides = array<i32>} : memref<24x256xbf16, #tpu.memory_space<vmem>>, vector<20x64xbf16>,
    %c0_167 = arith.constant 0 : index
    %c0_168 = arith.constant 0 : index
    %150 = vector.load %arg18[%c0_167, %c0_168] : memref<24x256xbf16, #tpu.memory_space<vmem>>, vector<19x256xbf16>
    %c0_169 = arith.constant 0 : index
    %c0_170 = arith.constant 0 : index
    %151 = vector.load %arg5[%c0_169, %c0_170] : memref<256x128xbf16, #tpu.memory_space<vmem>>, vector<256x128xbf16>
    %cst_171 = arith.constant dense<0.000000e+00> : vector<19x128xf32>
    %152 = tpu.matmul %150, %151, %cst_171 {dimension_numbers = #tpu.dot_dimension_numbers<[1], [0], [0], [1], [0, 0, 1, 1], [], []>} : vector<19x256xbf16>, vector<256x128xbf16>, vector<19x128xf32> -> vector<19x128xf32>
    %c1_172 = arith.constant 1 : index
    %c0_173 = arith.constant 0 : index
    %153 = vector.load %arg18[%c1_172, %c0_173] : memref<24x256xbf16, #tpu.memory_space<vmem>>, vector<19x128xbf16>
    %c0_174 = arith.constant 0 : index
    %c0_175 = arith.constant 0 : index
    %154 = vector.load %arg6[%c0_174, %c0_175] : memref<128x128xbf16, #tpu.memory_space<vmem>>, vector<128x128xbf16>
    %cst_176 = arith.constant dense<0.000000e+00> : vector<19x128xf32>
    %155 = tpu.matmul %153, %154, %cst_176 {dimension_numbers = #tpu.dot_dimension_numbers<[1], [0], [0], [1], [0, 0, 1, 1], [], []>} : vector<19x128xbf16>, vector<128x128xbf16>, vector<19x128xf32> -> vector<19x128xf32>
    %156 = arith.addf %152, %155 : vector<19x128xf32>
    %c0_177 = arith.constant 0 : index
    %c0_178 = arith.constant 0 : index
    %157 = vector.load %arg12[%c0_177, %c0_178] : memref<1x128xf32, #tpu.memory_space<vmem>>, vector<1x128xf32>
    %158 = vector.broadcast %157 : vector<1x128xf32> to vector<19x128xf32>
    %159 = arith.addf %156, %158 : vector<19x128xf32>
    %cst_179 = arith.constant 0.000000e+00 : f32
    %160 = vector.broadcast %cst_179 : f32 to vector<19x128xf32>
    %161 = arith.maximumf %159, %160 : vector<19x128xf32>
    %c0_180 = arith.constant 0 : index
    %c0_181 = arith.constant 0 : index
    %162 = vector.load %arg19[%c0_180, %c0_181] : memref<24x128xf32, #tpu.memory_space<vmem>>, vector<19x128xf32>
    tpu.vector_store %arg19[%c0_180, %c0_181], %161 {strides = array<i32>} : memref<24x128xf32, #tpu.memory_space<vmem>>, vector<19x128xf32>,
    %c0_182 = arith.constant 0 : index
    %c0_183 = arith.constant 0 : index
    %163 = tpu.strided_load %arg19[%c0_182, %c0_183] {strides = array<i32: 2, 1>} : memref<24x128xf32, #tpu.memory_space<vmem>>, vector<10x128xf32>
    %164 = arith.truncf %163 : vector<10x128xf32> to vector<10x128xbf16>
    %c0_184 = arith.constant 0 : index
    %c0_185 = arith.constant 0 : index
    %165 = vector.load %arg20[%c0_184, %c0_185] : memref<16x256xbf16, #tpu.memory_space<vmem>>, vector<10x128xbf16>
    tpu.vector_store %arg20[%c0_184, %c0_185], %164 {strides = array<i32>} : memref<16x256xbf16, #tpu.memory_space<vmem>>, vector<10x128xbf16>,
    %c1_186 = arith.constant 1 : index
    %c0_187 = arith.constant 0 : index
    %166 = tpu.strided_load %arg19[%c1_186, %c0_187] {strides = array<i32: 2, 1>} : memref<24x128xf32, #tpu.memory_space<vmem>>, vector<10x128xf32>
    %167 = arith.truncf %166 : vector<10x128xf32> to vector<10x128xbf16>
    %c0_188 = arith.constant 0 : index
    %c128_189 = arith.constant 128 : index
    %168 = vector.load %arg20[%c0_188, %c128_189] : memref<16x256xbf16, #tpu.memory_space<vmem>>, vector<10x128xbf16>
    tpu.vector_store %arg20[%c0_188, %c128_189], %167 {strides = array<i32>} : memref<16x256xbf16, #tpu.memory_space<vmem>>, vector<10x128xbf16>,
    %c0_190 = arith.constant 0 : index
    %c0_191 = arith.constant 0 : index
    %169 = vector.load %arg20[%c0_190, %c0_191] : memref<16x256xbf16, #tpu.memory_space<vmem>>, vector<9x256xbf16>
    %c0_192 = arith.constant 0 : index
    %c0_193 = arith.constant 0 : index
    %170 = vector.load %arg7[%c0_192, %c0_193] : memref<256x128xbf16, #tpu.memory_space<vmem>>, vector<256x128xbf16>
    %cst_194 = arith.constant dense<0.000000e+00> : vector<9x128xf32>
    %171 = tpu.matmul %169, %170, %cst_194 {dimension_numbers = #tpu.dot_dimension_numbers<[1], [0], [0], [1], [0, 0, 1, 1], [], []>} : vector<9x256xbf16>, vector<256x128xbf16>, vector<9x128xf32> -> vector<9x128xf32>
    %c1_195 = arith.constant 1 : index
    %c0_196 = arith.constant 0 : index
    %172 = vector.load %arg20[%c1_195, %c0_196] : memref<16x256xbf16, #tpu.memory_space<vmem>>, vector<9x128xbf16>
    %c0_197 = arith.constant 0 : index
    %c0_198 = arith.constant 0 : index
    %173 = vector.load %arg8[%c0_197, %c0_198] : memref<128x128xbf16, #tpu.memory_space<vmem>>, vector<128x128xbf16>
    %cst_199 = arith.constant dense<0.000000e+00> : vector<9x128xf32>
    %174 = tpu.matmul %172, %173, %cst_199 {dimension_numbers = #tpu.dot_dimension_numbers<[1], [0], [0], [1], [0, 0, 1, 1], [], []>} : vector<9x128xbf16>, vector<128x128xbf16>, vector<9x128xf32> -> vector<9x128xf32>
    %175 = arith.addf %171, %174 : vector<9x128xf32>
    %c0_200 = arith.constant 0 : index
    %c0_201 = arith.constant 0 : index
    %176 = vector.load %arg13[%c0_200, %c0_201] : memref<1x128xf32, #tpu.memory_space<vmem>>, vector<1x128xf32>
    %177 = vector.broadcast %176 : vector<1x128xf32> to vector<9x128xf32>
    %178 = arith.addf %175, %177 : vector<9x128xf32>
    %cst_202 = arith.constant 0.000000e+00 : f32
    %179 = vector.broadcast %cst_202 : f32 to vector<9x128xf32>
    %180 = arith.maximumf %178, %179 : vector<9x128xf32>
    %c32 = arith.constant 32 : index
    %c0_203 = arith.constant 0 : index
    %181 = vector.load %arg21[%c32, %c0_203] : memref<48x128xf32, #tpu.memory_space<vmem>>, vector<9x128xf32>
    tpu.vector_store %arg21[%c32, %c0_203], %180 {strides = array<i32>} : memref<48x128xf32, #tpu.memory_space<vmem>>, vector<9x128xf32>,
    %c0_204 = arith.constant 0 : index
    %c0_205 = arith.constant 0 : index
    %182 = tpu.strided_load %arg21[%c0_204, %c0_205] {strides = array<i32: 16, 1>} : memref<48x128xf32, #tpu.memory_space<vmem>>, vector<3x128xf32>
    %c0_206 = arith.constant 0 : index
    %c0_207 = arith.constant 0 : index
    %c0_208 = arith.constant 0 : index
    %183 = vector.load %arg9[%c0_206, %c0_207, %c0_208] : memref<9x128x16xf32, #tpu.memory_space<vmem>>, vector<1x128x16xf32>
    %184 = vector.shape_cast %183 : vector<1x128x16xf32> to vector<128x16xf32>
    %cst_209 = arith.constant dense<0.000000e+00> : vector<3x16xf32>
    %185 = tpu.matmul %182, %184, %cst_209 {dimension_numbers = #tpu.dot_dimension_numbers<[1], [0], [0], [1], [0, 0, 1, 1], [], []>} : vector<3x128xf32>, vector<128x16xf32>, vector<3x16xf32> -> vector<3x16xf32>
    %c1_210 = arith.constant 1 : index
    %c0_211 = arith.constant 0 : index
    %186 = tpu.strided_load %arg21[%c1_210, %c0_211] {strides = array<i32: 16, 1>} : memref<48x128xf32, #tpu.memory_space<vmem>>, vector<3x128xf32>
    %c1_212 = arith.constant 1 : index
    %c0_213 = arith.constant 0 : index
    %c0_214 = arith.constant 0 : index
    %187 = vector.load %arg9[%c1_212, %c0_213, %c0_214] : memref<9x128x16xf32, #tpu.memory_space<vmem>>, vector<1x128x16xf32>
    %188 = vector.shape_cast %187 : vector<1x128x16xf32> to vector<128x16xf32>
    %cst_215 = arith.constant dense<0.000000e+00> : vector<3x16xf32>
    %189 = tpu.matmul %186, %188, %cst_215 {dimension_numbers = #tpu.dot_dimension_numbers<[1], [0], [0], [1], [0, 0, 1, 1], [], []>} : vector<3x128xf32>, vector<128x16xf32>, vector<3x16xf32> -> vector<3x16xf32>
    %190 = arith.addf %185, %189 : vector<3x16xf32>
    %c2_216 = arith.constant 2 : index
    %c0_217 = arith.constant 0 : index
    %191 = tpu.strided_load %arg21[%c2_216, %c0_217] {strides = array<i32: 16, 1>} : memref<48x128xf32, #tpu.memory_space<vmem>>, vector<3x128xf32>
    %c2_218 = arith.constant 2 : index
    %c0_219 = arith.constant 0 : index
    %c0_220 = arith.constant 0 : index
    %192 = vector.load %arg9[%c2_218, %c0_219, %c0_220] : memref<9x128x16xf32, #tpu.memory_space<vmem>>, vector<1x128x16xf32>
    %193 = vector.shape_cast %192 : vector<1x128x16xf32> to vector<128x16xf32>
    %cst_221 = arith.constant dense<0.000000e+00> : vector<3x16xf32>
    %194 = tpu.matmul %191, %193, %cst_221 {dimension_numbers = #tpu.dot_dimension_numbers<[1], [0], [0], [1], [0, 0, 1, 1], [], []>} : vector<3x128xf32>, vector<128x16xf32>, vector<3x16xf32> -> vector<3x16xf32>
    %195 = arith.addf %190, %194 : vector<3x16xf32>
    %c3_222 = arith.constant 3 : index
    %c0_223 = arith.constant 0 : index
    %196 = tpu.strided_load %arg21[%c3_222, %c0_223] {strides = array<i32: 16, 1>} : memref<48x128xf32, #tpu.memory_space<vmem>>, vector<3x128xf32>
    %c3_224 = arith.constant 3 : index
    %c0_225 = arith.constant 0 : index
    %c0_226 = arith.constant 0 : index
    %197 = vector.load %arg9[%c3_224, %c0_225, %c0_226] : memref<9x128x16xf32, #tpu.memory_space<vmem>>, vector<1x128x16xf32>
    %198 = vector.shape_cast %197 : vector<1x128x16xf32> to vector<128x16xf32>
    %cst_227 = arith.constant dense<0.000000e+00> : vector<3x16xf32>
    %199 = tpu.matmul %196, %198, %cst_227 {dimension_numbers = #tpu.dot_dimension_numbers<[1], [0], [0], [1], [0, 0, 1, 1], [], []>} : vector<3x128xf32>, vector<128x16xf32>, vector<3x16xf32> -> vector<3x16xf32>
    %200 = arith.addf %195, %199 : vector<3x16xf32>
    %c4 = arith.constant 4 : index
    %c0_228 = arith.constant 0 : index
    %201 = tpu.strided_load %arg21[%c4, %c0_228] {strides = array<i32: 16, 1>} : memref<48x128xf32, #tpu.memory_space<vmem>>, vector<3x128xf32>
    %c4_229 = arith.constant 4 : index
    %c0_230 = arith.constant 0 : index
    %c0_231 = arith.constant 0 : index
    %202 = vector.load %arg9[%c4_229, %c0_230, %c0_231] : memref<9x128x16xf32, #tpu.memory_space<vmem>>, vector<1x128x16xf32>
    %203 = vector.shape_cast %202 : vector<1x128x16xf32> to vector<128x16xf32>
    %cst_232 = arith.constant dense<0.000000e+00> : vector<3x16xf32>
    %204 = tpu.matmul %201, %203, %cst_232 {dimension_numbers = #tpu.dot_dimension_numbers<[1], [0], [0], [1], [0, 0, 1, 1], [], []>} : vector<3x128xf32>, vector<128x16xf32>, vector<3x16xf32> -> vector<3x16xf32>
    %205 = arith.addf %200, %204 : vector<3x16xf32>
    %c5 = arith.constant 5 : index
    %c0_233 = arith.constant 0 : index
    %206 = tpu.strided_load %arg21[%c5, %c0_233] {strides = array<i32: 16, 1>} : memref<48x128xf32, #tpu.memory_space<vmem>>, vector<3x128xf32>
    %c5_234 = arith.constant 5 : index
    %c0_235 = arith.constant 0 : index
    %c0_236 = arith.constant 0 : index
    %207 = vector.load %arg9[%c5_234, %c0_235, %c0_236] : memref<9x128x16xf32, #tpu.memory_space<vmem>>, vector<1x128x16xf32>
    %208 = vector.shape_cast %207 : vector<1x128x16xf32> to vector<128x16xf32>
    %cst_237 = arith.constant dense<0.000000e+00> : vector<3x16xf32>
    %209 = tpu.matmul %206, %208, %cst_237 {dimension_numbers = #tpu.dot_dimension_numbers<[1], [0], [0], [1], [0, 0, 1, 1], [], []>} : vector<3x128xf32>, vector<128x16xf32>, vector<3x16xf32> -> vector<3x16xf32>
    %210 = arith.addf %205, %209 : vector<3x16xf32>
    %c6 = arith.constant 6 : index
    %c0_238 = arith.constant 0 : index
    %211 = tpu.strided_load %arg21[%c6, %c0_238] {strides = array<i32: 16, 1>} : memref<48x128xf32, #tpu.memory_space<vmem>>, vector<3x128xf32>
    %c6_239 = arith.constant 6 : index
    %c0_240 = arith.constant 0 : index
    %c0_241 = arith.constant 0 : index
    %212 = vector.load %arg9[%c6_239, %c0_240, %c0_241] : memref<9x128x16xf32, #tpu.memory_space<vmem>>, vector<1x128x16xf32>
    %213 = vector.shape_cast %212 : vector<1x128x16xf32> to vector<128x16xf32>
    %cst_242 = arith.constant dense<0.000000e+00> : vector<3x16xf32>
    %214 = tpu.matmul %211, %213, %cst_242 {dimension_numbers = #tpu.dot_dimension_numbers<[1], [0], [0], [1], [0, 0, 1, 1], [], []>} : vector<3x128xf32>, vector<128x16xf32>, vector<3x16xf32> -> vector<3x16xf32>
    %215 = arith.addf %210, %214 : vector<3x16xf32>
    %c7 = arith.constant 7 : index
    %c0_243 = arith.constant 0 : index
    %216 = tpu.strided_load %arg21[%c7, %c0_243] {strides = array<i32: 16, 1>} : memref<48x128xf32, #tpu.memory_space<vmem>>, vector<3x128xf32>
    %c7_244 = arith.constant 7 : index
    %c0_245 = arith.constant 0 : index
    %c0_246 = arith.constant 0 : index
    %217 = vector.load %arg9[%c7_244, %c0_245, %c0_246] : memref<9x128x16xf32, #tpu.memory_space<vmem>>, vector<1x128x16xf32>
    %218 = vector.shape_cast %217 : vector<1x128x16xf32> to vector<128x16xf32>
    %cst_247 = arith.constant dense<0.000000e+00> : vector<3x16xf32>
    %219 = tpu.matmul %216, %218, %cst_247 {dimension_numbers = #tpu.dot_dimension_numbers<[1], [0], [0], [1], [0, 0, 1, 1], [], []>} : vector<3x128xf32>, vector<128x16xf32>, vector<3x16xf32> -> vector<3x16xf32>
    %220 = arith.addf %215, %219 : vector<3x16xf32>
    %c8 = arith.constant 8 : index
    %c0_248 = arith.constant 0 : index
    %221 = tpu.strided_load %arg21[%c8, %c0_248] {strides = array<i32: 16, 1>} : memref<48x128xf32, #tpu.memory_space<vmem>>, vector<3x128xf32>
    %c8_249 = arith.constant 8 : index
    %c0_250 = arith.constant 0 : index
    %c0_251 = arith.constant 0 : index
    %222 = vector.load %arg9[%c8_249, %c0_250, %c0_251] : memref<9x128x16xf32, #tpu.memory_space<vmem>>, vector<1x128x16xf32>
    %223 = vector.shape_cast %222 : vector<1x128x16xf32> to vector<128x16xf32>
    %cst_252 = arith.constant dense<0.000000e+00> : vector<3x16xf32>
    %224 = tpu.matmul %221, %223, %cst_252 {dimension_numbers = #tpu.dot_dimension_numbers<[1], [0], [0], [1], [0, 0, 1, 1], [], []>} : vector<3x128xf32>, vector<128x16xf32>, vector<3x16xf32> -> vector<3x16xf32>
    %225 = arith.addf %220, %224 : vector<3x16xf32>
    %c0_253 = arith.constant 0 : index
    %c0_254 = arith.constant 0 : index
    %226 = vector.load %arg14[%c0_253, %c0_254] : memref<1x16xf32, #tpu.memory_space<vmem>>, vector<1x16xf32>
    %227 = vector.broadcast %226 : vector<1x16xf32> to vector<3x16xf32>
    %228 = arith.addf %225, %227 : vector<3x16xf32>
    %229 = math.tanh %228 : vector<3x16xf32>
    %c0_255 = arith.constant 0 : index
    %c0_256 = arith.constant 0 : index
    %c0_257 = arith.constant 0 : index
    %230 = vector.load %arg15[%c0_255, %c0_256, %c0_257] : memref<1x3x16xf32, #tpu.memory_space<vmem>>, vector<1x3x16xf32>
    %231 = vector.shape_cast %230 : vector<1x3x16xf32> to vector<3x16xf32>
    %232 = vector.shape_cast %229 : vector<3x16xf32> to vector<1x3x16xf32>
    tpu.vector_store %arg15[%c0_255, %c0_256, %c0_257], %232 {strides = array<i32>} : memref<1x3x16xf32, #tpu.memory_space<vmem>>, vector<1x3x16xf32>,
    return
  }
  func.func @transform_0(%arg0: i32) -> (i32, i32, i32) {
    %c0_i32 = arith.constant 0 : i32
    %c0_i32_0 = arith.constant 0 : i32
    %c0_i32_1 = arith.constant 0 : i32
    return %arg0, %c0_i32, %c0_i32_0 : i32, i32, i32
  }
  func.func @transform_1(%arg0: i32) -> (i32, i32) {
    %c0_i32 = arith.constant 0 : i32
    %c0_i32_0 = arith.constant 0 : i32
    %c0_i32_1 = arith.constant 0 : i32
    return %c0_i32, %c0_i32_0 : i32, i32
  }
  func.func @transform_2(%arg0: i32) -> (i32, i32) {
    %c0_i32 = arith.constant 0 : i32
    %c0_i32_0 = arith.constant 0 : i32
    %c0_i32_1 = arith.constant 0 : i32
    return %c0_i32, %c0_i32_0 : i32, i32
  }
  func.func @transform_3(%arg0: i32) -> (i32, i32) {
    %c0_i32 = arith.constant 0 : i32
    %c0_i32_0 = arith.constant 0 : i32
    %c0_i32_1 = arith.constant 0 : i32
    return %c0_i32, %c0_i32_0 : i32, i32
  }
  func.func @transform_4(%arg0: i32) -> (i32, i32) {
    %c0_i32 = arith.constant 0 : i32
    %c0_i32_0 = arith.constant 0 : i32
    %c0_i32_1 = arith.constant 0 : i32
    return %c0_i32, %c0_i32_0 : i32, i32
  }
  func.func @transform_5(%arg0: i32) -> (i32, i32) {
    %c0_i32 = arith.constant 0 : i32
    %c0_i32_0 = arith.constant 0 : i32
    %c0_i32_1 = arith.constant 0 : i32
    return %c0_i32, %c0_i32_0 : i32, i32
  }
  func.func @transform_6(%arg0: i32) -> (i32, i32) {
    %c0_i32 = arith.constant 0 : i32
    %c0_i32_0 = arith.constant 0 : i32
    %c0_i32_1 = arith.constant 0 : i32
    return %c0_i32, %c0_i32_0 : i32, i32
  }
  func.func @transform_7(%arg0: i32) -> (i32, i32) {
    %c0_i32 = arith.constant 0 : i32
    %c0_i32_0 = arith.constant 0 : i32
    %c0_i32_1 = arith.constant 0 : i32
    return %c0_i32, %c0_i32_0 : i32, i32
  }
  func.func @transform_8(%arg0: i32) -> (i32, i32, i32) {
    %c0_i32 = arith.constant 0 : i32
    %c0_i32_0 = arith.constant 0 : i32
    %c0_i32_1 = arith.constant 0 : i32
    %c0_i32_2 = arith.constant 0 : i32
    return %c0_i32, %c0_i32_0, %c0_i32_1 : i32, i32, i32
  }
  func.func @transform_9(%arg0: i32) -> (i32, i32) {
    %c0_i32 = arith.constant 0 : i32
    %c0_i32_0 = arith.constant 0 : i32
    %c0_i32_1 = arith.constant 0 : i32
    return %c0_i32, %c0_i32_0 : i32, i32
  }
  func.func @transform_10(%arg0: i32) -> (i32, i32) {
    %c0_i32 = arith.constant 0 : i32
    %c0_i32_0 = arith.constant 0 : i32
    %c0_i32_1 = arith.constant 0 : i32
    return %c0_i32, %c0_i32_0 : i32, i32
  }
  func.func @transform_11(%arg0: i32) -> (i32, i32) {
    %c0_i32 = arith.constant 0 : i32
    %c0_i32_0 = arith.constant 0 : i32
    %c0_i32_1 = arith.constant 0 : i32
    return %c0_i32, %c0_i32_0 : i32, i32
  }
  func.func @transform_12(%arg0: i32) -> (i32, i32) {
    %c0_i32 = arith.constant 0 : i32
    %c0_i32_0 = arith.constant 0 : i32
    %c0_i32_1 = arith.constant 0 : i32
    return %c0_i32, %c0_i32_0 : i32, i32
  }
  func.func @transform_13(%arg0: i32) -> (i32, i32) {
    %c0_i32 = arith.constant 0 : i32
    %c0_i32_0 = arith.constant 0 : i32
    %c0_i32_1 = arith.constant 0 : i32
    return %c0_i32, %c0_i32_0 : i32, i32
  }
  func.func @transform_14(%arg0: i32) -> (i32, i32, i32) {
    %c0_i32 = arith.constant 0 : i32
    %c0_i32_0 = arith.constant 0 : i32
    %c0_i32_1 = arith.constant 0 : i32
    return %arg0, %c0_i32, %c0_i32_0 : i32, i32, i32
  }
}

</mosaic_0001>

<llo_original>
// kernel: time_encoder_forward.1
$region0: #{time_encoder_forward.1}
  #allocation0 [shape = 'u32[]', space=smem, size = 0x4, offset = 0x4, fixed_abs, tag = 'smem constant byte address 0x4 - core index']
  #allocation1 [shape = 'u32[144,128]{1,0:T(1,128)}', space=vmem, size = 0x12000, scoped, tag = 'internal scratch']
  #allocation2 [shape = 'bf16[240,128]{1,0:T(16,128)(2,1)}', space=vmem, size = 0xf000, scoped, tag = 'scratch operand']
  #allocation3 [shape = 'f32[80,64]{1,0:T(8,128)}', space=vmem, size = 0xa000, scoped, tag = 'scratch operand']
  #allocation4 [shape = 'bf16[24,256]{1,0:T(8,128)(2,1)}', space=vmem, size = 0x3000, scoped, tag = 'scratch operand']
  #allocation5 [shape = 'f32[24,128]{1,0:T(8,128)}', space=vmem, size = 0x3000, scoped, tag = 'scratch operand']
  #allocation6 [shape = 'bf16[16,256]{1,0:T(16,128)(2,1)}', space=vmem, size = 0x2000, scoped, tag = 'scratch operand']
  #allocation7 [shape = 'f32[48,128]{1,0:T(8,128)}', space=vmem, size = 0x6000, scoped, tag = 'scratch operand']
  %s0 = inlined_call_operand.vmem [shape: bf16[2,240,512], index: 0, kind: input, shape index: {}]
  %s1 = inlined_call_operand.vmem [shape: bf16[512,128], index: 1, kind: input, shape index: {}]
  %s2 = inlined_call_operand.vmem [shape: bf16[128,64], index: 2, kind: input, shape index: {}]
  %s3 = inlined_call_operand.vmem [shape: bf16[32,64], index: 3, kind: input, shape index: {}]
  %s4 = inlined_call_operand.vmem [shape: bf16[256,128], index: 4, kind: input, shape index: {}]
  %s5 = inlined_call_operand.vmem [shape: bf16[128,128], index: 5, kind: input, shape index: {}]
  %s6 = inlined_call_operand.vmem [shape: bf16[256,128], index: 6, kind: input, shape index: {}]
  %s7 = inlined_call_operand.vmem [shape: bf16[128,128], index: 7, kind: input, shape index: {}]
  %s8 = inlined_call_operand.vmem [shape: f32[9,128,16], index: 8, kind: input, shape index: {}]
  %s9 = inlined_call_operand.vmem [shape: f32[1,128], index: 9, kind: input, shape index: {}]
  %s10 = inlined_call_operand.vmem [shape: f32[1,64], index: 10, kind: input, shape index: {}]
  %s11 = inlined_call_operand.vmem [shape: f32[1,128], index: 11, kind: input, shape index: {}]
  %s12 = inlined_call_operand.vmem [shape: f32[1,128], index: 12, kind: input, shape index: {}]
  %s13 = inlined_call_operand.vmem [shape: f32[1,16], index: 13, kind: input, shape index: {}]
  %s14 = inlined_call_operand.vmem [shape: f32[2,3,16], index: 14, kind: output, shape index: {}]
  %s15 = sld [smem:[#allocation0]]
  $region89: #{time_encoder_forward.1} parent=0
    _
  %s17 = ssub.s32 1, %s15
  %s18 = scalar_select 0, %s17, %s15
  loop: start=0, step=1, limit=4
  $region2: #{time_encoder_forward.1} parent=0 // loop_pre_header
    _
  $region3: #{time_encoder_forward.1} parent=0 // loop_header
    %s20 = sphi 0, %s24
    %p21 = scmp.ge.s32.totalorder %s20, 4
    %s30 = sphi 0, %s32
    %s33 = sphi 0, %s30
    %s34 = sphi 0, %s33
    %s50 = sphi 0, %s34
    %s54 = sphi 0, %s54
    %s56 = sphi 0, %s54
    %s57 = sphi 0, %s56
    %s71 = sphi 0, %s57
    %s75 = sphi 0, %s75
    %s77 = sphi 0, %s75
    %s78 = sphi 0, %s77
    %s92 = sphi 0, %s78
    %s96 = sphi 0, %s96
    %s98 = sphi 0, %s96
    %s99 = sphi 0, %s98
    %s113 = sphi 0, %s99
    %s117 = sphi 0, %s117
    %s119 = sphi 0, %s117
    %s120 = sphi 0, %s119
    %s134 = sphi 0, %s120
    %s138 = sphi 0, %s138
    %s140 = sphi 0, %s138
    %s141 = sphi 0, %s140
    %s155 = sphi 0, %s141
    %s159 = sphi 0, %s159
    %s161 = sphi 0, %s159
    %s162 = sphi 0, %s161
    %s176 = sphi 0, %s162
    %s180 = sphi 0, %s180
    %s182 = sphi 0, %s180
    %s183 = sphi 0, %s182
    %s197 = sphi 0, %s183
    %s201 = sphi 0, %s201
    %s203 = sphi 0, %s201
    %s204 = sphi 0, %s203
    %s218 = sphi 0, %s204
    %s222 = sphi 0, %s222
    %s224 = sphi 0, %s222
    %s225 = sphi 0, %s224
    %s239 = sphi 0, %s225
    %s243 = sphi 0, %s243
    %s245 = sphi 0, %s243
    %s246 = sphi 0, %s245
    %s260 = sphi 0, %s246
    %s264 = sphi 0, %s264
    %s266 = sphi 0, %s264
    %s267 = sphi 0, %s266
    %s281 = sphi 0, %s267
    %s285 = sphi 0, %s285
    %s287 = sphi 0, %s285
    %s288 = sphi 0, %s287
    %s302 = sphi 0, %s288
    %s306 = sphi 0, %s306
    %s308 = sphi 0, %s306
    %s309 = sphi 0, %s308
    %s323 = sphi 0, %s309
    %s329 = sphi 0, %s331
    %s332 = sphi 0, %s329
    %s333 = sphi 0, %s332
    %s349 = sphi 0, %s333
  $region4: #{time_encoder_forward.1} parent=0 // loop_header_branch
    %23 = sbr.rel (%p21) target = $region8
  $region5: #{time_encoder_forward.1} parent=0 // loop_body
    %s25 = ssub.s32 %s20, 1
    %s26 = ssub.s32 %s20, 2
    %s27 = sadd.s32 %s20, 1
    %s28 = ssub.s32 %s20, %s27
    %p29 = scmp.eq.s32.totalorder %s28, 0
    %s31 = sadd.s32 %s30, 1
    %s32 = scalar_select %p29, %s30, %s31
    %p35 = pneg %p29
    %p36 = scmp.eq.s32.totalorder %s20, 1
    %p37 = por %p35, %p36
    %p38 = scmp.ne.s32.totalorder %s30, %s33
    %p39 = scmp.eq.s32.totalorder %s20, 0
    %p40 = por %p38, %p39
    %p41 = scmp.ne.s32.totalorder %s30, %s33
    %p42 = scmp.eq.s32.totalorder %s25, 1
    %p43 = por %p41, %p42
    %p44 = scmp.ne.s32.totalorder %s33, %s34
    %p45 = scmp.eq.s32.totalorder %s25, 0
    %p46 = por %p44, %p45
    %p47 = scmp.ne.s32.totalorder %s33, %s34
    %p48 = scmp.eq.s32.totalorder %s26, 1
    %p49 = por %p47, %p48
    %p51 = scmp.ne.s32.totalorder %s34, %s50
    %p52 = scmp.eq.s32.totalorder %s26, 0
    %p53 = por %p51, %p52
    %s55 = sadd.s32 %s54, 1
    %p58 = scmp.eq.s32.totalorder %s20, 1
    %p59 = scmp.ne.s32.totalorder %s54, %s56
    %p60 = scmp.eq.s32.totalorder %s20, 0
    %p61 = por %p59, %p60
    %p62 = scmp.ne.s32.totalorder %s54, %s56
    %p63 = scmp.eq.s32.totalorder %s25, 1
    %p64 = por %p62, %p63
    %p65 = scmp.ne.s32.totalorder %s56, %s57
    %p66 = scmp.eq.s32.totalorder %s25, 0
    %p67 = por %p65, %p66
    %p68 = scmp.ne.s32.totalorder %s56, %s57
    %p69 = scmp.eq.s32.totalorder %s26, 1
    %p70 = por %p68, %p69
    %p72 = scmp.ne.s32.totalorder %s57, %s71
    %p73 = scmp.eq.s32.totalorder %s26, 0
    %p74 = por %p72, %p73
    %s76 = sadd.s32 %s75, 1
    %p79 = scmp.eq.s32.totalorder %s20, 1
    %p80 = scmp.ne.s32.totalorder %s75, %s77
    %p81 = scmp.eq.s32.totalorder %s20, 0
    %p82 = por %p80, %p81
    %p83 = scmp.ne.s32.totalorder %s75, %s77
    %p84 = scmp.eq.s32.totalorder %s25, 1
    %p85 = por %p83, %p84
    %p86 = scmp.ne.s32.totalorder %s77, %s78
    %p87 = scmp.eq.s32.totalorder %s25, 0
    %p88 = por %p86, %p87
    %p89 = scmp.ne.s32.totalorder %s77, %s78
    %p90 = scmp.eq.s32.totalorder %s26, 1
    %p91 = por %p89, %p90
    %p93 = scmp.ne.s32.totalorder %s78, %s92
    %p94 = scmp.eq.s32.totalorder %s26, 0
    %p95 = por %p93, %p94
    %s97 = sadd.s32 %s96, 1
    %p100 = scmp.eq.s32.totalorder %s20, 1
    %p101 = scmp.ne.s32.totalorder %s96, %s98
    %p102 = scmp.eq.s32.totalorder %s20, 0
    %p103 = por %p101, %p102
    %p104 = scmp.ne.s32.totalorder %s96, %s98
    %p105 = scmp.eq.s32.totalorder %s25, 1
    %p106 = por %p104, %p105
    %p107 = scmp.ne.s32.totalorder %s98, %s99
    %p108 = scmp.eq.s32.totalorder %s25, 0
    %p109 = por %p107, %p108
    %p110 = scmp.ne.s32.totalorder %s98, %s99
    %p111 = scmp.eq.s32.totalorder %s26, 1
    %p112 = por %p110, %p111
    %p114 = scmp.ne.s32.totalorder %s99, %s113
    %p115 = scmp.eq.s32.totalorder %s26, 0
    %p116 = por %p114, %p115
    %s118 = sadd.s32 %s117, 1
    %p121 = scmp.eq.s32.totalorder %s20, 1
    %p122 = scmp.ne.s32.totalorder %s117, %s119
    %p123 = scmp.eq.s32.totalorder %s20, 0
    %p124 = por %p122, %p123
    %p125 = scmp.ne.s32.totalorder %s117, %s119
    %p126 = scmp.eq.s32.totalorder %s25, 1
    %p127 = por %p125, %p126
    %p128 = scmp.ne.s32.totalorder %s119, %s120
    %p129 = scmp.eq.s32.totalorder %s25, 0
    %p130 = por %p128, %p129
    %p131 = scmp.ne.s32.totalorder %s119, %s120
    %p132 = scmp.eq.s32.totalorder %s26, 1
    %p133 = por %p131, %p132
    %p135 = scmp.ne.s32.totalorder %s120, %s134
    %p136 = scmp.eq.s32.totalorder %s26, 0
    %p137 = por %p135, %p136
    %s139 = sadd.s32 %s138, 1
    %p142 = scmp.eq.s32.totalorder %s20, 1
    %p143 = scmp.ne.s32.totalorder %s138, %s140
    %p144 = scmp.eq.s32.totalorder %s20, 0
    %p145 = por %p143, %p144
    %p146 = scmp.ne.s32.totalorder %s138, %s140
    %p147 = scmp.eq.s32.totalorder %s25, 1
    %p148 = por %p146, %p147
    %p149 = scmp.ne.s32.totalorder %s140, %s141
    %p150 = scmp.eq.s32.totalorder %s25, 0
    %p151 = por %p149, %p150
    %p152 = scmp.ne.s32.totalorder %s140, %s141
    %p153 = scmp.eq.s32.totalorder %s26, 1
    %p154 = por %p152, %p153
    %p156 = scmp.ne.s32.totalorder %s141, %s155
    %p157 = scmp.eq.s32.totalorder %s26, 0
    %p158 = por %p156, %p157
    %s160 = sadd.s32 %s159, 1
    %p163 = scmp.eq.s32.totalorder %s20, 1
    %p164 = scmp.ne.s32.totalorder %s159, %s161
    %p165 = scmp.eq.s32.totalorder %s20, 0
    %p166 = por %p164, %p165
    %p167 = scmp.ne.s32.totalorder %s159, %s161
    %p168 = scmp.eq.s32.totalorder %s25, 1
    %p169 = por %p167, %p168
    %p170 = scmp.ne.s32.totalorder %s161, %s162
    %p171 = scmp.eq.s32.totalorder %s25, 0
    %p172 = por %p170, %p171
    %p173 = scmp.ne.s32.totalorder %s161, %s162
    %p174 = scmp.eq.s32.totalorder %s26, 1
    %p175 = por %p173, %p174
    %p177 = scmp.ne.s32.totalorder %s162, %s176
    %p178 = scmp.eq.s32.totalorder %s26, 0
    %p179 = por %p177, %p178
    %s181 = sadd.s32 %s180, 1
    %p184 = scmp.eq.s32.totalorder %s20, 1
    %p185 = scmp.ne.s32.totalorder %s180, %s182
    %p186 = scmp.eq.s32.totalorder %s20, 0
    %p187 = por %p185, %p186
    %p188 = scmp.ne.s32.totalorder %s180, %s182
    %p189 = scmp.eq.s32.totalorder %s25, 1
    %p190 = por %p188, %p189
    %p191 = scmp.ne.s32.totalorder %s182, %s183
    %p192 = scmp.eq.s32.totalorder %s25, 0
    %p193 = por %p191, %p192
    %p194 = scmp.ne.s32.totalorder %s182, %s183
    %p195 = scmp.eq.s32.totalorder %s26, 1
    %p196 = por %p194, %p195
    %p198 = scmp.ne.s32.totalorder %s183, %s197
    %p199 = scmp.eq.s32.totalorder %s26, 0
    %p200 = por %p198, %p199
    %s202 = sadd.s32 %s201, 1
    %p205 = scmp.eq.s32.totalorder %s20, 1
    %p206 = scmp.ne.s32.totalorder %s201, %s203
    %p207 = scmp.eq.s32.totalorder %s20, 0
    %p208 = por %p206, %p207
    %p209 = scmp.ne.s32.totalorder %s201, %s203
    %p210 = scmp.eq.s32.totalorder %s25, 1
    %p211 = por %p209, %p210
    %p212 = scmp.ne.s32.totalorder %s203, %s204
    %p213 = scmp.eq.s32.totalorder %s25, 0
    %p214 = por %p212, %p213
    %p215 = scmp.ne.s32.totalorder %s203, %s204
    %p216 = scmp.eq.s32.totalorder %s26, 1
    %p217 = por %p215, %p216
    %p219 = scmp.ne.s32.totalorder %s204, %s218
    %p220 = scmp.eq.s32.totalorder %s26, 0
    %p221 = por %p219, %p220
    %s223 = sadd.s32 %s222, 1
    %p226 = scmp.eq.s32.totalorder %s20, 1
    %p227 = scmp.ne.s32.totalorder %s222, %s224
    %p228 = scmp.eq.s32.totalorder %s20, 0
    %p229 = por %p227, %p228
    %p230 = scmp.ne.s32.totalorder %s222, %s224
    %p231 = scmp.eq.s32.totalorder %s25, 1
    %p232 = por %p230, %p231
    %p233 = scmp.ne.s32.totalorder %s224, %s225
    %p234 = scmp.eq.s32.totalorder %s25, 0
    %p235 = por %p233, %p234
    %p236 = scmp.ne.s32.totalorder %s224, %s225
    %p237 = scmp.eq.s32.totalorder %s26, 1
    %p238 = por %p236, %p237
    %p240 = scmp.ne.s32.totalorder %s225, %s239
    %p241 = scmp.eq.s32.totalorder %s26, 0
    %p242 = por %p240, %p241
    %s244 = sadd.s32 %s243, 1
    %p247 = scmp.eq.s32.totalorder %s20, 1
    %p248 = scmp.ne.s32.totalorder %s243, %s245
    %p249 = scmp.eq.s32.totalorder %s20, 0
    %p250 = por %p248, %p249
    %p251 = scmp.ne.s32.totalorder %s243, %s245
    %p252 = scmp.eq.s32.totalorder %s25, 1
    %p253 = por %p251, %p252
    %p254 = scmp.ne.s32.totalorder %s245, %s246
    %p255 = scmp.eq.s32.totalorder %s25, 0
    %p256 = por %p254, %p255
    %p257 = scmp.ne.s32.totalorder %s245, %s246
    %p258 = scmp.eq.s32.totalorder %s26, 1
    %p259 = por %p257, %p258
    %p261 = scmp.ne.s32.totalorder %s246, %s260
    %p262 = scmp.eq.s32.totalorder %s26, 0
    %p263 = por %p261, %p262
    %s265 = sadd.s32 %s264, 1
    %p268 = scmp.eq.s32.totalorder %s20, 1
    %p269 = scmp.ne.s32.totalorder %s264, %s266
    %p270 = scmp.eq.s32.totalorder %s20, 0
    %p271 = por %p269, %p270
    %p272 = scmp.ne.s32.totalorder %s264, %s266
    %p273 = scmp.eq.s32.totalorder %s25, 1
    %p274 = por %p272, %p273
    %p275 = scmp.ne.s32.totalorder %s266, %s267
    %p276 = scmp.eq.s32.totalorder %s25, 0
    %p277 = por %p275, %p276
    %p278 = scmp.ne.s32.totalorder %s266, %s267
    %p279 = scmp.eq.s32.totalorder %s26, 1
    %p280 = por %p278, %p279
    %p282 = scmp.ne.s32.totalorder %s267, %s281
    %p283 = scmp.eq.s32.totalorder %s26, 0
    %p284 = por %p282, %p283
    %s286 = sadd.s32 %s285, 1
    %p289 = scmp.eq.s32.totalorder %s20, 1
    %p290 = scmp.ne.s32.totalorder %s285, %s287
    %p291 = scmp.eq.s32.totalorder %s20, 0
    %p292 = por %p290, %p291
    %p293 = scmp.ne.s32.totalorder %s285, %s287
    %p294 = scmp.eq.s32.totalorder %s25, 1
    %p295 = por %p293, %p294
    %p296 = scmp.ne.s32.totalorder %s287, %s288
    %p297 = scmp.eq.s32.totalorder %s25, 0
    %p298 = por %p296, %p297
    %p299 = scmp.ne.s32.totalorder %s287, %s288
    %p300 = scmp.eq.s32.totalorder %s26, 1
    %p301 = por %p299, %p300
    %p303 = scmp.ne.s32.totalorder %s288, %s302
    %p304 = scmp.eq.s32.totalorder %s26, 0
    %p305 = por %p303, %p304
    %s307 = sadd.s32 %s306, 1
    %p310 = scmp.eq.s32.totalorder %s20, 1
    %p311 = scmp.ne.s32.totalorder %s306, %s308
    %p312 = scmp.eq.s32.totalorder %s20, 0
    %p313 = por %p311, %p312
    %p314 = scmp.ne.s32.totalorder %s306, %s308
    %p315 = scmp.eq.s32.totalorder %s25, 1
    %p316 = por %p314, %p315
    %p317 = scmp.ne.s32.totalorder %s308, %s309
    %p318 = scmp.eq.s32.totalorder %s25, 0
    %p319 = por %p317, %p318
    %p320 = scmp.ne.s32.totalorder %s308, %s309
    %p321 = scmp.eq.s32.totalorder %s26, 1
    %p322 = por %p320, %p321
    %p324 = scmp.ne.s32.totalorder %s309, %s323
    %p325 = scmp.eq.s32.totalorder %s26, 0
    %p326 = por %p324, %p325
    %s327 = ssub.s32 %s20, %s27
    %p328 = scmp.eq.s32.totalorder %s327, 0
    %s330 = sadd.s32 %s329, 1
    %s331 = scalar_select %p328, %s329, %s330
    %p334 = pneg %p328
    %p335 = scmp.eq.s32.totalorder %s20, 1
    %p336 = por %p334, %p335
    %p337 = scmp.ne.s32.totalorder %s329, %s332
    %p338 = scmp.eq.s32.totalorder %s20, 0
    %p339 = por %p337, %p338
    %p340 = scmp.ne.s32.totalorder %s329, %s332
    %p341 = scmp.eq.s32.totalorder %s25, 1
    %p342 = por %p340, %p341
    %p343 = scmp.ne.s32.totalorder %s332, %s333
    %p344 = scmp.eq.s32.totalorder %s25, 0
    %p345 = por %p343, %p344
    %p346 = scmp.ne.s32.totalorder %s332, %s333
    %p347 = scmp.eq.s32.totalorder %s26, 1
    %p348 = por %p346, %p347
    %p350 = scmp.ne.s32.totalorder %s333, %s349
    %p351 = scmp.eq.s32.totalorder %s26, 0
    %p352 = por %p350, %p351
    %p353 = scmp.le.s32.totalorder 1, %s20
    %p354 = scmp.lt.s32.totalorder %s20, 3
    %p355 = pnand %p353, %p354
    %p356 = pneg %p355
    // Predicated region
    $region9: #{time_encoder_forward.1} parent=5 // pred_check
      _
    $region10: #{time_encoder_forward.1} parent=5 // pred_check_branch
      %358 = sbr.rel (%p355) target = $region12
    $region11: #{time_encoder_forward.1} parent=5 // pred_region
      %s359 = ssub.s32 %s20, 1
      // Predicated region
      $region13: #{time_encoder_forward.1} parent=11 // pred_check
        %p360 = pneg %p67
      $region14: #{time_encoder_forward.1} parent=11 // pred_check_branch
        %362 = sbr.rel (%p360) target = $region16
      $region15: #{time_encoder_forward.1} parent=11 // pred_region
        _
      $region16: #{time_encoder_forward.1} parent=11 // pred_fallthru
        _
      // Predicated region
      $region17: #{time_encoder_forward.1} parent=11 // pred_check
        %p363 = pneg %p88
      $region18: #{time_encoder_forward.1} parent=11 // pred_check_branch
        %365 = sbr.rel (%p363) target = $region20
      $region19: #{time_encoder_forward.1} parent=11 // pred_region
        _
      $region20: #{time_encoder_forward.1} parent=11 // pred_fallthru
        _
      // Predicated region
      $region21: #{time_encoder_forward.1} parent=11 // pred_check
        %p366 = pneg %p109
      $region22: #{time_encoder_forward.1} parent=11 // pred_check_branch
        %368 = sbr.rel (%p366) target = $region24
      $region23: #{time_encoder_forward.1} parent=11 // pred_region
        _
      $region24: #{time_encoder_forward.1} parent=11 // pred_fallthru
        _
      // Predicated region
      $region25: #{time_encoder_forward.1} parent=11 // pred_check
        %p369 = pneg %p130
      $region26: #{time_encoder_forward.1} parent=11 // pred_check_branch
        %371 = sbr.rel (%p369) target = $region28
      $region27: #{time_encoder_forward.1} parent=11 // pred_region
        _
      $region28: #{time_encoder_forward.1} parent=11 // pred_fallthru
        _
      // Predicated region
      $region29: #{time_encoder_forward.1} parent=11 // pred_check
        %p372 = pneg %p151
      $region30: #{time_encoder_forward.1} parent=11 // pred_check_branch
        %374 = sbr.rel (%p372) target = $region32
      $region31: #{time_encoder_forward.1} parent=11 // pred_region
        _
      $region32: #{time_encoder_forward.1} parent=11 // pred_fallthru
        _
      // Predicated region
      $region33: #{time_encoder_forward.1} parent=11 // pred_check
        %p375 = pneg %p172
      $region34: #{time_encoder_forward.1} parent=11 // pred_check_branch
        %377 = sbr.rel (%p375) target = $region36
      $region35: #{time_encoder_forward.1} parent=11 // pred_region
        _
      $region36: #{time_encoder_forward.1} parent=11 // pred_fallthru
        _
      // Predicated region
      $region37: #{time_encoder_forward.1} parent=11 // pred_check
        %p378 = pneg %p193
      $region38: #{time_encoder_forward.1} parent=11 // pred_check_branch
        %380 = sbr.rel (%p378) target = $region40
      $region39: #{time_encoder_forward.1} parent=11 // pred_region
        _
      $region40: #{time_encoder_forward.1} parent=11 // pred_fallthru
        _
      // Predicated region
      $region41: #{time_encoder_forward.1} parent=11 // pred_check
        %p381 = pneg %p214
      $region42: #{time_encoder_forward.1} parent=11 // pred_check_branch
        %383 = sbr.rel (%p381) target = $region44
      $region43: #{time_encoder_forward.1} parent=11 // pred_region
        _
      $region44: #{time_encoder_forward.1} parent=11 // pred_fallthru
        _
      // Predicated region
      $region45: #{time_encoder_forward.1} parent=11 // pred_check
        %p384 = pneg %p235
      $region46: #{time_encoder_forward.1} parent=11 // pred_check_branch
        %386 = sbr.rel (%p384) target = $region48
      $region47: #{time_encoder_forward.1} parent=11 // pred_region
        _
      $region48: #{time_encoder_forward.1} parent=11 // pred_fallthru
        _
      // Predicated region
      $region49: #{time_encoder_forward.1} parent=11 // pred_check
        %p387 = pneg %p256
      $region50: #{time_encoder_forward.1} parent=11 // pred_check_branch
        %389 = sbr.rel (%p387) target = $region52
      $region51: #{time_encoder_forward.1} parent=11 // pred_region
        _
      $region52: #{time_encoder_forward.1} parent=11 // pred_fallthru
        _
      // Predicated region
      $region53: #{time_encoder_forward.1} parent=11 // pred_check
        %p390 = pneg %p277
      $region54: #{time_encoder_forward.1} parent=11 // pred_check_branch
        %392 = sbr.rel (%p390) target = $region56
      $region55: #{time_encoder_forward.1} parent=11 // pred_region
        _
      $region56: #{time_encoder_forward.1} parent=11 // pred_fallthru
        _
      // Predicated region
      $region57: #{time_encoder_forward.1} parent=11 // pred_check
        %p393 = pneg %p298
      $region58: #{time_encoder_forward.1} parent=11 // pred_check_branch
        %395 = sbr.rel (%p393) target = $region60
      $region59: #{time_encoder_forward.1} parent=11 // pred_region
        _
      $region60: #{time_encoder_forward.1} parent=11 // pred_fallthru
        _
      // Predicated region
      $region61: #{time_encoder_forward.1} parent=11 // pred_check
        %p396 = pneg %p319
      $region62: #{time_encoder_forward.1} parent=11 // pred_check_branch
        %398 = sbr.rel (%p396) target = $region64
      $region63: #{time_encoder_forward.1} parent=11 // pred_region
        _
      $region64: #{time_encoder_forward.1} parent=11 // pred_fallthru
        _
    $region12: #{time_encoder_forward.1} parent=5 // pred_fallthru
      _
    %p399 = scmp.lt.s32.totalorder %s20, 2
    // Predicated region
    $region65: #{time_encoder_forward.1} parent=5 // pred_check
      %p400 = pneg %p399
    $region66: #{time_encoder_forward.1} parent=5 // pred_check_branch
      %402 = sbr.rel (%p400) target = $region68
    $region67: #{time_encoder_forward.1} parent=5 // pred_region
      // Predicated region
      $region69: #{time_encoder_forward.1} parent=67 // pred_check
        %p403 = pneg %p40
      $region70: #{time_encoder_forward.1} parent=67 // pred_check_branch
        %405 = sbr.rel (%p403) target = $region72
      $region71: #{time_encoder_forward.1} parent=67 // pred_region
        %p406 = scmp.lt.s32.totalorder %s20, 1
        %s407 = scalar_select %p406, %s20, 1
        %s408 = smul.addr %s407, 120
        %s409 = smul.addr %s408, 4
        %s410 = scalar_lea.vmem %s0, %s409
      $region72: #{time_encoder_forward.1} parent=67 // pred_fallthru
        _
    $region68: #{time_encoder_forward.1} parent=5 // pred_fallthru
      _
    %p411 = scmp.le.s32.totalorder 1, %s20
    %p412 = scmp.lt.s32.totalorder %s20, 3
    %p413 = pnand %p411, %p412
    %p414 = pneg %p413
    // Predicated region
    $region73: #{time_encoder_forward.1} parent=5 // pred_check
      _
    $region74: #{time_encoder_forward.1} parent=5 // pred_check_branch
      %416 = sbr.rel (%p413) target = $region76
    $region75: #{time_encoder_forward.1} parent=5 // pred_region
      %s417 = ssub.s32 %s20, 1
      %p418 = scmp.lt.s32.totalorder %s25, 1
      %s419 = scalar_select %p418, %s25, 1
      %s420 = smul.addr %s419, 120
      %s421 = smul.addr %s420, 4
      %s422 = scalar_lea.vmem %s0, %s421
      %p423 = pneg %p46
      %p424 = pneg %p43
      %p425 = pneg %p67
      %p426 = pneg %p64
      %p427 = pneg %p88
      %p428 = pneg %p85
      %p429 = pneg %p109
      %p430 = pneg %p106
      %p431 = pneg %p130
      %p432 = pneg %p127
      %p433 = pneg %p151
      %p434 = pneg %p148
      %p435 = pneg %p172
      %p436 = pneg %p169
      %p437 = pneg %p193
      %p438 = pneg %p190
      %p439 = pneg %p214
      %p440 = pneg %p211
      %p441 = pneg %p235
      %p442 = pneg %p232
      %p443 = pneg %p256
      %p444 = pneg %p253
      %p445 = pneg %p277
      %p446 = pneg %p274
      %p447 = pneg %p298
      %p448 = pneg %p295
      %p449 = pneg %p319
      %p450 = pneg %p316
      %p451 = pneg %p345
      %p452 = pneg %p342
      %p453 = scmp.lt.s32.totalorder %s25, 1
      %s454 = scalar_select %p453, %s25, 1
      %s455 = smul.addr %s454, 4
      %s456 = scalar_lea.vmem %s14, %s455
      %p457 = scmp.lt.s32.totalorder %s25, 1
      %s458 = scalar_select %p457, %s25, 1
      %s459 = smul.addr %s458, 120
      %s460 = smul.addr %s459, 4
      %s461 = scalar_lea.vmem %s0, %s460
      %p462 = scmp.lt.s32.totalorder %s25, 1
      %s463 = scalar_select %p462, %s25, 1
      %s464 = smul.addr %s463, 4
      %s465 = scalar_lea.vmem %s14, %s464
      %v467 = vld [vmem:[%s461] sm:$0xff]
      %v468 = vld [vmem:[%s461 + $0x8] sm:$0xff]
      %v469 = vld [vmem:[%s461 + $0x10] sm:$0xff]
      %v470 = vld [vmem:[%s461 + $0x18] sm:$0xff]
      %v471 = vld [vmem:[%s461 + $0x20] sm:$0xff]
      %v472 = vld [vmem:[%s461 + $0x28] sm:$0xff]
      %v473 = vld [vmem:[%s461 + $0x30] sm:$0xff]
      %v474 = vld [vmem:[%s461 + $0x38] sm:$0xff]
      %v475 = vld [vmem:[%s461 + $0x40] sm:$0xff]
      %v476 = vld [vmem:[%s461 + $0x48] sm:$0xff]
      %v477 = vld [vmem:[%s461 + $0x50] sm:$0xff]
      %v478 = vld [vmem:[%s461 + $0x58] sm:$0xff]
      %v479 = vld [vmem:[%s461 + $0x60] sm:$0xff]
      %v480 = vld [vmem:[%s461 + $0x68] sm:$0xff]
      %v481 = vld [vmem:[%s461 + $0x70] sm:$0xff]
      %v482 = vld [vmem:[%s461 + $0x78] sm:$0xff]
      %v483 = vld [vmem:[%s461 + $0x80] sm:$0xff]
      %v484 = vld [vmem:[%s461 + $0x88] sm:$0xff]
      %v485 = vld [vmem:[%s461 + $0x90] sm:$0xff]
      %v486 = vld [vmem:[%s461 + $0x98] sm:$0xff]
      %v487 = vld [vmem:[%s461 + $0xa0] sm:$0xff]
      %v488 = vld [vmem:[%s461 + $0xa8] sm:$0xff]
      %v489 = vld [vmem:[%s461 + $0xb0] sm:$0xff]
      %v490 = vld [vmem:[%s461 + $0xb8] sm:$0xff]
      %v491 = vld [vmem:[%s461 + $0xc0] sm:$0xff]
      %v492 = vld [vmem:[%s461 + $0xc8] sm:$0xff]
      %v493 = vld [vmem:[%s461 + $0xd0] sm:$0xff]
      %v494 = vld [vmem:[%s461 + $0xd8] sm:$0xff]
      %v495 = vld [vmem:[%s461 + $0xe0] sm:$0xff]
      %v496 = vld [vmem:[%s461 + $0xe8] sm:$0xff]
      %v497 = vld [vmem:[%s461 + $0xf0] sm:$0xff]
      %v498 = vld [vmem:[%s461 + $0xf8] sm:$0xff]
      %v499 = vld [vmem:[%s461 + $0x100] sm:$0xff]
      %v500 = vld [vmem:[%s461 + $0x108] sm:$0xff]
      %v501 = vld [vmem:[%s461 + $0x110] sm:$0xff]
      %v502 = vld [vmem:[%s461 + $0x118] sm:$0xff]
      %v503 = vld [vmem:[%s461 + $0x120] sm:$0xff]
      %v504 = vld [vmem:[%s461 + $0x128] sm:$0xff]
      %v505 = vld [vmem:[%s461 + $0x130] sm:$0xff]
      %v506 = vld [vmem:[%s461 + $0x138] sm:$0xff]
      %v507 = vld [vmem:[%s461 + $0x140] sm:$0xff]
      %v508 = vld [vmem:[%s461 + $0x148] sm:$0xff]
      %v509 = vld [vmem:[%s461 + $0x150] sm:$0xff]
      %v510 = vld [vmem:[%s461 + $0x158] sm:$0xff]
      %v511 = vld [vmem:[%s461 + $0x160] sm:$0xff]
      %v512 = vld [vmem:[%s461 + $0x168] sm:$0xff]
      %v513 = vld [vmem:[%s461 + $0x170] sm:$0xff]
      %v514 = vld [vmem:[%s461 + $0x178] sm:$0xff]
      %v515 = vld [vmem:[%s461 + $0x180] sm:$0xff]
      %v516 = vld [vmem:[%s461 + $0x188] sm:$0xff]
      %v517 = vld [vmem:[%s461 + $0x190] sm:$0xff]
      %v518 = vld [vmem:[%s461 + $0x198] sm:$0xff]
      %v519 = vld [vmem:[%s461 + $0x1a0] sm:$0xff]
      %v520 = vld [vmem:[%s461 + $0x1a8] sm:$0xff]
      %v521 = vld [vmem:[%s461 + $0x1b0] sm:$0xff]
      %v522 = vld [vmem:[%s461 + $0x1b8] sm:$0xff]
      %v523 = vld [vmem:[%s461 + $0x1c0] sm:$0xff]
      %v524 = vld [vmem:[%s461 + $0x1c8] sm:$0xff]
      %v525 = vld [vmem:[%s461 + $0x1d0] sm:$0xff]
      %v526 = vld [vmem:[%s461 + $0x1d8] sm:$0xff]
      %v527 = vld [vmem:[%s1] sm:$0xf]
      %v528 = vld [vmem:[%s1 + $0x4] sm:$0xf]
      %v529 = vld [vmem:[%s1 + $0x8] sm:$0xf]
      %v530 = vld [vmem:[%s1 + $0xc] sm:$0xf]
      %v531 = vld [vmem:[%s1 + $0x10] sm:$0xf]
      %v532 = vld [vmem:[%s1 + $0x14] sm:$0xf]
      %v533 = vld [vmem:[%s1 + $0x18] sm:$0xf]
      %v534 = vld [vmem:[%s1 + $0x1c] sm:$0xf]
      %v535 = vld [vmem:[%s1 + $0x20] sm:$0xf]
      %v536 = vld [vmem:[%s1 + $0x24] sm:$0xf]
      %v537 = vld [vmem:[%s1 + $0x28] sm:$0xf]
      %v538 = vld [vmem:[%s1 + $0x2c] sm:$0xf]
      %v539 = vld [vmem:[%s1 + $0x30] sm:$0xf]
      %v540 = vld [vmem:[%s1 + $0x34] sm:$0xf]
      %v541 = vld [vmem:[%s1 + $0x38] sm:$0xf]
      %v542 = vld [vmem:[%s1 + $0x3c] sm:$0xf]
      %v543 = vld [vmem:[%s1 + $0x40] sm:$0xf]
      %v544 = vld [vmem:[%s1 + $0x44] sm:$0xf]
      %v545 = vld [vmem:[%s1 + $0x48] sm:$0xf]
      %v546 = vld [vmem:[%s1 + $0x4c] sm:$0xf]
      %v547 = vld [vmem:[%s1 + $0x50] sm:$0xf]
      %v548 = vld [vmem:[%s1 + $0x54] sm:$0xf]
      %v549 = vld [vmem:[%s1 + $0x58] sm:$0xf]
      %v550 = vld [vmem:[%s1 + $0x5c] sm:$0xf]
      %v551 = vld [vmem:[%s1 + $0x60] sm:$0xf]
      %v552 = vld [vmem:[%s1 + $0x64] sm:$0xf]
      %v553 = vld [vmem:[%s1 + $0x68] sm:$0xf]
      %v554 = vld [vmem:[%s1 + $0x6c] sm:$0xf]
      %v555 = vld [vmem:[%s1 + $0x70] sm:$0xf]
      %v556 = vld [vmem:[%s1 + $0x74] sm:$0xf]
      %v557 = vld [vmem:[%s1 + $0x78] sm:$0xf]
      %v558 = vld [vmem:[%s1 + $0x7c] sm:$0xf]
      %v559 = vld [vmem:[%s1 + $0x80] sm:$0xf]
      %v560 = vld [vmem:[%s1 + $0x84] sm:$0xf]
      %v561 = vld [vmem:[%s1 + $0x88] sm:$0xf]
      %v562 = vld [vmem:[%s1 + $0x8c] sm:$0xf]
      %v563 = vld [vmem:[%s1 + $0x90] sm:$0xf]
      %v564 = vld [vmem:[%s1 + $0x94] sm:$0xf]
      %v565 = vld [vmem:[%s1 + $0x98] sm:$0xf]
      %v566 = vld [vmem:[%s1 + $0x9c] sm:$0xf]
      %v567 = vld [vmem:[%s1 + $0xa0] sm:$0xf]
      %v568 = vld [vmem:[%s1 + $0xa4] sm:$0xf]
      %v569 = vld [vmem:[%s1 + $0xa8] sm:$0xf]
      %v570 = vld [vmem:[%s1 + $0xac] sm:$0xf]
      %v571 = vld [vmem:[%s1 + $0xb0] sm:$0xf]
      %v572 = vld [vmem:[%s1 + $0xb4] sm:$0xf]
      %v573 = vld [vmem:[%s1 + $0xb8] sm:$0xf]
      %v574 = vld [vmem:[%s1 + $0xbc] sm:$0xf]
      %v575 = vld [vmem:[%s1 + $0xc0] sm:$0xf]
      %v576 = vld [vmem:[%s1 + $0xc4] sm:$0xf]
      %v577 = vld [vmem:[%s1 + $0xc8] sm:$0xf]
      %v578 = vld [vmem:[%s1 + $0xcc] sm:$0xf]
      %v579 = vld [vmem:[%s1 + $0xd0] sm:$0xf]
      %v580 = vld [vmem:[%s1 + $0xd4] sm:$0xf]
      %v581 = vld [vmem:[%s1 + $0xd8] sm:$0xf]
      %v582 = vld [vmem:[%s1 + $0xdc] sm:$0xf]
      %v583 = vld [vmem:[%s1 + $0xe0] sm:$0xf]
      %v584 = vld [vmem:[%s1 + $0xe4] sm:$0xf]
      %v585 = vld [vmem:[%s1 + $0xe8] sm:$0xf]
      %v586 = vld [vmem:[%s1 + $0xec] sm:$0xf]
      %v587 = vld [vmem:[%s1 + $0xf0] sm:$0xf]
      %v588 = vld [vmem:[%s1 + $0xf4] sm:$0xf]
      %v589 = vld [vmem:[%s1 + $0xf8] sm:$0xf]
      %v590 = vld [vmem:[%s1 + $0xfc] sm:$0xf]
      %v591 = vld [vmem:[%s9] sm:$0x1]
      %v593 = vlaneseq
      %v594 = vshrl.u32 %v593, 7
      %v595 = vsub.s32 0, %v594
      %v596 = vrot.slane %v591, %v595
      %v658 = vunpack.c.l.b16 %v467
      %v659 = vunpack.c.h.b16 %v467
      %v660 = vunpack.c.l.b16 %v468
      %v661 = vunpack.c.h.b16 %v468
      %v662 = vunpack.c.l.b16 %v469
      %v663 = vunpack.c.h.b16 %v469
      %v664 = vunpack.c.l.b16 %v470
      %v665 = vunpack.c.h.b16 %v470
      %v666 = vunpack.c.l.b16 %v471
      %v667 = vunpack.c.h.b16 %v471
      %v668 = vunpack.c.l.b16 %v472
      %v669 = vunpack.c.h.b16 %v472
      %v670 = vunpack.c.l.b16 %v473
      %v671 = vunpack.c.h.b16 %v473
      %v672 = vunpack.c.l.b16 %v474
      %v673 = vunpack.c.h.b16 %v474
      %v674 = vunpack.c.l.b16 %v475
      %v675 = vunpack.c.h.b16 %v475
      %v676 = vunpack.c.l.b16 %v476
      %v677 = vunpack.c.h.b16 %v476
      %v678 = vunpack.c.l.b16 %v477
      %v679 = vunpack.c.h.b16 %v477
      %v680 = vunpack.c.l.b16 %v478
      %v681 = vunpack.c.h.b16 %v478
      %v682 = vunpack.c.l.b16 %v479
      %v683 = vunpack.c.h.b16 %v479
      %v684 = vunpack.c.l.b16 %v480
      %v685 = vunpack.c.h.b16 %v480
      %v686 = vunpack.c.l.b16 %v481
      %v687 = vunpack.c.h.b16 %v481
      %v688 = vunpack.c.l.b16 %v482
      %v689 = vunpack.c.h.b16 %v482
      %v690 = vunpack.c.l.b16 %v483
      %v691 = vunpack.c.h.b16 %v483
      %v692 = vunpack.c.l.b16 %v484
      %v693 = vunpack.c.h.b16 %v484
      %v694 = vunpack.c.l.b16 %v485
      %v695 = vunpack.c.h.b16 %v485
      %v696 = vunpack.c.l.b16 %v486
      %v697 = vunpack.c.h.b16 %v486
      %v698 = vunpack.c.l.b16 %v487
      %v699 = vunpack.c.h.b16 %v487
      %v700 = vunpack.c.l.b16 %v488
      %v701 = vunpack.c.h.b16 %v488
      %v702 = vunpack.c.l.b16 %v489
      %v703 = vunpack.c.h.b16 %v489
      %v704 = vunpack.c.l.b16 %v490
      %v705 = vunpack.c.h.b16 %v490
      %v706 = vunpack.c.l.b16 %v491
      %v707 = vunpack.c.h.b16 %v491
      %v708 = vunpack.c.l.b16 %v492
      %v709 = vunpack.c.h.b16 %v492
      %v710 = vunpack.c.l.b16 %v493
      %v711 = vunpack.c.h.b16 %v493
      %v712 = vunpack.c.l.b16 %v494
      %v713 = vunpack.c.h.b16 %v494
      %v714 = vunpack.c.l.b16 %v495
      %v715 = vunpack.c.h.b16 %v495
      %v716 = vunpack.c.l.b16 %v496
      %v717 = vunpack.c.h.b16 %v496
      %v718 = vunpack.c.l.b16 %v497
      %v719 = vunpack.c.h.b16 %v497
      %v720 = vunpack.c.l.b16 %v498
      %v721 = vunpack.c.h.b16 %v498
      %v722 = vunpack.c.l.b16 %v499
      %v723 = vunpack.c.h.b16 %v499
      %v724 = vunpack.c.l.b16 %v500
      %v725 = vunpack.c.h.b16 %v500
      %v726 = vunpack.c.l.b16 %v501
      %v727 = vunpack.c.h.b16 %v501
      %v728 = vunpack.c.l.b16 %v502
      %v729 = vunpack.c.h.b16 %v502
      %v730 = vunpack.c.l.b16 %v503
      %v731 = vunpack.c.h.b16 %v503
      %v732 = vunpack.c.l.b16 %v504
      %v733 = vunpack.c.h.b16 %v504
      %v734 = vunpack.c.l.b16 %v505
      %v735 = vunpack.c.h.b16 %v505
      %v736 = vunpack.c.l.b16 %v506
      %v737 = vunpack.c.h.b16 %v506
      %v738 = vunpack.c.l.b16 %v507
      %v739 = vunpack.c.h.b16 %v507
      %v740 = vunpack.c.l.b16 %v508
      %v741 = vunpack.c.h.b16 %v508
      %v742 = vunpack.c.l.b16 %v509
      %v743 = vunpack.c.h.b16 %v509
      %v744 = vunpack.c.l.b16 %v510
      %v745 = vunpack.c.h.b16 %v510
      %v746 = vunpack.c.l.b16 %v511
      %v747 = vunpack.c.h.b16 %v511
      %v748 = vunpack.c.l.b16 %v512
      %v749 = vunpack.c.h.b16 %v512
      %v750 = vunpack.c.l.b16 %v513
      %v751 = vunpack.c.h.b16 %v513
      %v752 = vunpack.c.l.b16 %v514
      %v753 = vunpack.c.h.b16 %v514
      %v754 = vunpack.c.l.b16 %v515
      %v755 = vunpack.c.h.b16 %v515
      %v756 = vunpack.c.l.b16 %v516
      %v757 = vunpack.c.h.b16 %v516
      %v758 = vunpack.c.l.b16 %v517
      %v759 = vunpack.c.h.b16 %v517
      %v760 = vunpack.c.l.b16 %v518
      %v761 = vunpack.c.h.b16 %v518
      %v762 = vunpack.c.l.b16 %v519
      %v763 = vunpack.c.h.b16 %v519
      %v764 = vunpack.c.l.b16 %v520
      %v765 = vunpack.c.h.b16 %v520
      %v766 = vunpack.c.l.b16 %v521
      %v767 = vunpack.c.h.b16 %v521
      %v768 = vunpack.c.l.b16 %v522
      %v769 = vunpack.c.h.b16 %v522
      %v770 = vunpack.c.l.b16 %v523
      %v771 = vunpack.c.h.b16 %v523
      %v772 = vunpack.c.l.b16 %v524
      %v773 = vunpack.c.h.b16 %v524
      %v774 = vunpack.c.l.b16 %v525
      %v775 = vunpack.c.h.b16 %v525
      %v776 = vunpack.c.l.b16 %v526
      %v777 = vunpack.c.h.b16 %v526
      %v778 = vpack.c.b16 %v662, %v658
      %v779 = vpack.c.b16 %v663, %v659
      %v780 = vpack.c.b16 %v664, %v660
      %v781 = vpack.c.b16 %v665, %v661
      %v782 = vpack.c.b16 %v670, %v666
      %v783 = vpack.c.b16 %v671, %v667
      %v784 = vpack.c.b16 %v672, %v668
      %v785 = vpack.c.b16 %v673, %v669
      %v786 = vpack.c.b16 %v678, %v674
      %v787 = vpack.c.b16 %v679, %v675
      %v788 = vpack.c.b16 %v680, %v676
      %v789 = vpack.c.b16 %v681, %v677
      %v790 = vpack.c.b16 %v686, %v682
      %v791 = vpack.c.b16 %v687, %v683
      %v792 = vpack.c.b16 %v688, %v684
      %v793 = vpack.c.b16 %v689, %v685
      %v794 = vpack.c.b16 %v694, %v690
      %v795 = vpack.c.b16 %v695, %v691
      %v796 = vpack.c.b16 %v696, %v692
      %v797 = vpack.c.b16 %v697, %v693
      %v798 = vpack.c.b16 %v702, %v698
      %v799 = vpack.c.b16 %v703, %v699
      %v800 = vpack.c.b16 %v704, %v700
      %v801 = vpack.c.b16 %v705, %v701
      %v802 = vpack.c.b16 %v710, %v706
      %v803 = vpack.c.b16 %v711, %v707
      %v804 = vpack.c.b16 %v712, %v708
      %v805 = vpack.c.b16 %v713, %v709
      %v806 = vpack.c.b16 %v718, %v714
      %v807 = vpack.c.b16 %v719, %v715
      %v808 = vpack.c.b16 %v720, %v716
      %v809 = vpack.c.b16 %v721, %v717
      %v810 = vpack.c.b16 %v726, %v722
      %v811 = vpack.c.b16 %v727, %v723
      %v812 = vpack.c.b16 %v728, %v724
      %v813 = vpack.c.b16 %v729, %v725
      %v814 = vpack.c.b16 %v734, %v730
      %v815 = vpack.c.b16 %v735, %v731
      %v816 = vpack.c.b16 %v736, %v732
      %v817 = vpack.c.b16 %v737, %v733
      %v818 = vpack.c.b16 %v742, %v738
      %v819 = vpack.c.b16 %v743, %v739
      %v820 = vpack.c.b16 %v744, %v740
      %v821 = vpack.c.b16 %v745, %v741
      %v822 = vpack.c.b16 %v750, %v746
      %v823 = vpack.c.b16 %v751, %v747
      %v824 = vpack.c.b16 %v752, %v748
      %v825 = vpack.c.b16 %v753, %v749
      %v826 = vpack.c.b16 %v758, %v754
      %v827 = vpack.c.b16 %v759, %v755
      %v828 = vpack.c.b16 %v760, %v756
      %v829 = vpack.c.b16 %v761, %v757
      %v830 = vpack.c.b16 %v766, %v762
      %v831 = vpack.c.b16 %v767, %v763
      %v832 = vpack.c.b16 %v768, %v764
      %v833 = vpack.c.b16 %v769, %v765
      %v834 = vpack.c.b16 %v774, %v770
      %v835 = vpack.c.b16 %v775, %v771
      %v836 = vpack.c.b16 %v776, %v772
      %v837 = vpack.c.b16 %v777, %v773
      %v962 = vunpack.c.l.b16 %v527
      %v963 = vunpack.c.l.b16 %v528
      %v964 = vunpack.c.l.b16 %v529
      %v965 = vunpack.c.l.b16 %v530
      %v966 = vunpack.c.l.b16 %v531
      %v967 = vunpack.c.l.b16 %v532
      %v968 = vunpack.c.l.b16 %v533
      %v969 = vunpack.c.l.b16 %v534
      %v970 = vunpack.c.l.b16 %v535
      %v971 = vunpack.c.l.b16 %v536
      %v972 = vunpack.c.l.b16 %v537
      %v973 = vunpack.c.l.b16 %v538
      %v974 = vunpack.c.l.b16 %v539
      %v975 = vunpack.c.l.b16 %v540
      %v976 = vunpack.c.l.b16 %v541
      %v977 = vunpack.c.l.b16 %v542
      %v978 = vunpack.c.l.b16 %v543
      %v979 = vunpack.c.l.b16 %v544
      %v980 = vunpack.c.l.b16 %v545
      %v981 = vunpack.c.l.b16 %v546
      %v982 = vunpack.c.l.b16 %v547
      %v983 = vunpack.c.l.b16 %v548
      %v984 = vunpack.c.l.b16 %v549
      %v985 = vunpack.c.l.b16 %v550
      %v986 = vunpack.c.l.b16 %v551
      %v987 = vunpack.c.l.b16 %v552
      %v988 = vunpack.c.l.b16 %v553
      %v989 = vunpack.c.l.b16 %v554
      %v990 = vunpack.c.l.b16 %v555
      %v991 = vunpack.c.l.b16 %v556
      %v992 = vunpack.c.l.b16 %v557
      %v993 = vunpack.c.l.b16 %v558
      %v994 = vunpack.c.l.b16 %v559
      %v995 = vunpack.c.l.b16 %v560
      %v996 = vunpack.c.l.b16 %v561
      %v997 = vunpack.c.l.b16 %v562
      %v998 = vunpack.c.l.b16 %v563
      %v999 = vunpack.c.l.b16 %v564
      %v1000 = vunpack.c.l.b16 %v565
      %v1001 = vunpack.c.l.b16 %v566
      %v1002 = vunpack.c.l.b16 %v567
      %v1003 = vunpack.c.l.b16 %v568
      %v1004 = vunpack.c.l.b16 %v569
      %v1005 = vunpack.c.l.b16 %v570
      %v1006 = vunpack.c.l.b16 %v571
      %v1007 = vunpack.c.l.b16 %v572
      %v1008 = vunpack.c.l.b16 %v573
      %v1009 = vunpack.c.l.b16 %v574
      %v1010 = vunpack.c.l.b16 %v575
      %v1011 = vunpack.c.l.b16 %v576
      %v1012 = vunpack.c.l.b16 %v577
      %v1013 = vunpack.c.l.b16 %v578
      %v1014 = vunpack.c.l.b16 %v579
      %v1015 = vunpack.c.l.b16 %v580
      %v1016 = vunpack.c.l.b16 %v581
      %v1017 = vunpack.c.l.b16 %v582
      %v1018 = vunpack.c.l.b16 %v583
      %v1019 = vunpack.c.l.b16 %v584
      %v1020 = vunpack.c.l.b16 %v585
      %v1021 = vunpack.c.l.b16 %v586
      %v1022 = vunpack.c.l.b16 %v587
      %v1023 = vunpack.c.l.b16 %v588
      %v1024 = vunpack.c.l.b16 %v589
      %v1025 = vunpack.c.l.b16 %v590
      %v1026 = vpack.c.b16 %v963, %v962
      %v1027 = vpack.c.b16 %v965, %v964
      %v1028 = vpack.c.b16 %v967, %v966
      %v1029 = vpack.c.b16 %v969, %v968
      %v1030 = vpack.c.b16 %v971, %v970
      %v1031 = vpack.c.b16 %v973, %v972
      %v1032 = vpack.c.b16 %v975, %v974
      %v1033 = vpack.c.b16 %v977, %v976
      %v1034 = vpack.c.b16 %v979, %v978
      %v1035 = vpack.c.b16 %v981, %v980
      %v1036 = vpack.c.b16 %v983, %v982
      %v1037 = vpack.c.b16 %v985, %v984
      %v1038 = vpack.c.b16 %v987, %v986
      %v1039 = vpack.c.b16 %v989, %v988
      %v1040 = vpack.c.b16 %v991, %v990
      %v1041 = vpack.c.b16 %v993, %v992
      %v1042 = vpack.c.b16 %v995, %v994
      %v1043 = vpack.c.b16 %v997, %v996
      %v1044 = vpack.c.b16 %v999, %v998
      %v1045 = vpack.c.b16 %v1001, %v1000
      %v1046 = vpack.c.b16 %v1003, %v1002
      %v1047 = vpack.c.b16 %v1005, %v1004
      %v1048 = vpack.c.b16 %v1007, %v1006
      %v1049 = vpack.c.b16 %v1009, %v1008
      %v1050 = vpack.c.b16 %v1011, %v1010
      %v1051 = vpack.c.b16 %v1013, %v1012
      %v1052 = vpack.c.b16 %v1015, %v1014
      %v1053 = vpack.c.b16 %v1017, %v1016
      %v1054 = vpack.c.b16 %v1019, %v1018
      %v1055 = vpack.c.b16 %v1021, %v1020
      %v1056 = vpack.c.b16 %v1023, %v1022
      %v1057 = vpack.c.b16 %v1025, %v1024
      %1090 = vmatprep.subr.bf16.mxu0 0
      %1091 = vmatpush1.bf16.msra.mxu0 %v1026
      %1092 = vmatprep.subr.bf16.mxu0 0
      %1093 = vmatpush1.bf16.msra.mxu0 %v1027
      %1094 = vmatprep.subr.bf16.mxu0 0
      %1095 = vmatpush1.bf16.msra.mxu0 %v1028
      %1096 = vmatprep.subr.bf16.mxu0 0
      %1097 = vmatpush1.bf16.msra.mxu0 %v1029
      %1098 = vmatprep.subr.bf16.mxu0 0
      %1099 = vmatpush1.bf16.msra.mxu0 %v1030
      %1100 = vmatprep.subr.bf16.mxu0 0
      %1101 = vmatpush1.bf16.msra.mxu0 %v1031
      %1102 = vmatprep.subr.bf16.mxu0 0
      %1103 = vmatpush1.bf16.msra.mxu0 %v1032
      %1104 = vmatprep.subr.bf16.mxu0 0
      %1105 = vmatpush1.bf16.msra.mxu0 %v1033
      %1106 = vmatprep.subr.bf16.mxu0 0
      %1107 = vmatpush1.bf16.msra.mxu0 %v1034
      %1108 = vmatprep.subr.bf16.mxu0 0
      %1109 = vmatpush1.bf16.msra.mxu0 %v1035
      %1110 = vmatprep.subr.bf16.mxu0 0
      %1111 = vmatpush1.bf16.msra.mxu0 %v1036
      %1112 = vmatprep.subr.bf16.mxu0 0
      %1113 = vmatpush1.bf16.msra.mxu0 %v1037
      %1114 = vmatprep.subr.bf16.mxu0 0
      %1115 = vmatpush1.bf16.msra.mxu0 %v1038
      %1116 = vmatprep.subr.bf16.mxu0 0
      %1117 = vmatpush1.bf16.msra.mxu0 %v1039
      %1118 = vmatprep.subr.bf16.mxu0 0
      %1119 = vmatpush1.bf16.msra.mxu0 %v1040
      %1120 = vmatprep.subr.bf16.mxu0 0
      %1121 = vmatpush1.bf16.msra.mxu0 %v1041
      %1122 = vmatprep.mubr.bf16.mxu0 %v779
      %1123 = vmatmul.mubr.bf16.gmra.mrb[0].mxu0 %v778
      %v1124 = vpop.f32.mrb[0].mxu0
      %v1125 = vadd.f32 %v596, %v1124
      %v1126 = vpop.f32.mrb[0].mxu0
      %v1127 = vpop.f32.mrb[0].mxu0
      %v1128 = vadd.f32 %v596, %v1127
      %v1129 = vpop.f32.mrb[0].mxu0
      %1130 = vmatprep.mubr.bf16.mxu0 %v783
      %1131 = vmatmul.mubr.bf16.gmra.mrb[0].mxu0 %v782
      %v1132 = vpop.f32.mrb[0].mxu0
      %v1133 = vadd.f32 %v596, %v1132
      %v1134 = vpop.f32.mrb[0].mxu0
      %v1135 = vpop.f32.mrb[0].mxu0
      %v1136 = vadd.f32 %v596, %v1135
      %v1137 = vpop.f32.mrb[0].mxu0
      %1138 = vmatprep.mubr.bf16.mxu0 %v787
      %1139 = vmatmul.mubr.bf16.gmra.mrb[0].mxu0 %v786
      %v1140 = vpop.f32.mrb[0].mxu0
      %v1141 = vadd.f32 %v596, %v1140
      %v1142 = vpop.f32.mrb[0].mxu0
      %v1143 = vpop.f32.mrb[0].mxu0
      %v1144 = vadd.f32 %v596, %v1143
      %v1145 = vpop.f32.mrb[0].mxu0
      %1146 = vmatprep.mubr.bf16.mxu0 %v791
      %1147 = vmatmul.mubr.bf16.gmra.mrb[0].mxu0 %v790
      %v1148 = vpop.f32.mrb[0].mxu0
      %v1149 = vadd.f32 %v596, %v1148
      %v1150 = vpop.f32.mrb[0].mxu0
      %v1151 = vpop.f32.mrb[0].mxu0
      %v1152 = vadd.f32 %v596, %v1151
      %v1153 = vpop.f32.mrb[0].mxu0
      %1154 = vmatprep.mubr.bf16.mxu0 %v795
      %1155 = vmatmul.mubr.bf16.gmra.mrb[0].mxu0 %v794
      %v1156 = vpop.f32.mrb[0].mxu0
      %v1157 = vadd.f32 %v596, %v1156
      %v1158 = vpop.f32.mrb[0].mxu0
      %v1159 = vpop.f32.mrb[0].mxu0
      %v1160 = vadd.f32 %v596, %v1159
      %v1161 = vpop.f32.mrb[0].mxu0
      %1162 = vmatprep.mubr.bf16.mxu0 %v799
      %1163 = vmatmul.mubr.bf16.gmra.mrb[0].mxu0 %v798
      %v1164 = vpop.f32.mrb[0].mxu0
      %v1165 = vadd.f32 %v596, %v1164
      %v1166 = vpop.f32.mrb[0].mxu0
      %v1167 = vpop.f32.mrb[0].mxu0
      %v1168 = vadd.f32 %v596, %v1167
      %v1169 = vpop.f32.mrb[0].mxu0
      %1170 = vmatprep.mubr.bf16.mxu0 %v803
      %1171 = vmatmul.mubr.bf16.gmra.mrb[0].mxu0 %v802
      %v1172 = vpop.f32.mrb[0].mxu0
      %v1173 = vadd.f32 %v596, %v1172
      %v1174 = vpop.f32.mrb[0].mxu0
      %v1175 = vpop.f32.mrb[0].mxu0
      %v1176 = vadd.f32 %v596, %v1175
      %v1177 = vpop.f32.mrb[0].mxu0
      %1178 = vmatprep.mubr.bf16.mxu0 %v807
      %1179 = vmatmul.mubr.bf16.gmra.mrb[0].mxu0 %v806
      %v1180 = vpop.f32.mrb[0].mxu0
      %v1181 = vadd.f32 %v596, %v1180
      %v1182 = vpop.f32.mrb[0].mxu0
      %v1183 = vpop.f32.mrb[0].mxu0
      %v1184 = vadd.f32 %v596, %v1183
      %v1185 = vpop.f32.mrb[0].mxu0
      %1186 = vmatprep.mubr.bf16.mxu0 %v811
      %1187 = vmatmul.mubr.bf16.gmra.mrb[0].mxu0 %v810
      %v1188 = vpop.f32.mrb[0].mxu0
      %v1189 = vadd.f32 %v596, %v1188
      %v1190 = vpop.f32.mrb[0].mxu0
      %v1191 = vpop.f32.mrb[0].mxu0
      %v1192 = vadd.f32 %v596, %v1191
      %v1193 = vpop.f32.mrb[0].mxu0
      %1194 = vmatprep.mubr.bf16.mxu0 %v815
      %1195 = vmatmul.mubr.bf16.gmra.mrb[0].mxu0 %v814
      %v1196 = vpop.f32.mrb[0].mxu0
      %v1197 = vadd.f32 %v596, %v1196
      %v1198 = vpop.f32.mrb[0].mxu0
      %v1199 = vpop.f32.mrb[0].mxu0
      %v1200 = vadd.f32 %v596, %v1199
      %v1201 = vpop.f32.mrb[0].mxu0
      %1202 = vmatprep.mubr.bf16.mxu0 %v819
      %1203 = vmatmul.mubr.bf16.gmra.mrb[0].mxu0 %v818
      %v1204 = vpop.f32.mrb[0].mxu0
      %v1205 = vadd.f32 %v596, %v1204
      %v1206 = vpop.f32.mrb[0].mxu0
      %v1207 = vpop.f32.mrb[0].mxu0
      %v1208 = vadd.f32 %v596, %v1207
      %v1209 = vpop.f32.mrb[0].mxu0
      %1210 = vmatprep.mubr.bf16.mxu0 %v823
      %1211 = vmatmul.mubr.bf16.gmra.mrb[0].mxu0 %v822
      %v1212 = vpop.f32.mrb[0].mxu0
      %v1213 = vadd.f32 %v596, %v1212
      %v1214 = vpop.f32.mrb[0].mxu0
      %v1215 = vpop.f32.mrb[0].mxu0
      %v1216 = vadd.f32 %v596, %v1215
      %v1217 = vpop.f32.mrb[0].mxu0
      %1218 = vmatprep.mubr.bf16.mxu0 %v827
      %1219 = vmatmul.mubr.bf16.gmra.mrb[0].mxu0 %v826
      %v1220 = vpop.f32.mrb[0].mxu0
      %v1221 = vadd.f32 %v596, %v1220
      %v1222 = vpop.f32.mrb[0].mxu0
      %v1223 = vpop.f32.mrb[0].mxu0
      %v1224 = vadd.f32 %v596, %v1223
      %v1225 = vpop.f32.mrb[0].mxu0
      %1226 = vmatprep.mubr.bf16.mxu0 %v831
      %1227 = vmatmul.mubr.bf16.gmra.mrb[0].mxu0 %v830
      %v1228 = vpop.f32.mrb[0].mxu0
      %v1229 = vadd.f32 %v596, %v1228
      %v1230 = vpop.f32.mrb[0].mxu0
      %v1231 = vpop.f32.mrb[0].mxu0
      %v1232 = vadd.f32 %v596, %v1231
      %v1233 = vpop.f32.mrb[0].mxu0
      %1234 = vmatprep.mubr.bf16.mxu0 %v835
      %1235 = vmatmul.mubr.bf16.gmra.mrb[0].mxu0 %v834
      %v1236 = vpop.f32.mrb[0].mxu0
      %v1237 = vadd.f32 %v596, %v1236
      %v1238 = vpop.f32.mrb[0].mxu0
      %v1239 = vpop.f32.mrb[0].mxu0
      %v1240 = vadd.f32 %v596, %v1239
      %v1241 = vpop.f32.mrb[0].mxu0
      %1242 = vdwg.mxu0
      %1243 = vmatprep.subr.bf16.mxu0 0
      %1244 = vmatpush1.bf16.msra.mxu0 %v1042
      %1245 = vmatprep.subr.bf16.mxu0 0
      %1246 = vmatpush1.bf16.msra.mxu0 %v1043
      %1247 = vmatprep.subr.bf16.mxu0 0
      %1248 = vmatpush1.bf16.msra.mxu0 %v1044
      %1249 = vmatprep.subr.bf16.mxu0 0
      %1250 = vmatpush1.bf16.msra.mxu0 %v1045
      %1251 = vmatprep.subr.bf16.mxu0 0
      %1252 = vmatpush1.bf16.msra.mxu0 %v1046
      %1253 = vmatprep.subr.bf16.mxu0 0
      %1254 = vmatpush1.bf16.msra.mxu0 %v1047
      %1255 = vmatprep.subr.bf16.mxu0 0
      %1256 = vmatpush1.bf16.msra.mxu0 %v1048
      %1257 = vmatprep.subr.bf16.mxu0 0
      %1258 = vmatpush1.bf16.msra.mxu0 %v1049
      %1259 = vmatprep.subr.bf16.mxu0 0
      %1260 = vmatpush1.bf16.msra.mxu0 %v1050
      %1261 = vmatprep.subr.bf16.mxu0 0
      %1262 = vmatpush1.bf16.msra.mxu0 %v1051
      %1263 = vmatprep.subr.bf16.mxu0 0
      %1264 = vmatpush1.bf16.msra.mxu0 %v1052
      %1265 = vmatprep.subr.bf16.mxu0 0
      %1266 = vmatpush1.bf16.msra.mxu0 %v1053
      %1267 = vmatprep.subr.bf16.mxu0 0
      %1268 = vmatpush1.bf16.msra.mxu0 %v1054
      %1269 = vmatprep.subr.bf16.mxu0 0
      %1270 = vmatpush1.bf16.msra.mxu0 %v1055
      %1271 = vmatprep.subr.bf16.mxu0 0
      %1272 = vmatpush1.bf16.msra.mxu0 %v1056
      %1273 = vmatprep.subr.bf16.mxu0 0
      %1274 = vmatpush1.bf16.msra.mxu0 %v1057
      %1275 = vmatprep.mubr.bf16.mxu0 %v781
      %1276 = vmatmul.mubr.bf16.gmra.mrb[0].mxu0 %v780
      %v1277 = vpop.f32.mrb[0].mxu0
      %v1278 = vadd.f32 %v1125, %v1277
      %v1279 = vpop.f32.mrb[0].mxu0
      %v1280 = vpop.f32.mrb[0].mxu0
      %v1281 = vadd.f32 %v1128, %v1280
      %v1282 = vpop.f32.mrb[0].mxu0
      %1283 = vmatprep.mubr.bf16.mxu0 %v785
      %1284 = vmatmul.mubr.bf16.gmra.mrb[0].mxu0 %v784
      %v1285 = vpop.f32.mrb[0].mxu0
      %v1286 = vadd.f32 %v1133, %v1285
      %v1287 = vpop.f32.mrb[0].mxu0
      %v1288 = vpop.f32.mrb[0].mxu0
      %v1289 = vadd.f32 %v1136, %v1288
      %v1290 = vpop.f32.mrb[0].mxu0
      %1291 = vmatprep.mubr.bf16.mxu0 %v789
      %1292 = vmatmul.mubr.bf16.gmra.mrb[0].mxu0 %v788
      %v1293 = vpop.f32.mrb[0].mxu0
      %v1294 = vadd.f32 %v1141, %v1293
      %v1295 = vpop.f32.mrb[0].mxu0
      %v1296 = vpop.f32.mrb[0].mxu0
      %v1297 = vadd.f32 %v1144, %v1296
      %v1298 = vpop.f32.mrb[0].mxu0
      %1299 = vmatprep.mubr.bf16.mxu0 %v793
      %1300 = vmatmul.mubr.bf16.gmra.mrb[0].mxu0 %v792
      %v1301 = vpop.f32.mrb[0].mxu0
      %v1302 = vadd.f32 %v1149, %v1301
      %v1303 = vpop.f32.mrb[0].mxu0
      %v1304 = vpop.f32.mrb[0].mxu0
      %v1305 = vadd.f32 %v1152, %v1304
      %v1306 = vpop.f32.mrb[0].mxu0
      %1307 = vmatprep.mubr.bf16.mxu0 %v797
      %1308 = vmatmul.mubr.bf16.gmra.mrb[0].mxu0 %v796
      %v1309 = vpop.f32.mrb[0].mxu0
      %v1310 = vadd.f32 %v1157, %v1309
      %v1311 = vpop.f32.mrb[0].mxu0
      %v1312 = vpop.f32.mrb[0].mxu0
      %v1313 = vadd.f32 %v1160, %v1312
      %v1314 = vpop.f32.mrb[0].mxu0
      %1315 = vmatprep.mubr.bf16.mxu0 %v801
      %1316 = vmatmul.mubr.bf16.gmra.mrb[0].mxu0 %v800
      %v1317 = vpop.f32.mrb[0].mxu0
      %v1318 = vadd.f32 %v1165, %v1317
      %v1319 = vpop.f32.mrb[0].mxu0
      %v1320 = vpop.f32.mrb[0].mxu0
      %v1321 = vadd.f32 %v1168, %v1320
      %v1322 = vpop.f32.mrb[0].mxu0
      %1323 = vmatprep.mubr.bf16.mxu0 %v805
      %1324 = vmatmul.mubr.bf16.gmra.mrb[0].mxu0 %v804
      %v1325 = vpop.f32.mrb[0].mxu0
      %v1326 = vadd.f32 %v1173, %v1325
      %v1327 = vpop.f32.mrb[0].mxu0
      %v1328 = vpop.f32.mrb[0].mxu0
      %v1329 = vadd.f32 %v1176, %v1328
      %v1330 = vpop.f32.mrb[0].mxu0
      %1331 = vmatprep.mubr.bf16.mxu0 %v809
      %1332 = vmatmul.mubr.bf16.gmra.mrb[0].mxu0 %v808
      %v1333 = vpop.f32.mrb[0].mxu0
      %v1334 = vadd.f32 %v1181, %v1333
      %v1335 = vpop.f32.mrb[0].mxu0
      %v1336 = vpop.f32.mrb[0].mxu0
      %v1337 = vadd.f32 %v1184, %v1336
      %v1338 = vpop.f32.mrb[0].mxu0
      %1339 = vmatprep.mubr.bf16.mxu0 %v813
      %1340 = vmatmul.mubr.bf16.gmra.mrb[0].mxu0 %v812
      %v1341 = vpop.f32.mrb[0].mxu0
      %v1342 = vadd.f32 %v1189, %v1341
      %v1343 = vpop.f32.mrb[0].mxu0
      %v1344 = vpop.f32.mrb[0].mxu0
      %v1345 = vadd.f32 %v1192, %v1344
      %v1346 = vpop.f32.mrb[0].mxu0
      %1347 = vmatprep.mubr.bf16.mxu0 %v817
      %1348 = vmatmul.mubr.bf16.gmra.mrb[0].mxu0 %v816
      %v1349 = vpop.f32.mrb[0].mxu0
      %v1350 = vadd.f32 %v1197, %v1349
      %v1351 = vpop.f32.mrb[0].mxu0
      %v1352 = vpop.f32.mrb[0].mxu0
      %v1353 = vadd.f32 %v1200, %v1352
      %v1354 = vpop.f32.mrb[0].mxu0
      %1355 = vmatprep.mubr.bf16.mxu0 %v821
      %1356 = vmatmul.mubr.bf16.gmra.mrb[0].mxu0 %v820
      %v1357 = vpop.f32.mrb[0].mxu0
      %v1358 = vadd.f32 %v1205, %v1357
      %v1359 = vpop.f32.mrb[0].mxu0
      %v1360 = vpop.f32.mrb[0].mxu0
      %v1361 = vadd.f32 %v1208, %v1360
      %v1362 = vpop.f32.mrb[0].mxu0
      %1363 = vmatprep.mubr.bf16.mxu0 %v825
      %1364 = vmatmul.mubr.bf16.gmra.mrb[0].mxu0 %v824
      %v1365 = vpop.f32.mrb[0].mxu0
      %v1366 = vadd.f32 %v1213, %v1365
      %v1367 = vpop.f32.mrb[0].mxu0
      %v1368 = vpop.f32.mrb[0].mxu0
      %v1369 = vadd.f32 %v1216, %v1368
      %v1370 = vpop.f32.mrb[0].mxu0
      %1371 = vmatprep.mubr.bf16.mxu0 %v829
      %1372 = vmatmul.mubr.bf16.gmra.mrb[0].mxu0 %v828
      %v1373 = vpop.f32.mrb[0].mxu0
      %v1374 = vadd.f32 %v1221, %v1373
      %v1375 = vpop.f32.mrb[0].mxu0
      %v1376 = vpop.f32.mrb[0].mxu0
      %v1377 = vadd.f32 %v1224, %v1376
      %v1378 = vpop.f32.mrb[0].mxu0
      %1379 = vmatprep.mubr.bf16.mxu0 %v833
      %1380 = vmatmul.mubr.bf16.gmra.mrb[0].mxu0 %v832
      %v1381 = vpop.f32.mrb[0].mxu0
      %v1382 = vadd.f32 %v1229, %v1381
      %v1383 = vpop.f32.mrb[0].mxu0
      %v1384 = vpop.f32.mrb[0].mxu0
      %v1385 = vadd.f32 %v1232, %v1384
      %v1386 = vpop.f32.mrb[0].mxu0
      %1387 = vmatprep.mubr.bf16.mxu0 %v837
      %1388 = vmatmul.mubr.bf16.gmra.mrb[0].mxu0 %v836
      %v1389 = vpop.f32.mrb[0].mxu0
      %v1390 = vadd.f32 %v1237, %v1389
      %v1391 = vpop.f32.mrb[0].mxu0
      %v1392 = vpop.f32.mrb[0].mxu0
      %v1393 = vadd.f32 %v1240, %v1392
      %v1394 = vpop.f32.mrb[0].mxu0
      %1395 = vdwg.mxu0
      %v1396 = vmax.f32 %v1278, 0.0
      %v1397 = vmax.f32 %v1281, 0.0
      %v1398 = vmax.f32 %v1286, 0.0
      %v1399 = vmax.f32 %v1289, 0.0
      %v1400 = vmax.f32 %v1294, 0.0
      %v1401 = vmax.f32 %v1297, 0.0
      %v1402 = vmax.f32 %v1302, 0.0
      %v1403 = vmax.f32 %v1305, 0.0
      %v1404 = vmax.f32 %v1310, 0.0
      %v1405 = vmax.f32 %v1313, 0.0
      %v1406 = vmax.f32 %v1318, 0.0
      %v1407 = vmax.f32 %v1321, 0.0
      %v1408 = vmax.f32 %v1326, 0.0
      %v1409 = vmax.f32 %v1329, 0.0
      %v1410 = vmax.f32 %v1334, 0.0
      %v1411 = vmax.f32 %v1337, 0.0
      %v1412 = vmax.f32 %v1342, 0.0
      %v1413 = vmax.f32 %v1345, 0.0
      %v1414 = vmax.f32 %v1350, 0.0
      %v1415 = vmax.f32 %v1353, 0.0
      %v1416 = vmax.f32 %v1358, 0.0
      %v1417 = vmax.f32 %v1361, 0.0
      %v1418 = vmax.f32 %v1366, 0.0
      %v1419 = vmax.f32 %v1369, 0.0
      %v1420 = vmax.f32 %v1374, 0.0
      %v1421 = vmax.f32 %v1377, 0.0
      %v1422 = vmax.f32 %v1382, 0.0
      %v1423 = vmax.f32 %v1385, 0.0
      %v1424 = vmax.f32 %v1390, 0.0
      %v1425 = vmax.f32 %v1393, 0.0
      %v1426 = vpack.c.bf16 %v1397, %v1396
      %v1427 = vpack.c.bf16 %v1399, %v1398
      %v1428 = vpack.c.bf16 %v1401, %v1400
      %v1429 = vpack.c.bf16 %v1403, %v1402
      %v1430 = vpack.c.bf16 %v1405, %v1404
      %v1431 = vpack.c.bf16 %v1407, %v1406
      %v1432 = vpack.c.bf16 %v1409, %v1408
      %v1433 = vpack.c.bf16 %v1411, %v1410
      %v1434 = vpack.c.bf16 %v1413, %v1412
      %v1435 = vpack.c.bf16 %v1415, %v1414
      %v1436 = vpack.c.bf16 %v1417, %v1416
      %v1437 = vpack.c.bf16 %v1419, %v1418
      %v1438 = vpack.c.bf16 %v1421, %v1420
      %v1439 = vpack.c.bf16 %v1423, %v1422
      %v1440 = vpack.c.bf16 %v1425, %v1424
      %1441 = vst [vmem:[#allocation2] sm:$0xff] %v1426
      %1442 = vst [vmem:[#allocation2 + $0x8] sm:$0xff] %v1427
      %1443 = vst [vmem:[#allocation2 + $0x10] sm:$0xff] %v1428
      %1444 = vst [vmem:[#allocation2 + $0x18] sm:$0xff] %v1429
      %1445 = vst [vmem:[#allocation2 + $0x20] sm:$0xff] %v1430
      %1446 = vst [vmem:[#allocation2 + $0x28] sm:$0xff] %v1431
      %1447 = vst [vmem:[#allocation2 + $0x30] sm:$0xff] %v1432
      %1448 = vst [vmem:[#allocation2 + $0x38] sm:$0xff] %v1433
      %1449 = vst [vmem:[#allocation2 + $0x40] sm:$0xff] %v1434
      %1450 = vst [vmem:[#allocation2 + $0x48] sm:$0xff] %v1435
      %1451 = vst [vmem:[#allocation2 + $0x50] sm:$0xff] %v1436
      %1452 = vst [vmem:[#allocation2 + $0x58] sm:$0xff] %v1437
      %1453 = vst [vmem:[#allocation2 + $0x60] sm:$0xff] %v1438
      %1454 = vst [vmem:[#allocation2 + $0x68] sm:$0xff] %v1439
      %1455 = vst [vmem:[#allocation2 + $0x70] sm:$0xff] %v1440
      %v1456 = vld [vmem:[#allocation2] sm:$0xff]
      %v1457 = vld [vmem:[#allocation2 + $0x8] sm:$0xff]
      %v1458 = vld [vmem:[#allocation2 + $0x10] sm:$0xff]
      %v1459 = vld [vmem:[#allocation2 + $0x18] sm:$0xff]
      %v1460 = vld [vmem:[#allocation2 + $0x20] sm:$0x7f]
      %v1461 = vld [vmem:[%s2] sm:$0xf]
      %v1462 = vld [vmem:[%s2 + $0x4] sm:$0xf]
      %v1463 = vld [vmem:[%s2 + $0x8] sm:$0xf]
      %v1464 = vld [vmem:[%s2 + $0xc] sm:$0xf]
      %v1465 = vld [vmem:[%s2 + $0x10] sm:$0xf]
      %v1466 = vld [vmem:[%s2 + $0x14] sm:$0xf]
      %v1467 = vld [vmem:[%s2 + $0x18] sm:$0xf]
      %v1468 = vld [vmem:[%s2 + $0x1c] sm:$0xf]
      %v1469 = vld [vmem:[%s2 + $0x20] sm:$0xf]
      %v1470 = vld [vmem:[%s2 + $0x24] sm:$0xf]
      %v1471 = vld [vmem:[%s2 + $0x28] sm:$0xf]
      %v1472 = vld [vmem:[%s2 + $0x2c] sm:$0xf]
      %v1473 = vld [vmem:[%s2 + $0x30] sm:$0xf]
      %v1474 = vld [vmem:[%s2 + $0x34] sm:$0xf]
      %v1475 = vld [vmem:[%s2 + $0x38] sm:$0xf]
      %v1476 = vld [vmem:[%s2 + $0x3c] sm:$0xf]
      %v1477 = vld [vmem:[#allocation2 + $0x20] sm:$0xff]
      %v1478 = vld [vmem:[%s3] sm:$0xf]
      %v1479 = vld [vmem:[%s3 + $0x4] sm:$0xf]
      %v1480 = vld [vmem:[%s3 + $0x8] sm:$0xf]
      %v1481 = vld [vmem:[%s3 + $0xc] sm:$0xf]
      %vm1482 = vsmask.f32 7424
      %v1484 = vshrl.u32 %v1456, 16
      %v1486 = vshll.u32 %v1456, 16
      %v1488 = vrot.slane %v1486, 1
      %v1489 = vor.u32 %v1484, %v1488
      %v1491 = vshll.u32 %v1457, 16
      %v1493 = vrot.slane %v1491, 1
      %v1494 = vsel %vm1482, %v1489, %v1493
      %v1495 = vshrl.u32 %v1457, 16
      %v1497 = vor.u32 %v1495, %v1493
      %v1499 = vshll.u32 %v1458, 16
      %v1501 = vrot.slane %v1499, 1
      %v1502 = vsel %vm1482, %v1497, %v1501
      %v1503 = vshrl.u32 %v1458, 16
      %v1505 = vor.u32 %v1503, %v1501
      %v1507 = vshll.u32 %v1459, 16
      %v1509 = vrot.slane %v1507, 1
      %v1510 = vsel %vm1482, %v1505, %v1509
      %v1511 = vshrl.u32 %v1459, 16
      %v1513 = vor.u32 %v1511, %v1509
      %v1515 = vshll.u32 %v1477, 16
      %v1517 = vrot.slane %v1515, 1
      %v1518 = vsel %vm1482, %v1513, %v1517
      %v1519 = vshrl.u32 %v1477, 16
      %v1521 = vor.u32 %v1519, %v1517
      %v1526 = vunpack.c.l.b16 %v1478
      %v1527 = vunpack.c.l.b16 %v1479
      %v1528 = vunpack.c.l.b16 %v1480
      %v1529 = vunpack.c.l.b16 %v1481
      %v1530 = vpack.c.b16 %v1527, %v1526
      %v1531 = vpack.c.b16 %v1529, %v1528
      %vm1534 = vcmask 261120
      %v1536 = vsel %vm1534, %v1494, 0
      %v1539 = vsel %vm1534, %v1502, 0
      %v1542 = vsel %vm1534, %v1510, 0
      %v1545 = vsel %vm1534, %v1518, 0
      %v1548 = vsel %vm1534, %v1521, 0
      %1550 = vmatprep.subr.bf16.mxu0 0
      %1551 = vmatpush1.bf16.msra.mxu0 %v1530
      %1552 = vmatprep.subr.bf16.mxu0 0
      %1553 = vmatpush1.bf16.msra.mxu0 %v1531
      %1554 = vmatprep.subr.bf16.mxu0 0
      %1555 = vmatpush1.bf16.msra.mxu0 0
      %1556 = vmatprep.subr.bf16.mxu0 0
      %1557 = vmatpush1.bf16.msra.mxu0 0
      %1558 = vmatprep.subr.bf16.mxu0 0
      %1559 = vmatpush1.bf16.msra.mxu0 0
      %1560 = vmatprep.subr.bf16.mxu0 0
      %1561 = vmatpush1.bf16.msra.mxu0 0
      %1562 = vmatprep.subr.bf16.mxu0 0
      %1563 = vmatpush1.bf16.msra.mxu0 0
      %1564 = vmatprep.subr.bf16.mxu0 0
      %1565 = vmatpush1.bf16.msra.mxu0 0
      %1566 = vmatprep.subr.bf16.mxu0 0
      %1567 = vmatpush1.bf16.msra.mxu0 0
      %1568 = vmatprep.subr.bf16.mxu0 0
      %1569 = vmatpush1.bf16.msra.mxu0 0
      %1570 = vmatprep.subr.bf16.mxu0 0
      %1571 = vmatpush1.bf16.msra.mxu0 0
      %1572 = vmatprep.subr.bf16.mxu0 0
      %1573 = vmatpush1.bf16.msra.mxu0 0
      %1574 = vmatprep.subr.bf16.mxu0 0
      %1575 = vmatpush1.bf16.msra.mxu0 0
      %1576 = vmatprep.subr.bf16.mxu0 0
      %1577 = vmatpush1.bf16.msra.mxu0 0
      %1578 = vmatprep.subr.bf16.mxu0 0
      %1579 = vmatpush1.bf16.msra.mxu0 0
      %1580 = vmatprep.subr.bf16.mxu0 0
      %1581 = vmatpush1.bf16.msra.mxu0 0
      %1582 = vmatprep.mubr.bf16.mxu0 0
      %1583 = vmatmul.mubr.bf16.gmra.mrb[0].mxu0 %v1536
      %v1584 = vpop.f32.mrb[0].mxu0
      %v1585 = vadd.f32 0.0, %v1584
      %v1586 = vpop.f32.mrb[0].mxu0
      %v1587 = vpop.f32.mrb[0].mxu0
      %v1588 = vadd.f32 0.0, %v1587
      %v1589 = vpop.f32.mrb[0].mxu0
      %1590 = vmatprep.mubr.bf16.mxu0 0
      %1591 = vmatmul.mubr.bf16.gmra.mrb[0].mxu0 %v1539
      %v1592 = vpop.f32.mrb[0].mxu0
      %v1593 = vadd.f32 0.0, %v1592
      %v1594 = vpop.f32.mrb[0].mxu0
      %v1595 = vpop.f32.mrb[0].mxu0
      %v1596 = vadd.f32 0.0, %v1595
      %v1597 = vpop.f32.mrb[0].mxu0
      %1598 = vmatprep.mubr.bf16.mxu0 0
      %1599 = vmatmul.mubr.bf16.gmra.mrb[0].mxu0 %v1542
      %v1600 = vpop.f32.mrb[0].mxu0
      %v1601 = vadd.f32 0.0, %v1600
      %v1602 = vpop.f32.mrb[0].mxu0
      %v1603 = vpop.f32.mrb[0].mxu0
      %v1604 = vadd.f32 0.0, %v1603
      %v1605 = vpop.f32.mrb[0].mxu0
      %1606 = vmatprep.mubr.bf16.mxu0 0
      %1607 = vmatmul.mubr.bf16.gmra.mrb[0].mxu0 %v1545
      %v1608 = vpop.f32.mrb[0].mxu0
      %v1609 = vadd.f32 0.0, %v1608
      %v1610 = vpop.f32.mrb[0].mxu0
      %v1611 = vpop.f32.mrb[0].mxu0
      %v1612 = vadd.f32 0.0, %v1611
      %v1613 = vpop.f32.mrb[0].mxu0
      %1614 = vmatprep.mubr.bf16.mxu0 0
      %1615 = vmatmul.mubr.bf16.gmra.mrb[0].mxu0 %v1548
      %v1616 = vpop.f32.mrb[0].mxu0
      %v1617 = vadd.f32 0.0, %v1616
      %v1618 = vpop.f32.mrb[0].mxu0
      %v1619 = vpop.f32.mrb[0].mxu0
      %v1620 = vadd.f32 0.0, %v1619
      %v1621 = vpop.f32.mrb[0].mxu0
      %1622 = vdwg.mxu0
      %v1639 = vunpack.c.l.b16 %v1461
      %v1640 = vunpack.c.l.b16 %v1462
      %v1641 = vunpack.c.l.b16 %v1463
      %v1642 = vunpack.c.l.b16 %v1464
      %v1643 = vunpack.c.l.b16 %v1465
      %v1644 = vunpack.c.l.b16 %v1466
      %v1645 = vunpack.c.l.b16 %v1467
      %v1646 = vunpack.c.l.b16 %v1468
      %v1647 = vunpack.c.l.b16 %v1469
      %v1648 = vunpack.c.l.b16 %v1470
      %v1649 = vunpack.c.l.b16 %v1471
      %v1650 = vunpack.c.l.b16 %v1472
      %v1651 = vunpack.c.l.b16 %v1473
      %v1652 = vunpack.c.l.b16 %v1474
      %v1653 = vunpack.c.l.b16 %v1475
      %v1654 = vunpack.c.l.b16 %v1476
      %v1655 = vpack.c.b16 %v1640, %v1639
      %v1656 = vpack.c.b16 %v1642, %v1641
      %v1657 = vpack.c.b16 %v1644, %v1643
      %v1658 = vpack.c.b16 %v1646, %v1645
      %v1659 = vpack.c.b16 %v1648, %v1647
      %v1660 = vpack.c.b16 %v1650, %v1649
      %v1661 = vpack.c.b16 %v1652, %v1651
      %v1662 = vpack.c.b16 %v1654, %v1653
      %1671 = vmatprep.subr.bf16.mxu0 0
      %1672 = vmatpush1.bf16.msra.mxu0 %v1655
      %1673 = vmatprep.subr.bf16.mxu0 0
      %1674 = vmatpush1.bf16.msra.mxu0 %v1656
      %1675 = vmatprep.subr.bf16.mxu0 0
      %1676 = vmatpush1.bf16.msra.mxu0 %v1657
      %1677 = vmatprep.subr.bf16.mxu0 0
      %1678 = vmatpush1.bf16.msra.mxu0 %v1658
      %1679 = vmatprep.subr.bf16.mxu0 0
      %1680 = vmatpush1.bf16.msra.mxu0 %v1659
      %1681 = vmatprep.subr.bf16.mxu0 0
      %1682 = vmatpush1.bf16.msra.mxu0 %v1660
      %1683 = vmatprep.subr.bf16.mxu0 0
      %1684 = vmatpush1.bf16.msra.mxu0 %v1661
      %1685 = vmatprep.subr.bf16.mxu0 0
      %1686 = vmatpush1.bf16.msra.mxu0 %v1662
      %1687 = vmatprep.subr.bf16.mxu0 0
      %1688 = vmatpush1.bf16.msra.mxu0 0
      %1689 = vmatprep.subr.bf16.mxu0 0
      %1690 = vmatpush1.bf16.msra.mxu0 0
      %1691 = vmatprep.subr.bf16.mxu0 0
      %1692 = vmatpush1.bf16.msra.mxu0 0
      %1693 = vmatprep.subr.bf16.mxu0 0
      %1694 = vmatpush1.bf16.msra.mxu0 0
      %1695 = vmatprep.subr.bf16.mxu0 0
      %1696 = vmatpush1.bf16.msra.mxu0 0
      %1697 = vmatprep.subr.bf16.mxu0 0
      %1698 = vmatpush1.bf16.msra.mxu0 0
      %1699 = vmatprep.subr.bf16.mxu0 0
      %1700 = vmatpush1.bf16.msra.mxu0 0
      %1701 = vmatprep.subr.bf16.mxu0 0
      %1702 = vmatpush1.bf16.msra.mxu0 0
      %1703 = vmatprep.mubr.bf16.mxu0 0
      %1704 = vmatmul.mubr.bf16.gmra.mrb[0].mxu0 %v1456
      %v1705 = vpop.f32.mrb[0].mxu0
      %v1706 = vadd.f32 %v1585, %v1705
      %v1707 = vpop.f32.mrb[0].mxu0
      %v1708 = vpop.f32.mrb[0].mxu0
      %v1709 = vadd.f32 %v1588, %v1708
      %v1710 = vpop.f32.mrb[0].mxu0
      %1711 = vmatprep.mubr.bf16.mxu0 0
      %1712 = vmatmul.mubr.bf16.gmra.mrb[0].mxu0 %v1457
      %v1713 = vpop.f32.mrb[0].mxu0
      %v1714 = vadd.f32 %v1593, %v1713
      %v1715 = vpop.f32.mrb[0].mxu0
      %v1716 = vpop.f32.mrb[0].mxu0
      %v1717 = vadd.f32 %v1596, %v1716
      %v1718 = vpop.f32.mrb[0].mxu0
      %1719 = vmatprep.mubr.bf16.mxu0 0
      %1720 = vmatmul.mubr.bf16.gmra.mrb[0].mxu0 %v1458
      %v1721 = vpop.f32.mrb[0].mxu0
      %v1722 = vadd.f32 %v1601, %v1721
      %v1723 = vpop.f32.mrb[0].mxu0
      %v1724 = vpop.f32.mrb[0].mxu0
      %v1725 = vadd.f32 %v1604, %v1724
      %v1726 = vpop.f32.mrb[0].mxu0
      %1727 = vmatprep.mubr.bf16.mxu0 0
      %1728 = vmatmul.mubr.bf16.gmra.mrb[0].mxu0 %v1459
      %v1729 = vpop.f32.mrb[0].mxu0
      %v1730 = vadd.f32 %v1609, %v1729
      %v1731 = vpop.f32.mrb[0].mxu0
      %v1732 = vpop.f32.mrb[0].mxu0
      %v1733 = vadd.f32 %v1612, %v1732
      %v1734 = vpop.f32.mrb[0].mxu0
      %1735 = vmatprep.mubr.bf16.mxu0 0
      %1736 = vmatmul.mubr.bf16.gmra.mrb[0].mxu0 %v1460
      %v1737 = vpop.f32.mrb[0].mxu0
      %v1738 = vadd.f32 %v1617, %v1737
      %v1739 = vpop.f32.mrb[0].mxu0
      %v1740 = vpop.f32.mrb[0].mxu0
      %v1741 = vadd.f32 %v1620, %v1740
      %v1742 = vpop.f32.mrb[0].mxu0
      %1743 = vdwg.mxu0
      %v1744 = vld [vmem:[%s10] sm:$0x1]
      %v1746 = vlaneseq
      %v1747 = vshrl.u32 %v1746, 7
      %v1748 = vsub.s32 0, %v1747
      %v1749 = vrot.slane %v1744, %v1748
      %v1751 = vadd.f32 %v1706, %v1749
      %v1752 = vadd.f32 %v1709, %v1749
      %v1753 = vadd.f32 %v1714, %v1749
      %v1754 = vadd.f32 %v1717, %v1749
      %v1755 = vadd.f32 %v1722, %v1749
      %v1756 = vadd.f32 %v1725, %v1749
      %v1757 = vadd.f32 %v1730, %v1749
      %v1758 = vadd.f32 %v1733, %v1749
      %v1759 = vadd.f32 %v1738, %v1749
      %v1760 = vadd.f32 %v1741, %v1749
      %v1761 = vmax.f32 %v1751, 0.0
      %v1762 = vmax.f32 %v1752, 0.0
      %v1763 = vmax.f32 %v1753, 0.0
      %v1764 = vmax.f32 %v1754, 0.0
      %v1765 = vmax.f32 %v1755, 0.0
      %v1766 = vmax.f32 %v1756, 0.0
      %v1767 = vmax.f32 %v1757, 0.0
      %v1768 = vmax.f32 %v1758, 0.0
      %v1769 = vmax.f32 %v1759, 0.0
      %v1770 = vmax.f32 %v1760, 0.0
      %vm1771 = vcmask 523264
      %1772 = vst.msk [vmem:[#allocation3] sm:$0xff] %vm1771, %v1761
      %1773 = vst.msk [vmem:[#allocation3 + $0x8] sm:$0xff] %vm1771, %v1762
      %1774 = vst.msk [vmem:[#allocation3 + $0x10] sm:$0xff] %vm1771, %v1763
      %1775 = vst.msk [vmem:[#allocation3 + $0x18] sm:$0xff] %vm1771, %v1764
      %1776 = vst.msk [vmem:[#allocation3 + $0x20] sm:$0xff] %vm1771, %v1765
      %1777 = vst.msk [vmem:[#allocation3 + $0x28] sm:$0xff] %vm1771, %v1766
      %1778 = vst.msk [vmem:[#allocation3 + $0x30] sm:$0xff] %vm1771, %v1767
      %1779 = vst.msk [vmem:[#allocation3 + $0x38] sm:$0xff] %vm1771, %v1768
      %1780 = vst.msk [vmem:[#allocation3 + $0x40] sm:$0xff] %vm1771, %v1769
      %vm1781 = vcmask 521216
      %1782 = vst.msk [vmem:[#allocation3 + $0x48] sm:$0x3f] %vm1781, %v1770
      %v1783 = vld [vmem:[#allocation3] ss:$4 sm:$0xff]
      %s1784 = scalar_lea.vmem [#allocation3], 32
      %v1785 = vld [vmem:[%s1784] ss:$4 sm:$0xff]
      %s1786 = scalar_lea.vmem [#allocation3], 64
      %v1787 = vld [vmem:[%s1786] ss:$4 sm:$0xf]
      %v1788 = vpack.c.bf16 %v1785, %v1783
      %v1789 = vpack.c.bf16 %v1787, %v1787
      %v1792 = vunpack.c.l.b16 %v1788
      %v1793 = vunpack.c.h.b16 %v1788
      %v1794 = vunpack.c.l.b16 %v1789
      %v1795 = vpack.c.b16 %v1792, %v1792
      %v1796 = vpack.c.b16 %v1793, %v1793
      %v1797 = vpack.c.b16 %v1794, %v1794
      %vm1801 = vcmask 519168
      %1802 = vst.msk [vmem:[#allocation4] sm:$0xf] %vm1801, %v1795
      %1803 = vst.msk [vmem:[#allocation4 + $0x8] sm:$0xf] %vm1801, %v1796
      %vm1804 = vcmask 517120
      %1805 = vst.msk [vmem:[#allocation4 + $0x10] sm:$0x3] %vm1804, %v1797
      %s1806 = scalar_lea.vmem [#allocation3], 1
      %v1807 = vld [vmem:[%s1806] ss:$4 sm:$0xff]
      %s1808 = scalar_lea.vmem [#allocation3], 33
      %v1809 = vld [vmem:[%s1808] ss:$4 sm:$0xff]
      %s1810 = scalar_lea.vmem [#allocation3], 65
      %v1811 = vld [vmem:[%s1810] ss:$4 sm:$0xf]
      %v1812 = vpack.c.bf16 %v1809, %v1807
      %v1813 = vpack.c.bf16 %v1811, %v1811
      %v1816 = vunpack.c.l.b16 %v1812
      %v1817 = vunpack.c.h.b16 %v1812
      %v1818 = vunpack.c.l.b16 %v1813
      %v1819 = vpack.c.b16 %v1816, %v1816
      %v1820 = vpack.c.b16 %v1817, %v1817
      %v1821 = vpack.c.b16 %v1818, %v1818
      %1822 = vrot.lane.b32.xlu0 %v1819, 64
      %v1823 = vpop.permute.xlu0 %1822
      %1824 = vrot.lane.b32.xlu0 %v1820, 64
      %v1825 = vpop.permute.xlu0 %1824
      %1826 = vrot.lane.b32.xlu0 %v1821, 64
      %v1827 = vpop.permute.xlu0 %1826
      %vm1831 = vcmask 1043968
      %1832 = vst.msk [vmem:[#allocation4] sm:$0xf] %vm1831, %v1823
      %1833 = vst.msk [vmem:[#allocation4 + $0x8] sm:$0xf] %vm1831, %v1825
      %vm1834 = vcmask 1041920
      %1835 = vst.msk [vmem:[#allocation4 + $0x10] sm:$0x3] %vm1834, %v1827
      %s1836 = scalar_lea.vmem [#allocation3], 2
      %v1837 = vld [vmem:[%s1836] ss:$4 sm:$0xff]
      %s1838 = scalar_lea.vmem [#allocation3], 34
      %v1839 = vld [vmem:[%s1838] ss:$4 sm:$0xff]
      %s1840 = scalar_lea.vmem [#allocation3], 66
      %v1841 = vld [vmem:[%s1840] ss:$4 sm:$0xf]
      %v1842 = vpack.c.bf16 %v1839, %v1837
      %v1843 = vpack.c.bf16 %v1841, %v1841
      %v1846 = vunpack.c.l.b16 %v1842
      %v1847 = vunpack.c.h.b16 %v1842
      %v1848 = vunpack.c.l.b16 %v1843
      %v1849 = vpack.c.b16 %v1846, %v1846
      %v1850 = vpack.c.b16 %v1847, %v1847
      %v1851 = vpack.c.b16 %v1848, %v1848
      %1855 = vst.msk [vmem:[#allocation4 + $0x4] sm:$0xf] %vm1801, %v1849
      %1856 = vst.msk [vmem:[#allocation4 + $0xc] sm:$0xf] %vm1801, %v1850
      %1857 = vst.msk [vmem:[#allocation4 + $0x14] sm:$0x3] %vm1804, %v1851
      %s1858 = scalar_lea.vmem [#allocation3], 3
      %v1859 = vld [vmem:[%s1858] ss:$4 sm:$0xff]
      %s1860 = scalar_lea.vmem [#allocation3], 35
      %v1861 = vld [vmem:[%s1860] ss:$4 sm:$0xff]
      %s1862 = scalar_lea.vmem [#allocation3], 67
      %v1863 = vld [vmem:[%s1862] ss:$4 sm:$0xf]
      %v1864 = vpack.c.bf16 %v1861, %v1859
      %v1865 = vpack.c.bf16 %v1863, %v1863
      %v1868 = vunpack.c.l.b16 %v1864
      %v1869 = vunpack.c.h.b16 %v1864
      %v1870 = vunpack.c.l.b16 %v1865
      %v1871 = vpack.c.b16 %v1868, %v1868
      %v1872 = vpack.c.b16 %v1869, %v1869
      %v1873 = vpack.c.b16 %v1870, %v1870
      %1874 = vrot.lane.b32.xlu0 %v1871, 64
      %v1875 = vpop.permute.xlu0 %1874
      %1876 = vrot.lane.b32.xlu0 %v1872, 64
      %v1877 = vpop.permute.xlu0 %1876
      %1878 = vrot.lane.b32.xlu0 %v1873, 64
      %v1879 = vpop.permute.xlu0 %1878
      %1883 = vst.msk [vmem:[#allocation4 + $0x4] sm:$0xf] %vm1831, %v1875
      %1884 = vst.msk [vmem:[#allocation4 + $0xc] sm:$0xf] %vm1831, %v1877
      %1885 = vst.msk [vmem:[#allocation4 + $0x14] sm:$0x3] %vm1834, %v1879
      %v1886 = vld [vmem:[#allocation4] sm:$0xff]
      %v1887 = vld [vmem:[#allocation4 + $0x8] sm:$0xff]
      %v1888 = vld [vmem:[#allocation4 + $0x10] sm:$0x33]
      %v1889 = vld [vmem:[%s4] sm:$0xf]
      %v1890 = vld [vmem:[%s4 + $0x4] sm:$0xf]
      %v1891 = vld [vmem:[%s4 + $0x8] sm:$0xf]
      %v1892 = vld [vmem:[%s4 + $0xc] sm:$0xf]
      %v1893 = vld [vmem:[%s4 + $0x10] sm:$0xf]
      %v1894 = vld [vmem:[%s4 + $0x14] sm:$0xf]
      %v1895 = vld [vmem:[%s4 + $0x18] sm:$0xf]
      %v1896 = vld [vmem:[%s4 + $0x1c] sm:$0xf]
      %v1897 = vld [vmem:[%s4 + $0x20] sm:$0xf]
      %v1898 = vld [vmem:[%s4 + $0x24] sm:$0xf]
      %v1899 = vld [vmem:[%s4 + $0x28] sm:$0xf]
      %v1900 = vld [vmem:[%s4 + $0x2c] sm:$0xf]
      %v1901 = vld [vmem:[%s4 + $0x30] sm:$0xf]
      %v1902 = vld [vmem:[%s4 + $0x34] sm:$0xf]
      %v1903 = vld [vmem:[%s4 + $0x38] sm:$0xf]
      %v1904 = vld [vmem:[%s4 + $0x3c] sm:$0xf]
      %v1905 = vld [vmem:[%s4 + $0x40] sm:$0xf]
      %v1906 = vld [vmem:[%s4 + $0x44] sm:$0xf]
      %v1907 = vld [vmem:[%s4 + $0x48] sm:$0xf]
      %v1908 = vld [vmem:[%s4 + $0x4c] sm:$0xf]
      %v1909 = vld [vmem:[%s4 + $0x50] sm:$0xf]
      %v1910 = vld [vmem:[%s4 + $0x54] sm:$0xf]
      %v1911 = vld [vmem:[%s4 + $0x58] sm:$0xf]
      %v1912 = vld [vmem:[%s4 + $0x5c] sm:$0xf]
      %v1913 = vld [vmem:[%s4 + $0x60] sm:$0xf]
      %v1914 = vld [vmem:[%s4 + $0x64] sm:$0xf]
      %v1915 = vld [vmem:[%s4 + $0x68] sm:$0xf]
      %v1916 = vld [vmem:[%s4 + $0x6c] sm:$0xf]
      %v1917 = vld [vmem:[%s4 + $0x70] sm:$0xf]
      %v1918 = vld [vmem:[%s4 + $0x74] sm:$0xf]
      %v1919 = vld [vmem:[%s4 + $0x78] sm:$0xf]
      %v1920 = vld [vmem:[%s4 + $0x7c] sm:$0xf]
      %v1921 = vld [vmem:[#allocation4] sm:$0xf]
      %v1922 = vld [vmem:[#allocation4 + $0x8] sm:$0xf]
      %v1923 = vld [vmem:[#allocation4 + $0x10] sm:$0x3]
      %v1924 = vld [vmem:[%s5] sm:$0xf]
      %v1925 = vld [vmem:[%s5 + $0x4] sm:$0xf]
      %v1926 = vld [vmem:[%s5 + $0x8] sm:$0xf]
      %v1927 = vld [vmem:[%s5 + $0xc] sm:$0xf]
      %v1928 = vld [vmem:[%s5 + $0x10] sm:$0xf]
      %v1929 = vld [vmem:[%s5 + $0x14] sm:$0xf]
      %v1930 = vld [vmem:[%s5 + $0x18] sm:$0xf]
      %v1931 = vld [vmem:[%s5 + $0x1c] sm:$0xf]
      %v1932 = vld [vmem:[%s5 + $0x20] sm:$0xf]
      %v1933 = vld [vmem:[%s5 + $0x24] sm:$0xf]
      %v1934 = vld [vmem:[%s5 + $0x28] sm:$0xf]
      %v1935 = vld [vmem:[%s5 + $0x2c] sm:$0xf]
      %v1936 = vld [vmem:[%s5 + $0x30] sm:$0xf]
      %v1937 = vld [vmem:[%s5 + $0x34] sm:$0xf]
      %v1938 = vld [vmem:[%s5 + $0x38] sm:$0xf]
      %v1939 = vld [vmem:[%s5 + $0x3c] sm:$0xf]
      %v1943 = vunpack.c.l.b16 %v1921
      %v1944 = vunpack.c.l.b16 %v1922
      %v1945 = vunpack.c.l.b16 %v1923
      %v1946 = vpack.c.b16 %v1944, %v1943
      %v1947 = vpack.c.b16 %v1945, %v1945
      %v1949 = vshrl.u32 %v1946, 16
      %v1951 = vshll.u32 %v1946, 16
      %v1953 = vrot.slane %v1951, 1
      %v1954 = vor.u32 %v1949, %v1953
      %v1956 = vshll.u32 %v1947, 16
      %v1958 = vrot.slane %v1956, 1
      %v1959 = vsel %vm1482, %v1954, %v1958
      %v1960 = vshrl.u32 %v1947, 16
      %v1962 = vor.u32 %v1960, %v1958
      %v1981 = vunpack.c.l.b16 %v1924
      %v1982 = vunpack.c.l.b16 %v1925
      %v1983 = vunpack.c.l.b16 %v1926
      %v1984 = vunpack.c.l.b16 %v1927
      %v1985 = vunpack.c.l.b16 %v1928
      %v1986 = vunpack.c.l.b16 %v1929
      %v1987 = vunpack.c.l.b16 %v1930
      %v1988 = vunpack.c.l.b16 %v1931
      %v1989 = vunpack.c.l.b16 %v1932
      %v1990 = vunpack.c.l.b16 %v1933
      %v1991 = vunpack.c.l.b16 %v1934
      %v1992 = vunpack.c.l.b16 %v1935
      %v1993 = vunpack.c.l.b16 %v1936
      %v1994 = vunpack.c.l.b16 %v1937
      %v1995 = vunpack.c.l.b16 %v1938
      %v1996 = vunpack.c.l.b16 %v1939
      %v1997 = vpack.c.b16 %v1982, %v1981
      %v1998 = vpack.c.b16 %v1984, %v1983
      %v1999 = vpack.c.b16 %v1986, %v1985
      %v2000 = vpack.c.b16 %v1988, %v1987
      %v2001 = vpack.c.b16 %v1990, %v1989
      %v2002 = vpack.c.b16 %v1992, %v1991
      %v2003 = vpack.c.b16 %v1994, %v1993
      %v2004 = vpack.c.b16 %v1996, %v1995
      %2013 = vmatprep.subr.bf16.mxu0 0
      %2014 = vmatpush1.bf16.msra.mxu0 %v1997
      %2015 = vmatprep.subr.bf16.mxu0 0
      %2016 = vmatpush1.bf16.msra.mxu0 %v1998
      %2017 = vmatprep.subr.bf16.mxu0 0
      %2018 = vmatpush1.bf16.msra.mxu0 %v1999
      %2019 = vmatprep.subr.bf16.mxu0 0
      %2020 = vmatpush1.bf16.msra.mxu0 %v2000
      %2021 = vmatprep.subr.bf16.mxu0 0
      %2022 = vmatpush1.bf16.msra.mxu0 %v2001
      %2023 = vmatprep.subr.bf16.mxu0 0
      %2024 = vmatpush1.bf16.msra.mxu0 %v2002
      %2025 = vmatprep.subr.bf16.mxu0 0
      %2026 = vmatpush1.bf16.msra.mxu0 %v2003
      %2027 = vmatprep.subr.bf16.mxu0 0
      %2028 = vmatpush1.bf16.msra.mxu0 %v2004
      %2029 = vmatprep.subr.bf16.mxu0 0
      %2030 = vmatpush1.bf16.msra.mxu0 0
      %2031 = vmatprep.subr.bf16.mxu0 0
      %2032 = vmatpush1.bf16.msra.mxu0 0
      %2033 = vmatprep.subr.bf16.mxu0 0
      %2034 = vmatpush1.bf16.msra.mxu0 0
      %2035 = vmatprep.subr.bf16.mxu0 0
      %2036 = vmatpush1.bf16.msra.mxu0 0
      %2037 = vmatprep.subr.bf16.mxu0 0
      %2038 = vmatpush1.bf16.msra.mxu0 0
      %2039 = vmatprep.subr.bf16.mxu0 0
      %2040 = vmatpush1.bf16.msra.mxu0 0
      %2041 = vmatprep.subr.bf16.mxu0 0
      %2042 = vmatpush1.bf16.msra.mxu0 0
      %2043 = vmatprep.subr.bf16.mxu0 0
      %2044 = vmatpush1.bf16.msra.mxu0 0
      %2045 = vmatprep.mubr.bf16.mxu0 0
      %2046 = vmatmul.mubr.bf16.gmra.mrb[0].mxu0 %v1959
      %v2047 = vpop.f32.mrb[0].mxu0
      %v2048 = vadd.f32 0.0, %v2047
      %v2049 = vpop.f32.mrb[0].mxu0
      %v2050 = vpop.f32.mrb[0].mxu0
      %v2051 = vadd.f32 0.0, %v2050
      %v2052 = vpop.f32.mrb[0].mxu0
      %2053 = vmatprep.mubr.bf16.mxu0 0
      %2054 = vmatmul.mubr.bf16.gmra.mrb[0].mxu0 %v1962
      %v2055 = vpop.f32.mrb[0].mxu0
      %v2056 = vadd.f32 0.0, %v2055
      %v2057 = vpop.f32.mrb[0].mxu0
      %v2058 = vpop.f32.mrb[0].mxu0
      %v2059 = vpop.f32.mrb[0].mxu0
      %2060 = vdwg.mxu0
      %v2064 = vunpack.c.l.b16 %v1886
      %v2065 = vunpack.c.h.b16 %v1886
      %v2066 = vunpack.c.l.b16 %v1887
      %v2067 = vunpack.c.h.b16 %v1887
      %v2068 = vunpack.c.l.b16 %v1888
      %v2069 = vunpack.c.h.b16 %v1888
      %v2070 = vpack.c.b16 %v2066, %v2064
      %v2071 = vpack.c.b16 %v2067, %v2065
      %v2072 = vpack.c.b16 %v2068, %v2068
      %v2073 = vpack.c.b16 %v2069, %v2069
      %v2110 = vunpack.c.l.b16 %v1889
      %v2111 = vunpack.c.l.b16 %v1890
      %v2112 = vunpack.c.l.b16 %v1891
      %v2113 = vunpack.c.l.b16 %v1892
      %v2114 = vunpack.c.l.b16 %v1893
      %v2115 = vunpack.c.l.b16 %v1894
      %v2116 = vunpack.c.l.b16 %v1895
      %v2117 = vunpack.c.l.b16 %v1896
      %v2118 = vunpack.c.l.b16 %v1897
      %v2119 = vunpack.c.l.b16 %v1898
      %v2120 = vunpack.c.l.b16 %v1899
      %v2121 = vunpack.c.l.b16 %v1900
      %v2122 = vunpack.c.l.b16 %v1901
      %v2123 = vunpack.c.l.b16 %v1902
      %v2124 = vunpack.c.l.b16 %v1903
      %v2125 = vunpack.c.l.b16 %v1904
      %v2126 = vunpack.c.l.b16 %v1905
      %v2127 = vunpack.c.l.b16 %v1906
      %v2128 = vunpack.c.l.b16 %v1907
      %v2129 = vunpack.c.l.b16 %v1908
      %v2130 = vunpack.c.l.b16 %v1909
      %v2131 = vunpack.c.l.b16 %v1910
      %v2132 = vunpack.c.l.b16 %v1911
      %v2133 = vunpack.c.l.b16 %v1912
      %v2134 = vunpack.c.l.b16 %v1913
      %v2135 = vunpack.c.l.b16 %v1914
      %v2136 = vunpack.c.l.b16 %v1915
      %v2137 = vunpack.c.l.b16 %v1916
      %v2138 = vunpack.c.l.b16 %v1917
      %v2139 = vunpack.c.l.b16 %v1918
      %v2140 = vunpack.c.l.b16 %v1919
      %v2141 = vunpack.c.l.b16 %v1920
      %v2142 = vpack.c.b16 %v2111, %v2110
      %v2143 = vpack.c.b16 %v2113, %v2112
      %v2144 = vpack.c.b16 %v2115, %v2114
      %v2145 = vpack.c.b16 %v2117, %v2116
      %v2146 = vpack.c.b16 %v2119, %v2118
      %v2147 = vpack.c.b16 %v2121, %v2120
      %v2148 = vpack.c.b16 %v2123, %v2122
      %v2149 = vpack.c.b16 %v2125, %v2124
      %v2150 = vpack.c.b16 %v2127, %v2126
      %v2151 = vpack.c.b16 %v2129, %v2128
      %v2152 = vpack.c.b16 %v2131, %v2130
      %v2153 = vpack.c.b16 %v2133, %v2132
      %v2154 = vpack.c.b16 %v2135, %v2134
      %v2155 = vpack.c.b16 %v2137, %v2136
      %v2156 = vpack.c.b16 %v2139, %v2138
      %v2157 = vpack.c.b16 %v2141, %v2140
      %2174 = vmatprep.subr.bf16.mxu0 0
      %2175 = vmatpush1.bf16.msra.mxu0 %v2142
      %2176 = vmatprep.subr.bf16.mxu0 0
      %2177 = vmatpush1.bf16.msra.mxu0 %v2143
      %2178 = vmatprep.subr.bf16.mxu0 0
      %2179 = vmatpush1.bf16.msra.mxu0 %v2144
      %2180 = vmatprep.subr.bf16.mxu0 0
      %2181 = vmatpush1.bf16.msra.mxu0 %v2145
      %2182 = vmatprep.subr.bf16.mxu0 0
      %2183 = vmatpush1.bf16.msra.mxu0 %v2146
      %2184 = vmatprep.subr.bf16.mxu0 0
      %2185 = vmatpush1.bf16.msra.mxu0 %v2147
      %2186 = vmatprep.subr.bf16.mxu0 0
      %2187 = vmatpush1.bf16.msra.mxu0 %v2148
      %2188 = vmatprep.subr.bf16.mxu0 0
      %2189 = vmatpush1.bf16.msra.mxu0 %v2149
      %2190 = vmatprep.subr.bf16.mxu0 0
      %2191 = vmatpush1.bf16.msra.mxu0 %v2150
      %2192 = vmatprep.subr.bf16.mxu0 0
      %2193 = vmatpush1.bf16.msra.mxu0 %v2151
      %2194 = vmatprep.subr.bf16.mxu0 0
      %2195 = vmatpush1.bf16.msra.mxu0 %v2152
      %2196 = vmatprep.subr.bf16.mxu0 0
      %2197 = vmatpush1.bf16.msra.mxu0 %v2153
      %2198 = vmatprep.subr.bf16.mxu0 0
      %2199 = vmatpush1.bf16.msra.mxu0 %v2154
      %2200 = vmatprep.subr.bf16.mxu0 0
      %2201 = vmatpush1.bf16.msra.mxu0 %v2155
      %2202 = vmatprep.subr.bf16.mxu0 0
      %2203 = vmatpush1.bf16.msra.mxu0 %v2156
      %2204 = vmatprep.subr.bf16.mxu0 0
      %2205 = vmatpush1.bf16.msra.mxu0 %v2157
      %2206 = vmatprep.mubr.bf16.mxu0 %v2071
      %2207 = vmatmul.mubr.bf16.gmra.mrb[0].mxu0 %v2070
      %v2208 = vpop.f32.mrb[0].mxu0
      %v2209 = vadd.f32 %v2048, %v2208
      %v2210 = vpop.f32.mrb[0].mxu0
      %v2211 = vpop.f32.mrb[0].mxu0
      %v2212 = vadd.f32 %v2051, %v2211
      %v2213 = vpop.f32.mrb[0].mxu0
      %2214 = vmatprep.mubr.bf16.mxu0 %v2073
      %2215 = vmatmul.mubr.bf16.gmra.mrb[0].mxu0 %v2072
      %v2216 = vpop.f32.mrb[0].mxu0
      %v2217 = vadd.f32 %v2056, %v2216
      %v2218 = vpop.f32.mrb[0].mxu0
      %v2219 = vpop.f32.mrb[0].mxu0
      %v2220 = vpop.f32.mrb[0].mxu0
      %2221 = vdwg.mxu0
      %v2222 = vld [vmem:[%s11] sm:$0x1]
      %v2224 = vlaneseq
      %v2225 = vshrl.u32 %v2224, 7
      %v2226 = vsub.s32 0, %v2225
      %v2227 = vrot.slane %v2222, %v2226
      %v2229 = vadd.f32 %v2209, %v2227
      %v2230 = vadd.f32 %v2212, %v2227
      %v2231 = vadd.f32 %v2217, %v2227
      %v2232 = vmax.f32 %v2229, 0.0
      %v2233 = vmax.f32 %v2230, 0.0
      %v2234 = vmax.f32 %v2231, 0.0
      %2235 = vst [vmem:[#allocation5] sm:$0xff] %v2232
      %2236 = vst [vmem:[#allocation5 + $0x8] sm:$0xff] %v2233
      %2237 = vst [vmem:[#allocation5 + $0x10] sm:$0x7] %v2234
      %v2238 = vld [vmem:[#allocation5] ss:$2 sm:$0xff]
      %s2239 = scalar_lea.vmem [#allocation5], 16
      %v2240 = vld [vmem:[%s2239] ss:$2 sm:$0x3]
      %v2241 = vpack.c.bf16 %v2240, %v2238
      %2242 = vst [vmem:[#allocation6] sm:$0x1f] %v2241
      %s2243 = scalar_lea.vmem [#allocation5], 1
      %v2244 = vld [vmem:[%s2243] ss:$2 sm:$0xff]
      %s2245 = scalar_lea.vmem [#allocation5], 17
      %v2246 = vld [vmem:[%s2245] ss:$2 sm:$0x3]
      %v2247 = vpack.c.bf16 %v2246, %v2244
      %2248 = vst [vmem:[#allocation6 + $0x8] sm:$0x1f] %v2247
      %v2249 = vld [vmem:[#allocation6] sm:$0x1f]
      %v2250 = vld [vmem:[#allocation6 + $0x8] sm:$0x1f]
      %v2251 = vld [vmem:[%s6] sm:$0xf]
      %v2252 = vld [vmem:[%s6 + $0x4] sm:$0xf]
      %v2253 = vld [vmem:[%s6 + $0x8] sm:$0xf]
      %v2254 = vld [vmem:[%s6 + $0xc] sm:$0xf]
      %v2255 = vld [vmem:[%s6 + $0x10] sm:$0xf]
      %v2256 = vld [vmem:[%s6 + $0x14] sm:$0xf]
      %v2257 = vld [vmem:[%s6 + $0x18] sm:$0xf]
      %v2258 = vld [vmem:[%s6 + $0x1c] sm:$0xf]
      %v2259 = vld [vmem:[%s6 + $0x20] sm:$0xf]
      %v2260 = vld [vmem:[%s6 + $0x24] sm:$0xf]
      %v2261 = vld [vmem:[%s6 + $0x28] sm:$0xf]
      %v2262 = vld [vmem:[%s6 + $0x2c] sm:$0xf]
      %v2263 = vld [vmem:[%s6 + $0x30] sm:$0xf]
      %v2264 = vld [vmem:[%s6 + $0x34] sm:$0xf]
      %v2265 = vld [vmem:[%s6 + $0x38] sm:$0xf]
      %v2266 = vld [vmem:[%s6 + $0x3c] sm:$0xf]
      %v2267 = vld [vmem:[%s6 + $0x40] sm:$0xf]
      %v2268 = vld [vmem:[%s6 + $0x44] sm:$0xf]
      %v2269 = vld [vmem:[%s6 + $0x48] sm:$0xf]
      %v2270 = vld [vmem:[%s6 + $0x4c] sm:$0xf]
      %v2271 = vld [vmem:[%s6 + $0x50] sm:$0xf]
      %v2272 = vld [vmem:[%s6 + $0x54] sm:$0xf]
      %v2273 = vld [vmem:[%s6 + $0x58] sm:$0xf]
      %v2274 = vld [vmem:[%s6 + $0x5c] sm:$0xf]
      %v2275 = vld [vmem:[%s6 + $0x60] sm:$0xf]
      %v2276 = vld [vmem:[%s6 + $0x64] sm:$0xf]
      %v2277 = vld [vmem:[%s6 + $0x68] sm:$0xf]
      %v2278 = vld [vmem:[%s6 + $0x6c] sm:$0xf]
      %v2279 = vld [vmem:[%s6 + $0x70] sm:$0xf]
      %v2280 = vld [vmem:[%s6 + $0x74] sm:$0xf]
      %v2281 = vld [vmem:[%s6 + $0x78] sm:$0xf]
      %v2282 = vld [vmem:[%s6 + $0x7c] sm:$0xf]
      %v2283 = vld [vmem:[#allocation6] sm:$0x1f]
      %v2284 = vld [vmem:[%s7] sm:$0xf]
      %v2285 = vld [vmem:[%s7 + $0x4] sm:$0xf]
      %v2286 = vld [vmem:[%s7 + $0x8] sm:$0xf]
      %v2287 = vld [vmem:[%s7 + $0xc] sm:$0xf]
      %v2288 = vld [vmem:[%s7 + $0x10] sm:$0xf]
      %v2289 = vld [vmem:[%s7 + $0x14] sm:$0xf]
      %v2290 = vld [vmem:[%s7 + $0x18] sm:$0xf]
      %v2291 = vld [vmem:[%s7 + $0x1c] sm:$0xf]
      %v2292 = vld [vmem:[%s7 + $0x20] sm:$0xf]
      %v2293 = vld [vmem:[%s7 + $0x24] sm:$0xf]
      %v2294 = vld [vmem:[%s7 + $0x28] sm:$0xf]
      %v2295 = vld [vmem:[%s7 + $0x2c] sm:$0xf]
      %v2296 = vld [vmem:[%s7 + $0x30] sm:$0xf]
      %v2297 = vld [vmem:[%s7 + $0x34] sm:$0xf]
      %v2298 = vld [vmem:[%s7 + $0x38] sm:$0xf]
      %v2299 = vld [vmem:[%s7 + $0x3c] sm:$0xf]
      %v2301 = vshrl.u32 %v2283, 16
      %v2303 = vshll.u32 %v2283, 16
      %v2305 = vrot.slane %v2303, 1
      %v2306 = vor.u32 %v2301, %v2305
      %v2324 = vunpack.c.l.b16 %v2284
      %v2325 = vunpack.c.l.b16 %v2285
      %v2326 = vunpack.c.l.b16 %v2286
      %v2327 = vunpack.c.l.b16 %v2287
      %v2328 = vunpack.c.l.b16 %v2288
      %v2329 = vunpack.c.l.b16 %v2289
      %v2330 = vunpack.c.l.b16 %v2290
      %v2331 = vunpack.c.l.b16 %v2291
      %v2332 = vunpack.c.l.b16 %v2292
      %v2333 = vunpack.c.l.b16 %v2293
      %v2334 = vunpack.c.l.b16 %v2294
      %v2335 = vunpack.c.l.b16 %v2295
      %v2336 = vunpack.c.l.b16 %v2296
      %v2337 = vunpack.c.l.b16 %v2297
      %v2338 = vunpack.c.l.b16 %v2298
      %v2339 = vunpack.c.l.b16 %v2299
      %v2340 = vpack.c.b16 %v2325, %v2324
      %v2341 = vpack.c.b16 %v2327, %v2326
      %v2342 = vpack.c.b16 %v2329, %v2328
      %v2343 = vpack.c.b16 %v2331, %v2330
      %v2344 = vpack.c.b16 %v2333, %v2332
      %v2345 = vpack.c.b16 %v2335, %v2334
      %v2346 = vpack.c.b16 %v2337, %v2336
      %v2347 = vpack.c.b16 %v2339, %v2338
      %2356 = vmatprep.subr.bf16.mxu0 0
      %2357 = vmatpush1.bf16.msra.mxu0 %v2340
      %2358 = vmatprep.subr.bf16.mxu0 0
      %2359 = vmatpush1.bf16.msra.mxu0 %v2341
      %2360 = vmatprep.subr.bf16.mxu0 0
      %2361 = vmatpush1.bf16.msra.mxu0 %v2342
      %2362 = vmatprep.subr.bf16.mxu0 0
      %2363 = vmatpush1.bf16.msra.mxu0 %v2343
      %2364 = vmatprep.subr.bf16.mxu0 0
      %2365 = vmatpush1.bf16.msra.mxu0 %v2344
      %2366 = vmatprep.subr.bf16.mxu0 0
      %2367 = vmatpush1.bf16.msra.mxu0 %v2345
      %2368 = vmatprep.subr.bf16.mxu0 0
      %2369 = vmatpush1.bf16.msra.mxu0 %v2346
      %2370 = vmatprep.subr.bf16.mxu0 0
      %2371 = vmatpush1.bf16.msra.mxu0 %v2347
      %2372 = vmatprep.subr.bf16.mxu0 0
      %2373 = vmatpush1.bf16.msra.mxu0 0
      %2374 = vmatprep.subr.bf16.mxu0 0
      %2375 = vmatpush1.bf16.msra.mxu0 0
      %2376 = vmatprep.subr.bf16.mxu0 0
      %2377 = vmatpush1.bf16.msra.mxu0 0
      %2378 = vmatprep.subr.bf16.mxu0 0
      %2379 = vmatpush1.bf16.msra.mxu0 0
      %2380 = vmatprep.subr.bf16.mxu0 0
      %2381 = vmatpush1.bf16.msra.mxu0 0
      %2382 = vmatprep.subr.bf16.mxu0 0
      %2383 = vmatpush1.bf16.msra.mxu0 0
      %2384 = vmatprep.subr.bf16.mxu0 0
      %2385 = vmatpush1.bf16.msra.mxu0 0
      %2386 = vmatprep.subr.bf16.mxu0 0
      %2387 = vmatpush1.bf16.msra.mxu0 0
      %2388 = vmatprep.mubr.bf16.mxu0 0
      %2389 = vmatmul.mubr.bf16.gmra.mrb[0].mxu0 %v2306
      %v2390 = vpop.f32.mrb[0].mxu0
      %v2391 = vadd.f32 0.0, %v2390
      %v2392 = vpop.f32.mrb[0].mxu0
      %v2393 = vpop.f32.mrb[0].mxu0
      %v2394 = vadd.f32 0.0, %v2393
      %v2395 = vpop.f32.mrb[0].mxu0
      %2396 = vdwg.mxu0
      %v2429 = vunpack.c.l.b16 %v2251
      %v2430 = vunpack.c.l.b16 %v2252
      %v2431 = vunpack.c.l.b16 %v2253
      %v2432 = vunpack.c.l.b16 %v2254
      %v2433 = vunpack.c.l.b16 %v2255
      %v2434 = vunpack.c.l.b16 %v2256
      %v2435 = vunpack.c.l.b16 %v2257
      %v2436 = vunpack.c.l.b16 %v2258
      %v2437 = vunpack.c.l.b16 %v2259
      %v2438 = vunpack.c.l.b16 %v2260
      %v2439 = vunpack.c.l.b16 %v2261
      %v2440 = vunpack.c.l.b16 %v2262
      %v2441 = vunpack.c.l.b16 %v2263
      %v2442 = vunpack.c.l.b16 %v2264
      %v2443 = vunpack.c.l.b16 %v2265
      %v2444 = vunpack.c.l.b16 %v2266
      %v2445 = vunpack.c.l.b16 %v2267
      %v2446 = vunpack.c.l.b16 %v2268
      %v2447 = vunpack.c.l.b16 %v2269
      %v2448 = vunpack.c.l.b16 %v2270
      %v2449 = vunpack.c.l.b16 %v2271
      %v2450 = vunpack.c.l.b16 %v2272
      %v2451 = vunpack.c.l.b16 %v2273
      %v2452 = vunpack.c.l.b16 %v2274
      %v2453 = vunpack.c.l.b16 %v2275
      %v2454 = vunpack.c.l.b16 %v2276
      %v2455 = vunpack.c.l.b16 %v2277
      %v2456 = vunpack.c.l.b16 %v2278
      %v2457 = vunpack.c.l.b16 %v2279
      %v2458 = vunpack.c.l.b16 %v2280
      %v2459 = vunpack.c.l.b16 %v2281
      %v2460 = vunpack.c.l.b16 %v2282
      %v2461 = vpack.c.b16 %v2430, %v2429
      %v2462 = vpack.c.b16 %v2432, %v2431
      %v2463 = vpack.c.b16 %v2434, %v2433
      %v2464 = vpack.c.b16 %v2436, %v2435
      %v2465 = vpack.c.b16 %v2438, %v2437
      %v2466 = vpack.c.b16 %v2440, %v2439
      %v2467 = vpack.c.b16 %v2442, %v2441
      %v2468 = vpack.c.b16 %v2444, %v2443
      %v2469 = vpack.c.b16 %v2446, %v2445
      %v2470 = vpack.c.b16 %v2448, %v2447
      %v2471 = vpack.c.b16 %v2450, %v2449
      %v2472 = vpack.c.b16 %v2452, %v2451
      %v2473 = vpack.c.b16 %v2454, %v2453
      %v2474 = vpack.c.b16 %v2456, %v2455
      %v2475 = vpack.c.b16 %v2458, %v2457
      %v2476 = vpack.c.b16 %v2460, %v2459
      %2493 = vmatprep.subr.bf16.mxu0 0
      %2494 = vmatpush1.bf16.msra.mxu0 %v2461
      %2495 = vmatprep.subr.bf16.mxu0 0
      %2496 = vmatpush1.bf16.msra.mxu0 %v2462
      %2497 = vmatprep.subr.bf16.mxu0 0
      %2498 = vmatpush1.bf16.msra.mxu0 %v2463
      %2499 = vmatprep.subr.bf16.mxu0 0
      %2500 = vmatpush1.bf16.msra.mxu0 %v2464
      %2501 = vmatprep.subr.bf16.mxu0 0
      %2502 = vmatpush1.bf16.msra.mxu0 %v2465
      %2503 = vmatprep.subr.bf16.mxu0 0
      %2504 = vmatpush1.bf16.msra.mxu0 %v2466
      %2505 = vmatprep.subr.bf16.mxu0 0
      %2506 = vmatpush1.bf16.msra.mxu0 %v2467
      %2507 = vmatprep.subr.bf16.mxu0 0
      %2508 = vmatpush1.bf16.msra.mxu0 %v2468
      %2509 = vmatprep.subr.bf16.mxu0 0
      %2510 = vmatpush1.bf16.msra.mxu0 %v2469
      %2511 = vmatprep.subr.bf16.mxu0 0
      %2512 = vmatpush1.bf16.msra.mxu0 %v2470
      %2513 = vmatprep.subr.bf16.mxu0 0
      %2514 = vmatpush1.bf16.msra.mxu0 %v2471
      %2515 = vmatprep.subr.bf16.mxu0 0
      %2516 = vmatpush1.bf16.msra.mxu0 %v2472
      %2517 = vmatprep.subr.bf16.mxu0 0
      %2518 = vmatpush1.bf16.msra.mxu0 %v2473
      %2519 = vmatprep.subr.bf16.mxu0 0
      %2520 = vmatpush1.bf16.msra.mxu0 %v2474
      %2521 = vmatprep.subr.bf16.mxu0 0
      %2522 = vmatpush1.bf16.msra.mxu0 %v2475
      %2523 = vmatprep.subr.bf16.mxu0 0
      %2524 = vmatpush1.bf16.msra.mxu0 %v2476
      %2525 = vmatprep.mubr.bf16.mxu0 %v2250
      %2526 = vmatmul.mubr.bf16.gmra.mrb[0].mxu0 %v2249
      %v2527 = vpop.f32.mrb[0].mxu0
      %v2528 = vadd.f32 %v2391, %v2527
      %v2529 = vpop.f32.mrb[0].mxu0
      %v2530 = vpop.f32.mrb[0].mxu0
      %v2531 = vadd.f32 %v2394, %v2530
      %v2532 = vpop.f32.mrb[0].mxu0
      %2533 = vdwg.mxu0
      %v2534 = vld [vmem:[%s12] sm:$0x1]
      %v2536 = vlaneseq
      %v2537 = vshrl.u32 %v2536, 7
      %v2538 = vsub.s32 0, %v2537
      %v2539 = vrot.slane %v2534, %v2538
      %v2541 = vadd.f32 %v2528, %v2539
      %v2542 = vadd.f32 %v2531, %v2539
      %v2543 = vmax.f32 %v2541, 0.0
      %v2544 = vmax.f32 %v2542, 0.0
      %2545 = vst [vmem:[#allocation7] sm:$0xff] %v2543
      %2546 = vst [vmem:[#allocation7 + $0x8] sm:$0x1] %v2544
      %v2547 = vld [vmem:[#allocation2 + $0x28] sm:$0xff]
      %v2548 = vld [vmem:[#allocation2 + $0x30] sm:$0xff]
      %v2549 = vld [vmem:[#allocation2 + $0x38] sm:$0xff]
      %v2550 = vld [vmem:[#allocation2 + $0x40] sm:$0xff]
      %v2551 = vld [vmem:[#allocation2 + $0x48] sm:$0x7f]
      %v2552 = vld [vmem:[%s2] sm:$0xf]
      %v2553 = vld [vmem:[%s2 + $0x4] sm:$0xf]
      %v2554 = vld [vmem:[%s2 + $0x8] sm:$0xf]
      %v2555 = vld [vmem:[%s2 + $0xc] sm:$0xf]
      %v2556 = vld [vmem:[%s2 + $0x10] sm:$0xf]
      %v2557 = vld [vmem:[%s2 + $0x14] sm:$0xf]
      %v2558 = vld [vmem:[%s2 + $0x18] sm:$0xf]
      %v2559 = vld [vmem:[%s2 + $0x1c] sm:$0xf]
      %v2560 = vld [vmem:[%s2 + $0x20] sm:$0xf]
      %v2561 = vld [vmem:[%s2 + $0x24] sm:$0xf]
      %v2562 = vld [vmem:[%s2 + $0x28] sm:$0xf]
      %v2563 = vld [vmem:[%s2 + $0x2c] sm:$0xf]
      %v2564 = vld [vmem:[%s2 + $0x30] sm:$0xf]
      %v2565 = vld [vmem:[%s2 + $0x34] sm:$0xf]
      %v2566 = vld [vmem:[%s2 + $0x38] sm:$0xf]
      %v2567 = vld [vmem:[%s2 + $0x3c] sm:$0xf]
      %v2568 = vld [vmem:[#allocation2 + $0x48] sm:$0xff]
      %v2569 = vld [vmem:[%s3] sm:$0xf]
      %v2570 = vld [vmem:[%s3 + $0x4] sm:$0xf]
      %v2571 = vld [vmem:[%s3 + $0x8] sm:$0xf]
      %v2572 = vld [vmem:[%s3 + $0xc] sm:$0xf]
      %v2574 = vshrl.u32 %v2547, 16
      %v2576 = vshll.u32 %v2547, 16
      %v2578 = vrot.slane %v2576, 1
      %v2579 = vor.u32 %v2574, %v2578
      %v2581 = vshll.u32 %v2548, 16
      %v2583 = vrot.slane %v2581, 1
      %v2584 = vsel %vm1482, %v2579, %v2583
      %v2585 = vshrl.u32 %v2548, 16
      %v2587 = vor.u32 %v2585, %v2583
      %v2589 = vshll.u32 %v2549, 16
      %v2591 = vrot.slane %v2589, 1
      %v2592 = vsel %vm1482, %v2587, %v2591
      %v2593 = vshrl.u32 %v2549, 16
      %v2595 = vor.u32 %v2593, %v2591
      %v2597 = vshll.u32 %v2550, 16
      %v2599 = vrot.slane %v2597, 1
      %v2600 = vsel %vm1482, %v2595, %v2599
      %v2601 = vshrl.u32 %v2550, 16
      %v2603 = vor.u32 %v2601, %v2599
      %v2605 = vshll.u32 %v2568, 16
      %v2607 = vrot.slane %v2605, 1
      %v2608 = vsel %vm1482, %v2603, %v2607
      %v2609 = vshrl.u32 %v2568, 16
      %v2611 = vor.u32 %v2609, %v2607
      %v2616 = vunpack.c.l.b16 %v2569
      %v2617 = vunpack.c.l.b16 %v2570
      %v2618 = vunpack.c.l.b16 %v2571
      %v2619 = vunpack.c.l.b16 %v2572
      %v2620 = vpack.c.b16 %v2617, %v2616
      %v2621 = vpack.c.b16 %v2619, %v2618
      %v2625 = vsel %vm1534, %v2584, 0
      %v2628 = vsel %vm1534, %v2592, 0
      %v2631 = vsel %vm1534, %v2600, 0
      %v2634 = vsel %vm1534, %v2608, 0
      %v2637 = vsel %vm1534, %v2611, 0
      %2639 = vmatprep.subr.bf16.mxu0 0
      %2640 = vmatpush1.bf16.msra.mxu0 %v2620
      %2641 = vmatprep.subr.bf16.mxu0 0
      %2642 = vmatpush1.bf16.msra.mxu0 %v2621
      %2643 = vmatprep.subr.bf16.mxu0 0
      %2644 = vmatpush1.bf16.msra.mxu0 0
      %2645 = vmatprep.subr.bf16.mxu0 0
      %2646 = vmatpush1.bf16.msra.mxu0 0
      %2647 = vmatprep.subr.bf16.mxu0 0
      %2648 = vmatpush1.bf16.msra.mxu0 0
      %2649 = vmatprep.subr.bf16.mxu0 0
      %2650 = vmatpush1.bf16.msra.mxu0 0
      %2651 = vmatprep.subr.bf16.mxu0 0
      %2652 = vmatpush1.bf16.msra.mxu0 0
      %2653 = vmatprep.subr.bf16.mxu0 0
      %2654 = vmatpush1.bf16.msra.mxu0 0
      %2655 = vmatprep.subr.bf16.mxu0 0
      %2656 = vmatpush1.bf16.msra.mxu0 0
      %2657 = vmatprep.subr.bf16.mxu0 0
      %2658 = vmatpush1.bf16.msra.mxu0 0
      %2659 = vmatprep.subr.bf16.mxu0 0
      %2660 = vmatpush1.bf16.msra.mxu0 0
      %2661 = vmatprep.subr.bf16.mxu0 0
      %2662 = vmatpush1.bf16.msra.mxu0 0
      %2663 = vmatprep.subr.bf16.mxu0 0
      %2664 = vmatpush1.bf16.msra.mxu0 0
      %2665 = vmatprep.subr.bf16.mxu0 0
      %2666 = vmatpush1.bf16.msra.mxu0 0
      %2667 = vmatprep.subr.bf16.mxu0 0
      %2668 = vmatpush1.bf16.msra.mxu0 0
      %2669 = vmatprep.subr.bf16.mxu0 0
      %2670 = vmatpush1.bf16.msra.mxu0 0
      %2671 = vmatprep.mubr.bf16.mxu0 0
      %2672 = vmatmul.mubr.bf16.gmra.mrb[0].mxu0 %v2625
      %v2673 = vpop.f32.mrb[0].mxu0
      %v2674 = vadd.f32 0.0, %v2673
      %v2675 = vpop.f32.mrb[0].mxu0
      %v2676 = vpop.f32.mrb[0].mxu0
      %v2677 = vadd.f32 0.0, %v2676
      %v2678 = vpop.f32.mrb[0].mxu0
      %2679 = vmatprep.mubr.bf16.mxu0 0
      %2680 = vmatmul.mubr.bf16.gmra.mrb[0].mxu0 %v2628
      %v2681 = vpop.f32.mrb[0].mxu0
      %v2682 = vadd.f32 0.0, %v2681
      %v2683 = vpop.f32.mrb[0].mxu0
      %v2684 = vpop.f32.mrb[0].mxu0
      %v2685 = vadd.f32 0.0, %v2684
      %v2686 = vpop.f32.mrb[0].mxu0
      %2687 = vmatprep.mubr.bf16.mxu0 0
      %2688 = vmatmul.mubr.bf16.gmra.mrb[0].mxu0 %v2631
      %v2689 = vpop.f32.mrb[0].mxu0
      %v2690 = vadd.f32 0.0, %v2689
      %v2691 = vpop.f32.mrb[0].mxu0
      %v2692 = vpop.f32.mrb[0].mxu0
      %v2693 = vadd.f32 0.0, %v2692
      %v2694 = vpop.f32.mrb[0].mxu0
      %2695 = vmatprep.mubr.bf16.mxu0 0
      %2696 = vmatmul.mubr.bf16.gmra.mrb[0].mxu0 %v2634
      %v2697 = vpop.f32.mrb[0].mxu0
      %v2698 = vadd.f32 0.0, %v2697
      %v2699 = vpop.f32.mrb[0].mxu0
      %v2700 = vpop.f32.mrb[0].mxu0
      %v2701 = vadd.f32 0.0, %v2700
      %v2702 = vpop.f32.mrb[0].mxu0
      %2703 = vmatprep.mubr.bf16.mxu0 0
      %2704 = vmatmul.mubr.bf16.gmra.mrb[0].mxu0 %v2637
      %v2705 = vpop.f32.mrb[0].mxu0
      %v2706 = vadd.f32 0.0, %v2705
      %v2707 = vpop.f32.mrb[0].mxu0
      %v2708 = vpop.f32.mrb[0].mxu0
      %v2709 = vadd.f32 0.0, %v2708
      %v2710 = vpop.f32.mrb[0].mxu0
      %2711 = vdwg.mxu0
      %v2728 = vunpack.c.l.b16 %v2552
      %v2729 = vunpack.c.l.b16 %v2553
      %v2730 = vunpack.c.l.b16 %v2554
      %v2731 = vunpack.c.l.b16 %v2555
      %v2732 = vunpack.c.l.b16 %v2556
      %v2733 = vunpack.c.l.b16 %v2557
      %v2734 = vunpack.c.l.b16 %v2558
      %v2735 = vunpack.c.l.b16 %v2559
      %v2736 = vunpack.c.l.b16 %v2560
      %v2737 = vunpack.c.l.b16 %v2561
      %v2738 = vunpack.c.l.b16 %v2562
      %v2739 = vunpack.c.l.b16 %v2563
      %v2740 = vunpack.c.l.b16 %v2564
      %v2741 = vunpack.c.l.b16 %v2565
      %v2742 = vunpack.c.l.b16 %v2566
      %v2743 = vunpack.c.l.b16 %v2567
      %v2744 = vpack.c.b16 %v2729, %v2728
      %v2745 = vpack.c.b16 %v2731, %v2730
      %v2746 = vpack.c.b16 %v2733, %v2732
      %v2747 = vpack.c.b16 %v2735, %v2734
      %v2748 = vpack.c.b16 %v2737, %v2736
      %v2749 = vpack.c.b16 %v2739, %v2738
      %v2750 = vpack.c.b16 %v2741, %v2740
      %v2751 = vpack.c.b16 %v2743, %v2742
      %2760 = vmatprep.subr.bf16.mxu0 0
      %2761 = vmatpush1.bf16.msra.mxu0 %v2744
      %2762 = vmatprep.subr.bf16.mxu0 0
      %2763 = vmatpush1.bf16.msra.mxu0 %v2745
      %2764 = vmatprep.subr.bf16.mxu0 0
      %2765 = vmatpush1.bf16.msra.mxu0 %v2746
      %2766 = vmatprep.subr.bf16.mxu0 0
      %2767 = vmatpush1.bf16.msra.mxu0 %v2747
      %2768 = vmatprep.subr.bf16.mxu0 0
      %2769 = vmatpush1.bf16.msra.mxu0 %v2748
      %2770 = vmatprep.subr.bf16.mxu0 0
      %2771 = vmatpush1.bf16.msra.mxu0 %v2749
      %2772 = vmatprep.subr.bf16.mxu0 0
      %2773 = vmatpush1.bf16.msra.mxu0 %v2750
      %2774 = vmatprep.subr.bf16.mxu0 0
      %2775 = vmatpush1.bf16.msra.mxu0 %v2751
      %2776 = vmatprep.subr.bf16.mxu0 0
      %2777 = vmatpush1.bf16.msra.mxu0 0
      %2778 = vmatprep.subr.bf16.mxu0 0
      %2779 = vmatpush1.bf16.msra.mxu0 0
      %2780 = vmatprep.subr.bf16.mxu0 0
      %2781 = vmatpush1.bf16.msra.mxu0 0
      %2782 = vmatprep.subr.bf16.mxu0 0
      %2783 = vmatpush1.bf16.msra.mxu0 0
      %2784 = vmatprep.subr.bf16.mxu0 0
      %2785 = vmatpush1.bf16.msra.mxu0 0
      %2786 = vmatprep.subr.bf16.mxu0 0
      %2787 = vmatpush1.bf16.msra.mxu0 0
      %2788 = vmatprep.subr.bf16.mxu0 0
      %2789 = vmatpush1.bf16.msra.mxu0 0
      %2790 = vmatprep.subr.bf16.mxu0 0
      %2791 = vmatpush1.bf16.msra.mxu0 0
      %2792 = vmatprep.mubr.bf16.mxu0 0
      %2793 = vmatmul.mubr.bf16.gmra.mrb[0].mxu0 %v2547
      %v2794 = vpop.f32.mrb[0].mxu0
      %v2795 = vadd.f32 %v2674, %v2794
      %v2796 = vpop.f32.mrb[0].mxu0
      %v2797 = vpop.f32.mrb[0].mxu0
      %v2798 = vadd.f32 %v2677, %v2797
      %v2799 = vpop.f32.mrb[0].mxu0
      %2800 = vmatprep.mubr.bf16.mxu0 0
      %2801 = vmatmul.mubr.bf16.gmra.mrb[0].mxu0 %v2548
      %v2802 = vpop.f32.mrb[0].mxu0
      %v2803 = vadd.f32 %v2682, %v2802
      %v2804 = vpop.f32.mrb[0].mxu0
      %v2805 = vpop.f32.mrb[0].mxu0
      %v2806 = vadd.f32 %v2685, %v2805
      %v2807 = vpop.f32.mrb[0].mxu0
      %2808 = vmatprep.mubr.bf16.mxu0 0
      %2809 = vmatmul.mubr.bf16.gmra.mrb[0].mxu0 %v2549
      %v2810 = vpop.f32.mrb[0].mxu0
      %v2811 = vadd.f32 %v2690, %v2810
      %v2812 = vpop.f32.mrb[0].mxu0
      %v2813 = vpop.f32.mrb[0].mxu0
      %v2814 = vadd.f32 %v2693, %v2813
      %v2815 = vpop.f32.mrb[0].mxu0
      %2816 = vmatprep.mubr.bf16.mxu0 0
      %2817 = vmatmul.mubr.bf16.gmra.mrb[0].mxu0 %v2550
      %v2818 = vpop.f32.mrb[0].mxu0
      %v2819 = vadd.f32 %v2698, %v2818
      %v2820 = vpop.f32.mrb[0].mxu0
      %v2821 = vpop.f32.mrb[0].mxu0
      %v2822 = vadd.f32 %v2701, %v2821
      %v2823 = vpop.f32.mrb[0].mxu0
      %2824 = vmatprep.mubr.bf16.mxu0 0
      %2825 = vmatmul.mubr.bf16.gmra.mrb[0].mxu0 %v2551
      %v2826 = vpop.f32.mrb[0].mxu0
      %v2827 = vadd.f32 %v2706, %v2826
      %v2828 = vpop.f32.mrb[0].mxu0
      %v2829 = vpop.f32.mrb[0].mxu0
      %v2830 = vadd.f32 %v2709, %v2829
      %v2831 = vpop.f32.mrb[0].mxu0
      %2832 = vdwg.mxu0
      %v2833 = vld [vmem:[%s10] sm:$0x1]
      %v2835 = vlaneseq
      %v2836 = vshrl.u32 %v2835, 7
      %v2837 = vsub.s32 0, %v2836
      %v2838 = vrot.slane %v2833, %v2837
      %v2840 = vadd.f32 %v2795, %v2838
      %v2841 = vadd.f32 %v2798, %v2838
      %v2842 = vadd.f32 %v2803, %v2838
      %v2843 = vadd.f32 %v2806, %v2838
      %v2844 = vadd.f32 %v2811, %v2838
      %v2845 = vadd.f32 %v2814, %v2838
      %v2846 = vadd.f32 %v2819, %v2838
      %v2847 = vadd.f32 %v2822, %v2838
      %v2848 = vadd.f32 %v2827, %v2838
      %v2849 = vadd.f32 %v2830, %v2838
      %v2850 = vmax.f32 %v2840, 0.0
      %v2851 = vmax.f32 %v2841, 0.0
      %v2852 = vmax.f32 %v2842, 0.0
      %v2853 = vmax.f32 %v2843, 0.0
      %v2854 = vmax.f32 %v2844, 0.0
      %v2855 = vmax.f32 %v2845, 0.0
      %v2856 = vmax.f32 %v2846, 0.0
      %v2857 = vmax.f32 %v2847, 0.0
      %v2858 = vmax.f32 %v2848, 0.0
      %v2859 = vmax.f32 %v2849, 0.0
      %2860 = vst.msk [vmem:[#allocation3] sm:$0xff] %vm1771, %v2850
      %2861 = vst.msk [vmem:[#allocation3 + $0x8] sm:$0xff] %vm1771, %v2851
      %2862 = vst.msk [vmem:[#allocation3 + $0x10] sm:$0xff] %vm1771, %v2852
      %2863 = vst.msk [vmem:[#allocation3 + $0x18] sm:$0xff] %vm1771, %v2853
      %2864 = vst.msk [vmem:[#allocation3 + $0x20] sm:$0xff] %vm1771, %v2854
      %2865 = vst.msk [vmem:[#allocation3 + $0x28] sm:$0xff] %vm1771, %v2855
      %2866 = vst.msk [vmem:[#allocation3 + $0x30] sm:$0xff] %vm1771, %v2856
      %2867 = vst.msk [vmem:[#allocation3 + $0x38] sm:$0xff] %vm1771, %v2857
      %2868 = vst.msk [vmem:[#allocation3 + $0x40] sm:$0xff] %vm1771, %v2858
      %2869 = vst.msk [vmem:[#allocation3 + $0x48] sm:$0x3f] %vm1781, %v2859
      %v2870 = vld [vmem:[#allocation3] ss:$4 sm:$0xff]
      %v2871 = vld [vmem:[%s1784] ss:$4 sm:$0xff]
      %v2872 = vld [vmem:[%s1786] ss:$4 sm:$0xf]
      %v2873 = vpack.c.bf16 %v2871, %v2870
      %v2874 = vpack.c.bf16 %v2872, %v2872
      %v2877 = vunpack.c.l.b16 %v2873
      %v2878 = vunpack.c.h.b16 %v2873
      %v2879 = vunpack.c.l.b16 %v2874
      %v2880 = vpack.c.b16 %v2877, %v2877
      %v2881 = vpack.c.b16 %v2878, %v2878
      %v2882 = vpack.c.b16 %v2879, %v2879
      %2886 = vst.msk [vmem:[#allocation4] sm:$0xf] %vm1801, %v2880
      %2887 = vst.msk [vmem:[#allocation4 + $0x8] sm:$0xf] %vm1801, %v2881
      %2888 = vst.msk [vmem:[#allocation4 + $0x10] sm:$0x3] %vm1804, %v2882
      %v2889 = vld [vmem:[%s1806] ss:$4 sm:$0xff]
      %v2890 = vld [vmem:[%s1808] ss:$4 sm:$0xff]
      %v2891 = vld [vmem:[%s1810] ss:$4 sm:$0xf]
      %v2892 = vpack.c.bf16 %v2890, %v2889
      %v2893 = vpack.c.bf16 %v2891, %v2891
      %v2896 = vunpack.c.l.b16 %v2892
      %v2897 = vunpack.c.h.b16 %v2892
      %v2898 = vunpack.c.l.b16 %v2893
      %v2899 = vpack.c.b16 %v2896, %v2896
      %v2900 = vpack.c.b16 %v2897, %v2897
      %v2901 = vpack.c.b16 %v2898, %v2898
      %2902 = vrot.lane.b32.xlu0 %v2899, 64
      %v2903 = vpop.permute.xlu0 %2902
      %2904 = vrot.lane.b32.xlu0 %v2900, 64
      %v2905 = vpop.permute.xlu0 %2904
      %2906 = vrot.lane.b32.xlu0 %v2901, 64
      %v2907 = vpop.permute.xlu0 %2906
      %2911 = vst.msk [vmem:[#allocation4] sm:$0xf] %vm1831, %v2903
      %2912 = vst.msk [vmem:[#allocation4 + $0x8] sm:$0xf] %vm1831, %v2905
      %2913 = vst.msk [vmem:[#allocation4 + $0x10] sm:$0x3] %vm1834, %v2907
      %v2914 = vld [vmem:[%s1836] ss:$4 sm:$0xff]
      %v2915 = vld [vmem:[%s1838] ss:$4 sm:$0xff]
      %v2916 = vld [vmem:[%s1840] ss:$4 sm:$0xf]
      %v2917 = vpack.c.bf16 %v2915, %v2914
      %v2918 = vpack.c.bf16 %v2916, %v2916
      %v2921 = vunpack.c.l.b16 %v2917
      %v2922 = vunpack.c.h.b16 %v2917
      %v2923 = vunpack.c.l.b16 %v2918
      %v2924 = vpack.c.b16 %v2921, %v2921
      %v2925 = vpack.c.b16 %v2922, %v2922
      %v2926 = vpack.c.b16 %v2923, %v2923
      %2930 = vst.msk [vmem:[#allocation4 + $0x4] sm:$0xf] %vm1801, %v2924
      %2931 = vst.msk [vmem:[#allocation4 + $0xc] sm:$0xf] %vm1801, %v2925
      %2932 = vst.msk [vmem:[#allocation4 + $0x14] sm:$0x3] %vm1804, %v2926
      %v2933 = vld [vmem:[%s1858] ss:$4 sm:$0xff]
      %v2934 = vld [vmem:[%s1860] ss:$4 sm:$0xff]
      %v2935 = vld [vmem:[%s1862] ss:$4 sm:$0xf]
      %v2936 = vpack.c.bf16 %v2934, %v2933
      %v2937 = vpack.c.bf16 %v2935, %v2935
      %v2940 = vunpack.c.l.b16 %v2936
      %v2941 = vunpack.c.h.b16 %v2936
      %v2942 = vunpack.c.l.b16 %v2937
      %v2943 = vpack.c.b16 %v2940, %v2940
      %v2944 = vpack.c.b16 %v2941, %v2941
      %v2945 = vpack.c.b16 %v2942, %v2942
      %2946 = vrot.lane.b32.xlu0 %v2943, 64
      %v2947 = vpop.permute.xlu0 %2946
      %2948 = vrot.lane.b32.xlu0 %v2944, 64
      %v2949 = vpop.permute.xlu0 %2948
      %2950 = vrot.lane.b32.xlu0 %v2945, 64
      %v2951 = vpop.permute.xlu0 %2950
      %2955 = vst.msk [vmem:[#allocation4 + $0x4] sm:$0xf] %vm1831, %v2947
      %2956 = vst.msk [vmem:[#allocation4 + $0xc] sm:$0xf] %vm1831, %v2949
      %2957 = vst.msk [vmem:[#allocation4 + $0x14] sm:$0x3] %vm1834, %v2951
      %v2958 = vld [vmem:[#allocation4] sm:$0xff]
      %v2959 = vld [vmem:[#allocation4 + $0x8] sm:$0xff]
      %v2960 = vld [vmem:[#allocation4 + $0x10] sm:$0x33]
      %v2961 = vld [vmem:[%s4] sm:$0xf]
      %v2962 = vld [vmem:[%s4 + $0x4] sm:$0xf]
      %v2963 = vld [vmem:[%s4 + $0x8] sm:$0xf]
      %v2964 = vld [vmem:[%s4 + $0xc] sm:$0xf]
      %v2965 = vld [vmem:[%s4 + $0x10] sm:$0xf]
      %v2966 = vld [vmem:[%s4 + $0x14] sm:$0xf]
      %v2967 = vld [vmem:[%s4 + $0x18] sm:$0xf]
      %v2968 = vld [vmem:[%s4 + $0x1c] sm:$0xf]
      %v2969 = vld [vmem:[%s4 + $0x20] sm:$0xf]
      %v2970 = vld [vmem:[%s4 + $0x24] sm:$0xf]
      %v2971 = vld [vmem:[%s4 + $0x28] sm:$0xf]
      %v2972 = vld [vmem:[%s4 + $0x2c] sm:$0xf]
      %v2973 = vld [vmem:[%s4 + $0x30] sm:$0xf]
      %v2974 = vld [vmem:[%s4 + $0x34] sm:$0xf]
      %v2975 = vld [vmem:[%s4 + $0x38] sm:$0xf]
      %v2976 = vld [vmem:[%s4 + $0x3c] sm:$0xf]
      %v2977 = vld [vmem:[%s4 + $0x40] sm:$0xf]
      %v2978 = vld [vmem:[%s4 + $0x44] sm:$0xf]
      %v2979 = vld [vmem:[%s4 + $0x48] sm:$0xf]
      %v2980 = vld [vmem:[%s4 + $0x4c] sm:$0xf]
      %v2981 = vld [vmem:[%s4 + $0x50] sm:$0xf]
      %v2982 = vld [vmem:[%s4 + $0x54] sm:$0xf]
      %v2983 = vld [vmem:[%s4 + $0x58] sm:$0xf]
      %v2984 = vld [vmem:[%s4 + $0x5c] sm:$0xf]
      %v2985 = vld [vmem:[%s4 + $0x60] sm:$0xf]
      %v2986 = vld [vmem:[%s4 + $0x64] sm:$0xf]
      %v2987 = vld [vmem:[%s4 + $0x68] sm:$0xf]
      %v2988 = vld [vmem:[%s4 + $0x6c] sm:$0xf]
      %v2989 = vld [vmem:[%s4 + $0x70] sm:$0xf]
      %v2990 = vld [vmem:[%s4 + $0x74] sm:$0xf]
      %v2991 = vld [vmem:[%s4 + $0x78] sm:$0xf]
      %v2992 = vld [vmem:[%s4 + $0x7c] sm:$0xf]
      %v2993 = vld [vmem:[#allocation4] sm:$0xf]
      %v2994 = vld [vmem:[#allocation4 + $0x8] sm:$0xf]
      %v2995 = vld [vmem:[#allocation4 + $0x10] sm:$0x3]
      %v2996 = vld [vmem:[%s5] sm:$0xf]
      %v2997 = vld [vmem:[%s5 + $0x4] sm:$0xf]
      %v2998 = vld [vmem:[%s5 + $0x8] sm:$0xf]
      %v2999 = vld [vmem:[%s5 + $0xc] sm:$0xf]
      %v3000 = vld [vmem:[%s5 + $0x10] sm:$0xf]
      %v3001 = vld [vmem:[%s5 + $0x14] sm:$0xf]
      %v3002 = vld [vmem:[%s5 + $0x18] sm:$0xf]
      %v3003 = vld [vmem:[%s5 + $0x1c] sm:$0xf]
      %v3004 = vld [vmem:[%s5 + $0x20] sm:$0xf]
      %v3005 = vld [vmem:[%s5 + $0x24] sm:$0xf]
      %v3006 = vld [vmem:[%s5 + $0x28] sm:$0xf]
      %v3007 = vld [vmem:[%s5 + $0x2c] sm:$0xf]
      %v3008 = vld [vmem:[%s5 + $0x30] sm:$0xf]
      %v3009 = vld [vmem:[%s5 + $0x34] sm:$0xf]
      %v3010 = vld [vmem:[%s5 + $0x38] sm:$0xf]
      %v3011 = vld [vmem:[%s5 + $0x3c] sm:$0xf]
      %v3015 = vunpack.c.l.b16 %v2993
      %v3016 = vunpack.c.l.b16 %v2994
      %v3017 = vunpack.c.l.b16 %v2995
      %v3018 = vpack.c.b16 %v3016, %v3015
      %v3019 = vpack.c.b16 %v3017, %v3017
      %v3021 = vshrl.u32 %v3018, 16
      %v3023 = vshll.u32 %v3018, 16
      %v3025 = vrot.slane %v3023, 1
      %v3026 = vor.u32 %v3021, %v3025
      %v3028 = vshll.u32 %v3019, 16
      %v3030 = vrot.slane %v3028, 1
      %v3031 = vsel %vm1482, %v3026, %v3030
      %v3032 = vshrl.u32 %v3019, 16
      %v3034 = vor.u32 %v3032, %v3030
      %v3053 = vunpack.c.l.b16 %v2996
      %v3054 = vunpack.c.l.b16 %v2997
      %v3055 = vunpack.c.l.b16 %v2998
      %v3056 = vunpack.c.l.b16 %v2999
      %v3057 = vunpack.c.l.b16 %v3000
      %v3058 = vunpack.c.l.b16 %v3001
      %v3059 = vunpack.c.l.b16 %v3002
      %v3060 = vunpack.c.l.b16 %v3003
      %v3061 = vunpack.c.l.b16 %v3004
      %v3062 = vunpack.c.l.b16 %v3005
      %v3063 = vunpack.c.l.b16 %v3006
      %v3064 = vunpack.c.l.b16 %v3007
      %v3065 = vunpack.c.l.b16 %v3008
      %v3066 = vunpack.c.l.b16 %v3009
      %v3067 = vunpack.c.l.b16 %v3010
      %v3068 = vunpack.c.l.b16 %v3011
      %v3069 = vpack.c.b16 %v3054, %v3053
      %v3070 = vpack.c.b16 %v3056, %v3055
      %v3071 = vpack.c.b16 %v3058, %v3057
      %v3072 = vpack.c.b16 %v3060, %v3059
      %v3073 = vpack.c.b16 %v3062, %v3061
      %v3074 = vpack.c.b16 %v3064, %v3063
      %v3075 = vpack.c.b16 %v3066, %v3065
      %v3076 = vpack.c.b16 %v3068, %v3067
      %3085 = vmatprep.subr.bf16.mxu0 0
      %3086 = vmatpush1.bf16.msra.mxu0 %v3069
      %3087 = vmatprep.subr.bf16.mxu0 0
      %3088 = vmatpush1.bf16.msra.mxu0 %v3070
      %3089 = vmatprep.subr.bf16.mxu0 0
      %3090 = vmatpush1.bf16.msra.mxu0 %v3071
      %3091 = vmatprep.subr.bf16.mxu0 0
      %3092 = vmatpush1.bf16.msra.mxu0 %v3072
      %3093 = vmatprep.subr.bf16.mxu0 0
      %3094 = vmatpush1.bf16.msra.mxu0 %v3073
      %3095 = vmatprep.subr.bf16.mxu0 0
      %3096 = vmatpush1.bf16.msra.mxu0 %v3074
      %3097 = vmatprep.subr.bf16.mxu0 0
      %3098 = vmatpush1.bf16.msra.mxu0 %v3075
      %3099 = vmatprep.subr.bf16.mxu0 0
      %3100 = vmatpush1.bf16.msra.mxu0 %v3076
      %3101 = vmatprep.subr.bf16.mxu0 0
      %3102 = vmatpush1.bf16.msra.mxu0 0
      %3103 = vmatprep.subr.bf16.mxu0 0
      %3104 = vmatpush1.bf16.msra.mxu0 0
      %3105 = vmatprep.subr.bf16.mxu0 0
      %3106 = vmatpush1.bf16.msra.mxu0 0
      %3107 = vmatprep.subr.bf16.mxu0 0
      %3108 = vmatpush1.bf16.msra.mxu0 0
      %3109 = vmatprep.subr.bf16.mxu0 0
      %3110 = vmatpush1.bf16.msra.mxu0 0
      %3111 = vmatprep.subr.bf16.mxu0 0
      %3112 = vmatpush1.bf16.msra.mxu0 0
      %3113 = vmatprep.subr.bf16.mxu0 0
      %3114 = vmatpush1.bf16.msra.mxu0 0
      %3115 = vmatprep.subr.bf16.mxu0 0
      %3116 = vmatpush1.bf16.msra.mxu0 0
      %3117 = vmatprep.mubr.bf16.mxu0 0
      %3118 = vmatmul.mubr.bf16.gmra.mrb[0].mxu0 %v3031
      %v3119 = vpop.f32.mrb[0].mxu0
      %v3120 = vadd.f32 0.0, %v3119
      %v3121 = vpop.f32.mrb[0].mxu0
      %v3122 = vpop.f32.mrb[0].mxu0
      %v3123 = vadd.f32 0.0, %v3122
      %v3124 = vpop.f32.mrb[0].mxu0
      %3125 = vmatprep.mubr.bf16.mxu0 0
      %3126 = vmatmul.mubr.bf16.gmra.mrb[0].mxu0 %v3034
      %v3127 = vpop.f32.mrb[0].mxu0
      %v3128 = vadd.f32 0.0, %v3127
      %v3129 = vpop.f32.mrb[0].mxu0
      %v3130 = vpop.f32.mrb[0].mxu0
      %v3131 = vpop.f32.mrb[0].mxu0
      %3132 = vdwg.mxu0
      %v3136 = vunpack.c.l.b16 %v2958
      %v3137 = vunpack.c.h.b16 %v2958
      %v3138 = vunpack.c.l.b16 %v2959
      %v3139 = vunpack.c.h.b16 %v2959
      %v3140 = vunpack.c.l.b16 %v2960
      %v3141 = vunpack.c.h.b16 %v2960
      %v3142 = vpack.c.b16 %v3138, %v3136
      %v3143 = vpack.c.b16 %v3139, %v3137
      %v3144 = vpack.c.b16 %v3140, %v3140
      %v3145 = vpack.c.b16 %v3141, %v3141
      %v3182 = vunpack.c.l.b16 %v2961
      %v3183 = vunpack.c.l.b16 %v2962
      %v3184 = vunpack.c.l.b16 %v2963
      %v3185 = vunpack.c.l.b16 %v2964
      %v3186 = vunpack.c.l.b16 %v2965
      %v3187 = vunpack.c.l.b16 %v2966
      %v3188 = vunpack.c.l.b16 %v2967
      %v3189 = vunpack.c.l.b16 %v2968
      %v3190 = vunpack.c.l.b16 %v2969
      %v3191 = vunpack.c.l.b16 %v2970
      %v3192 = vunpack.c.l.b16 %v2971
      %v3193 = vunpack.c.l.b16 %v2972
      %v3194 = vunpack.c.l.b16 %v2973
      %v3195 = vunpack.c.l.b16 %v2974
      %v3196 = vunpack.c.l.b16 %v2975
      %v3197 = vunpack.c.l.b16 %v2976
      %v3198 = vunpack.c.l.b16 %v2977
      %v3199 = vunpack.c.l.b16 %v2978
      %v3200 = vunpack.c.l.b16 %v2979
      %v3201 = vunpack.c.l.b16 %v2980
      %v3202 = vunpack.c.l.b16 %v2981
      %v3203 = vunpack.c.l.b16 %v2982
      %v3204 = vunpack.c.l.b16 %v2983
      %v3205 = vunpack.c.l.b16 %v2984
      %v3206 = vunpack.c.l.b16 %v2985
      %v3207 = vunpack.c.l.b16 %v2986
      %v3208 = vunpack.c.l.b16 %v2987
      %v3209 = vunpack.c.l.b16 %v2988
      %v3210 = vunpack.c.l.b16 %v2989
      %v3211 = vunpack.c.l.b16 %v2990
      %v3212 = vunpack.c.l.b16 %v2991
      %v3213 = vunpack.c.l.b16 %v2992
      %v3214 = vpack.c.b16 %v3183, %v3182
      %v3215 = vpack.c.b16 %v3185, %v3184
      %v3216 = vpack.c.b16 %v3187, %v3186
      %v3217 = vpack.c.b16 %v3189, %v3188
      %v3218 = vpack.c.b16 %v3191, %v3190
      %v3219 = vpack.c.b16 %v3193, %v3192
      %v3220 = vpack.c.b16 %v3195, %v3194
      %v3221 = vpack.c.b16 %v3197, %v3196
      %v3222 = vpack.c.b16 %v3199, %v3198
      %v3223 = vpack.c.b16 %v3201, %v3200
      %v3224 = vpack.c.b16 %v3203, %v3202
      %v3225 = vpack.c.b16 %v3205, %v3204
      %v3226 = vpack.c.b16 %v3207, %v3206
      %v3227 = vpack.c.b16 %v3209, %v3208
      %v3228 = vpack.c.b16 %v3211, %v3210
      %v3229 = vpack.c.b16 %v3213, %v3212
      %3246 = vmatprep.subr.bf16.mxu0 0
      %3247 = vmatpush1.bf16.msra.mxu0 %v3214
      %3248 = vmatprep.subr.bf16.mxu0 0
      %3249 = vmatpush1.bf16.msra.mxu0 %v3215
      %3250 = vmatprep.subr.bf16.mxu0 0
      %3251 = vmatpush1.bf16.msra.mxu0 %v3216
      %3252 = vmatprep.subr.bf16.mxu0 0
      %3253 = vmatpush1.bf16.msra.mxu0 %v3217
      %3254 = vmatprep.subr.bf16.mxu0 0
      %3255 = vmatpush1.bf16.msra.mxu0 %v3218
      %3256 = vmatprep.subr.bf16.mxu0 0
      %3257 = vmatpush1.bf16.msra.mxu0 %v3219
      %3258 = vmatprep.subr.bf16.mxu0 0
      %3259 = vmatpush1.bf16.msra.mxu0 %v3220
      %3260 = vmatprep.subr.bf16.mxu0 0
      %3261 = vmatpush1.bf16.msra.mxu0 %v3221
      %3262 = vmatprep.subr.bf16.mxu0 0
      %3263 = vmatpush1.bf16.msra.mxu0 %v3222
      %3264 = vmatprep.subr.bf16.mxu0 0
      %3265 = vmatpush1.bf16.msra.mxu0 %v3223
      %3266 = vmatprep.subr.bf16.mxu0 0
      %3267 = vmatpush1.bf16.msra.mxu0 %v3224
      %3268 = vmatprep.subr.bf16.mxu0 0
      %3269 = vmatpush1.bf16.msra.mxu0 %v3225
      %3270 = vmatprep.subr.bf16.mxu0 0
      %3271 = vmatpush1.bf16.msra.mxu0 %v3226
      %3272 = vmatprep.subr.bf16.mxu0 0
      %3273 = vmatpush1.bf16.msra.mxu0 %v3227
      %3274 = vmatprep.subr.bf16.mxu0 0
      %3275 = vmatpush1.bf16.msra.mxu0 %v3228
      %3276 = vmatprep.subr.bf16.mxu0 0
      %3277 = vmatpush1.bf16.msra.mxu0 %v3229
      %3278 = vmatprep.mubr.bf16.mxu0 %v3143
      %3279 = vmatmul.mubr.bf16.gmra.mrb[0].mxu0 %v3142
      %v3280 = vpop.f32.mrb[0].mxu0
      %v3281 = vadd.f32 %v3120, %v3280
      %v3282 = vpop.f32.mrb[0].mxu0
      %v3283 = vpop.f32.mrb[0].mxu0
      %v3284 = vadd.f32 %v3123, %v3283
      %v3285 = vpop.f32.mrb[0].mxu0
      %3286 = vmatprep.mubr.bf16.mxu0 %v3145
      %3287 = vmatmul.mubr.bf16.gmra.mrb[0].mxu0 %v3144
      %v3288 = vpop.f32.mrb[0].mxu0
      %v3289 = vadd.f32 %v3128, %v3288
      %v3290 = vpop.f32.mrb[0].mxu0
      %v3291 = vpop.f32.mrb[0].mxu0
      %v3292 = vpop.f32.mrb[0].mxu0
      %3293 = vdwg.mxu0
      %v3294 = vld [vmem:[%s11] sm:$0x1]
      %v3296 = vlaneseq
      %v3297 = vshrl.u32 %v3296, 7
      %v3298 = vsub.s32 0, %v3297
      %v3299 = vrot.slane %v3294, %v3298
      %v3301 = vadd.f32 %v3281, %v3299
      %v3302 = vadd.f32 %v3284, %v3299
      %v3303 = vadd.f32 %v3289, %v3299
      %v3304 = vmax.f32 %v3301, 0.0
      %v3305 = vmax.f32 %v3302, 0.0
      %v3306 = vmax.f32 %v3303, 0.0
      %3307 = vst [vmem:[#allocation5] sm:$0xff] %v3304
      %3308 = vst [vmem:[#allocation5 + $0x8] sm:$0xff] %v3305
      %3309 = vst [vmem:[#allocation5 + $0x10] sm:$0x7] %v3306
      %v3310 = vld [vmem:[#allocation5] ss:$2 sm:$0xff]
      %v3311 = vld [vmem:[%s2239] ss:$2 sm:$0x3]
      %v3312 = vpack.c.bf16 %v3311, %v3310
      %3313 = vst [vmem:[#allocation6] sm:$0x1f] %v3312
      %v3314 = vld [vmem:[%s2243] ss:$2 sm:$0xff]
      %v3315 = vld [vmem:[%s2245] ss:$2 sm:$0x3]
      %v3316 = vpack.c.bf16 %v3315, %v3314
      %3317 = vst [vmem:[#allocation6 + $0x8] sm:$0x1f] %v3316
      %v3318 = vld [vmem:[#allocation6] sm:$0x1f]
      %v3319 = vld [vmem:[#allocation6 + $0x8] sm:$0x1f]
      %v3320 = vld [vmem:[%s6] sm:$0xf]
      %v3321 = vld [vmem:[%s6 + $0x4] sm:$0xf]
      %v3322 = vld [vmem:[%s6 + $0x8] sm:$0xf]
      %v3323 = vld [vmem:[%s6 + $0xc] sm:$0xf]
      %v3324 = vld [vmem:[%s6 + $0x10] sm:$0xf]
      %v3325 = vld [vmem:[%s6 + $0x14] sm:$0xf]
      %v3326 = vld [vmem:[%s6 + $0x18] sm:$0xf]
      %v3327 = vld [vmem:[%s6 + $0x1c] sm:$0xf]
      %v3328 = vld [vmem:[%s6 + $0x20] sm:$0xf]
      %v3329 = vld [vmem:[%s6 + $0x24] sm:$0xf]
      %v3330 = vld [vmem:[%s6 + $0x28] sm:$0xf]
      %v3331 = vld [vmem:[%s6 + $0x2c] sm:$0xf]
      %v3332 = vld [vmem:[%s6 + $0x30] sm:$0xf]
      %v3333 = vld [vmem:[%s6 + $0x34] sm:$0xf]
      %v3334 = vld [vmem:[%s6 + $0x38] sm:$0xf]
      %v3335 = vld [vmem:[%s6 + $0x3c] sm:$0xf]
      %v3336 = vld [vmem:[%s6 + $0x40] sm:$0xf]
      %v3337 = vld [vmem:[%s6 + $0x44] sm:$0xf]
      %v3338 = vld [vmem:[%s6 + $0x48] sm:$0xf]
      %v3339 = vld [vmem:[%s6 + $0x4c] sm:$0xf]
      %v3340 = vld [vmem:[%s6 + $0x50] sm:$0xf]
      %v3341 = vld [vmem:[%s6 + $0x54] sm:$0xf]
      %v3342 = vld [vmem:[%s6 + $0x58] sm:$0xf]
      %v3343 = vld [vmem:[%s6 + $0x5c] sm:$0xf]
      %v3344 = vld [vmem:[%s6 + $0x60] sm:$0xf]
      %v3345 = vld [vmem:[%s6 + $0x64] sm:$0xf]
      %v3346 = vld [vmem:[%s6 + $0x68] sm:$0xf]
      %v3347 = vld [vmem:[%s6 + $0x6c] sm:$0xf]
      %v3348 = vld [vmem:[%s6 + $0x70] sm:$0xf]
      %v3349 = vld [vmem:[%s6 + $0x74] sm:$0xf]
      %v3350 = vld [vmem:[%s6 + $0x78] sm:$0xf]
      %v3351 = vld [vmem:[%s6 + $0x7c] sm:$0xf]
      %v3352 = vld [vmem:[#allocation6] sm:$0x1f]
      %v3353 = vld [vmem:[%s7] sm:$0xf]
      %v3354 = vld [vmem:[%s7 + $0x4] sm:$0xf]
      %v3355 = vld [vmem:[%s7 + $0x8] sm:$0xf]
      %v3356 = vld [vmem:[%s7 + $0xc] sm:$0xf]
      %v3357 = vld [vmem:[%s7 + $0x10] sm:$0xf]
      %v3358 = vld [vmem:[%s7 + $0x14] sm:$0xf]
      %v3359 = vld [vmem:[%s7 + $0x18] sm:$0xf]
      %v3360 = vld [vmem:[%s7 + $0x1c] sm:$0xf]
      %v3361 = vld [vmem:[%s7 + $0x20] sm:$0xf]
      %v3362 = vld [vmem:[%s7 + $0x24] sm:$0xf]
      %v3363 = vld [vmem:[%s7 + $0x28] sm:$0xf]
      %v3364 = vld [vmem:[%s7 + $0x2c] sm:$0xf]
      %v3365 = vld [vmem:[%s7 + $0x30] sm:$0xf]
      %v3366 = vld [vmem:[%s7 + $0x34] sm:$0xf]
      %v3367 = vld [vmem:[%s7 + $0x38] sm:$0xf]
      %v3368 = vld [vmem:[%s7 + $0x3c] sm:$0xf]
      %v3370 = vshrl.u32 %v3352, 16
      %v3372 = vshll.u32 %v3352, 16
      %v3374 = vrot.slane %v3372, 1
      %v3375 = vor.u32 %v3370, %v3374
      %v3393 = vunpack.c.l.b16 %v3353
      %v3394 = vunpack.c.l.b16 %v3354
      %v3395 = vunpack.c.l.b16 %v3355
      %v3396 = vunpack.c.l.b16 %v3356
      %v3397 = vunpack.c.l.b16 %v3357
      %v3398 = vunpack.c.l.b16 %v3358
      %v3399 = vunpack.c.l.b16 %v3359
      %v3400 = vunpack.c.l.b16 %v3360
      %v3401 = vunpack.c.l.b16 %v3361
      %v3402 = vunpack.c.l.b16 %v3362
      %v3403 = vunpack.c.l.b16 %v3363
      %v3404 = vunpack.c.l.b16 %v3364
      %v3405 = vunpack.c.l.b16 %v3365
      %v3406 = vunpack.c.l.b16 %v3366
      %v3407 = vunpack.c.l.b16 %v3367
      %v3408 = vunpack.c.l.b16 %v3368
      %v3409 = vpack.c.b16 %v3394, %v3393
      %v3410 = vpack.c.b16 %v3396, %v3395
      %v3411 = vpack.c.b16 %v3398, %v3397
      %v3412 = vpack.c.b16 %v3400, %v3399
      %v3413 = vpack.c.b16 %v3402, %v3401
      %v3414 = vpack.c.b16 %v3404, %v3403
      %v3415 = vpack.c.b16 %v3406, %v3405
      %v3416 = vpack.c.b16 %v3408, %v3407
      %3425 = vmatprep.subr.bf16.mxu0 0
      %3426 = vmatpush1.bf16.msra.mxu0 %v3409
      %3427 = vmatprep.subr.bf16.mxu0 0
      %3428 = vmatpush1.bf16.msra.mxu0 %v3410
      %3429 = vmatprep.subr.bf16.mxu0 0
      %3430 = vmatpush1.bf16.msra.mxu0 %v3411
      %3431 = vmatprep.subr.bf16.mxu0 0
      %3432 = vmatpush1.bf16.msra.mxu0 %v3412
      %3433 = vmatprep.subr.bf16.mxu0 0
      %3434 = vmatpush1.bf16.msra.mxu0 %v3413
      %3435 = vmatprep.subr.bf16.mxu0 0
      %3436 = vmatpush1.bf16.msra.mxu0 %v3414
      %3437 = vmatprep.subr.bf16.mxu0 0
      %3438 = vmatpush1.bf16.msra.mxu0 %v3415
      %3439 = vmatprep.subr.bf16.mxu0 0
      %3440 = vmatpush1.bf16.msra.mxu0 %v3416
      %3441 = vmatprep.subr.bf16.mxu0 0
      %3442 = vmatpush1.bf16.msra.mxu0 0
      %3443 = vmatprep.subr.bf16.mxu0 0
      %3444 = vmatpush1.bf16.msra.mxu0 0
      %3445 = vmatprep.subr.bf16.mxu0 0
      %3446 = vmatpush1.bf16.msra.mxu0 0
      %3447 = vmatprep.subr.bf16.mxu0 0
      %3448 = vmatpush1.bf16.msra.mxu0 0
      %3449 = vmatprep.subr.bf16.mxu0 0
      %3450 = vmatpush1.bf16.msra.mxu0 0
      %3451 = vmatprep.subr.bf16.mxu0 0
      %3452 = vmatpush1.bf16.msra.mxu0 0
      %3453 = vmatprep.subr.bf16.mxu0 0
      %3454 = vmatpush1.bf16.msra.mxu0 0
      %3455 = vmatprep.subr.bf16.mxu0 0
      %3456 = vmatpush1.bf16.msra.mxu0 0
      %3457 = vmatprep.mubr.bf16.mxu0 0
      %3458 = vmatmul.mubr.bf16.gmra.mrb[0].mxu0 %v3375
      %v3459 = vpop.f32.mrb[0].mxu0
      %v3460 = vadd.f32 0.0, %v3459
      %v3461 = vpop.f32.mrb[0].mxu0
      %v3462 = vpop.f32.mrb[0].mxu0
      %v3463 = vadd.f32 0.0, %v3462
      %v3464 = vpop.f32.mrb[0].mxu0
      %3465 = vdwg.mxu0
      %v3498 = vunpack.c.l.b16 %v3320
      %v3499 = vunpack.c.l.b16 %v3321
      %v3500 = vunpack.c.l.b16 %v3322
      %v3501 = vunpack.c.l.b16 %v3323
      %v3502 = vunpack.c.l.b16 %v3324
      %v3503 = vunpack.c.l.b16 %v3325
      %v3504 = vunpack.c.l.b16 %v3326
      %v3505 = vunpack.c.l.b16 %v3327
      %v3506 = vunpack.c.l.b16 %v3328
      %v3507 = vunpack.c.l.b16 %v3329
      %v3508 = vunpack.c.l.b16 %v3330
      %v3509 = vunpack.c.l.b16 %v3331
      %v3510 = vunpack.c.l.b16 %v3332
      %v3511 = vunpack.c.l.b16 %v3333
      %v3512 = vunpack.c.l.b16 %v3334
      %v3513 = vunpack.c.l.b16 %v3335
      %v3514 = vunpack.c.l.b16 %v3336
      %v3515 = vunpack.c.l.b16 %v3337
      %v3516 = vunpack.c.l.b16 %v3338
      %v3517 = vunpack.c.l.b16 %v3339
      %v3518 = vunpack.c.l.b16 %v3340
      %v3519 = vunpack.c.l.b16 %v3341
      %v3520 = vunpack.c.l.b16 %v3342
      %v3521 = vunpack.c.l.b16 %v3343
      %v3522 = vunpack.c.l.b16 %v3344
      %v3523 = vunpack.c.l.b16 %v3345
      %v3524 = vunpack.c.l.b16 %v3346
      %v3525 = vunpack.c.l.b16 %v3347
      %v3526 = vunpack.c.l.b16 %v3348
      %v3527 = vunpack.c.l.b16 %v3349
      %v3528 = vunpack.c.l.b16 %v3350
      %v3529 = vunpack.c.l.b16 %v3351
      %v3530 = vpack.c.b16 %v3499, %v3498
      %v3531 = vpack.c.b16 %v3501, %v3500
      %v3532 = vpack.c.b16 %v3503, %v3502
      %v3533 = vpack.c.b16 %v3505, %v3504
      %v3534 = vpack.c.b16 %v3507, %v3506
      %v3535 = vpack.c.b16 %v3509, %v3508
      %v3536 = vpack.c.b16 %v3511, %v3510
      %v3537 = vpack.c.b16 %v3513, %v3512
      %v3538 = vpack.c.b16 %v3515, %v3514
      %v3539 = vpack.c.b16 %v3517, %v3516
      %v3540 = vpack.c.b16 %v3519, %v3518
      %v3541 = vpack.c.b16 %v3521, %v3520
      %v3542 = vpack.c.b16 %v3523, %v3522
      %v3543 = vpack.c.b16 %v3525, %v3524
      %v3544 = vpack.c.b16 %v3527, %v3526
      %v3545 = vpack.c.b16 %v3529, %v3528
      %3562 = vmatprep.subr.bf16.mxu0 0
      %3563 = vmatpush1.bf16.msra.mxu0 %v3530
      %3564 = vmatprep.subr.bf16.mxu0 0
      %3565 = vmatpush1.bf16.msra.mxu0 %v3531
      %3566 = vmatprep.subr.bf16.mxu0 0
      %3567 = vmatpush1.bf16.msra.mxu0 %v3532
      %3568 = vmatprep.subr.bf16.mxu0 0
      %3569 = vmatpush1.bf16.msra.mxu0 %v3533
      %3570 = vmatprep.subr.bf16.mxu0 0
      %3571 = vmatpush1.bf16.msra.mxu0 %v3534
      %3572 = vmatprep.subr.bf16.mxu0 0
      %3573 = vmatpush1.bf16.msra.mxu0 %v3535
      %3574 = vmatprep.subr.bf16.mxu0 0
      %3575 = vmatpush1.bf16.msra.mxu0 %v3536
      %3576 = vmatprep.subr.bf16.mxu0 0
      %3577 = vmatpush1.bf16.msra.mxu0 %v3537
      %3578 = vmatprep.subr.bf16.mxu0 0
      %3579 = vmatpush1.bf16.msra.mxu0 %v3538
      %3580 = vmatprep.subr.bf16.mxu0 0
      %3581 = vmatpush1.bf16.msra.mxu0 %v3539
      %3582 = vmatprep.subr.bf16.mxu0 0
      %3583 = vmatpush1.bf16.msra.mxu0 %v3540
      %3584 = vmatprep.subr.bf16.mxu0 0
      %3585 = vmatpush1.bf16.msra.mxu0 %v3541
      %3586 = vmatprep.subr.bf16.mxu0 0
      %3587 = vmatpush1.bf16.msra.mxu0 %v3542
      %3588 = vmatprep.subr.bf16.mxu0 0
      %3589 = vmatpush1.bf16.msra.mxu0 %v3543
      %3590 = vmatprep.subr.bf16.mxu0 0
      %3591 = vmatpush1.bf16.msra.mxu0 %v3544
      %3592 = vmatprep.subr.bf16.mxu0 0
      %3593 = vmatpush1.bf16.msra.mxu0 %v3545
      %3594 = vmatprep.mubr.bf16.mxu0 %v3319
      %3595 = vmatmul.mubr.bf16.gmra.mrb[0].mxu0 %v3318
      %v3596 = vpop.f32.mrb[0].mxu0
      %v3597 = vadd.f32 %v3460, %v3596
      %v3598 = vpop.f32.mrb[0].mxu0
      %v3599 = vpop.f32.mrb[0].mxu0
      %v3600 = vadd.f32 %v3463, %v3599
      %v3601 = vpop.f32.mrb[0].mxu0
      %3602 = vdwg.mxu0
      %v3603 = vld [vmem:[%s12] sm:$0x1]
      %v3605 = vlaneseq
      %v3606 = vshrl.u32 %v3605, 7
      %v3607 = vsub.s32 0, %v3606
      %v3608 = vrot.slane %v3603, %v3607
      %v3610 = vadd.f32 %v3597, %v3608
      %v3611 = vadd.f32 %v3600, %v3608
      %v3612 = vmax.f32 %v3610, 0.0
      %v3613 = vmax.f32 %v3611, 0.0
      %3614 = vst [vmem:[#allocation7 + $0x10] sm:$0xff] %v3612
      %3615 = vst [vmem:[#allocation7 + $0x18] sm:$0x1] %v3613
      %v3616 = vld [vmem:[#allocation2 + $0x50] sm:$0xff]
      %v3617 = vld [vmem:[#allocation2 + $0x58] sm:$0xff]
      %v3618 = vld [vmem:[#allocation2 + $0x60] sm:$0xff]
      %v3619 = vld [vmem:[#allocation2 + $0x68] sm:$0xff]
      %v3620 = vld [vmem:[#allocation2 + $0x70] sm:$0x7f]
      %v3621 = vld [vmem:[%s2] sm:$0xf]
      %v3622 = vld [vmem:[%s2 + $0x4] sm:$0xf]
      %v3623 = vld [vmem:[%s2 + $0x8] sm:$0xf]
      %v3624 = vld [vmem:[%s2 + $0xc] sm:$0xf]
      %v3625 = vld [vmem:[%s2 + $0x10] sm:$0xf]
      %v3626 = vld [vmem:[%s2 + $0x14] sm:$0xf]
      %v3627 = vld [vmem:[%s2 + $0x18] sm:$0xf]
      %v3628 = vld [vmem:[%s2 + $0x1c] sm:$0xf]
      %v3629 = vld [vmem:[%s2 + $0x20] sm:$0xf]
      %v3630 = vld [vmem:[%s2 + $0x24] sm:$0xf]
      %v3631 = vld [vmem:[%s2 + $0x28] sm:$0xf]
      %v3632 = vld [vmem:[%s2 + $0x2c] sm:$0xf]
      %v3633 = vld [vmem:[%s2 + $0x30] sm:$0xf]
      %v3634 = vld [vmem:[%s2 + $0x34] sm:$0xf]
      %v3635 = vld [vmem:[%s2 + $0x38] sm:$0xf]
      %v3636 = vld [vmem:[%s2 + $0x3c] sm:$0xf]
      %v3637 = vld [vmem:[#allocation2 + $0x70] sm:$0xff]
      %v3638 = vld [vmem:[%s3] sm:$0xf]
      %v3639 = vld [vmem:[%s3 + $0x4] sm:$0xf]
      %v3640 = vld [vmem:[%s3 + $0x8] sm:$0xf]
      %v3641 = vld [vmem:[%s3 + $0xc] sm:$0xf]
      %v3643 = vshrl.u32 %v3616, 16
      %v3645 = vshll.u32 %v3616, 16
      %v3647 = vrot.slane %v3645, 1
      %v3648 = vor.u32 %v3643, %v3647
      %v3650 = vshll.u32 %v3617, 16
      %v3652 = vrot.slane %v3650, 1
      %v3653 = vsel %vm1482, %v3648, %v3652
      %v3654 = vshrl.u32 %v3617, 16
      %v3656 = vor.u32 %v3654, %v3652
      %v3658 = vshll.u32 %v3618, 16
      %v3660 = vrot.slane %v3658, 1
      %v3661 = vsel %vm1482, %v3656, %v3660
      %v3662 = vshrl.u32 %v3618, 16
      %v3664 = vor.u32 %v3662, %v3660
      %v3666 = vshll.u32 %v3619, 16
      %v3668 = vrot.slane %v3666, 1
      %v3669 = vsel %vm1482, %v3664, %v3668
      %v3670 = vshrl.u32 %v3619, 16
      %v3672 = vor.u32 %v3670, %v3668
      %v3674 = vshll.u32 %v3637, 16
      %v3676 = vrot.slane %v3674, 1
      %v3677 = vsel %vm1482, %v3672, %v3676
      %v3678 = vshrl.u32 %v3637, 16
      %v3680 = vor.u32 %v3678, %v3676
      %v3685 = vunpack.c.l.b16 %v3638
      %v3686 = vunpack.c.l.b16 %v3639
      %v3687 = vunpack.c.l.b16 %v3640
      %v3688 = vunpack.c.l.b16 %v3641
      %v3689 = vpack.c.b16 %v3686, %v3685
      %v3690 = vpack.c.b16 %v3688, %v3687
      %v3694 = vsel %vm1534, %v3653, 0
      %v3697 = vsel %vm1534, %v3661, 0
      %v3700 = vsel %vm1534, %v3669, 0
      %v3703 = vsel %vm1534, %v3677, 0
      %v3706 = vsel %vm1534, %v3680, 0
      %3708 = vmatprep.subr.bf16.mxu0 0
      %3709 = vmatpush1.bf16.msra.mxu0 %v3689
      %3710 = vmatprep.subr.bf16.mxu0 0
      %3711 = vmatpush1.bf16.msra.mxu0 %v3690
      %3712 = vmatprep.subr.bf16.mxu0 0
      %3713 = vmatpush1.bf16.msra.mxu0 0
      %3714 = vmatprep.subr.bf16.mxu0 0
      %3715 = vmatpush1.bf16.msra.mxu0 0
      %3716 = vmatprep.subr.bf16.mxu0 0
      %3717 = vmatpush1.bf16.msra.mxu0 0
      %3718 = vmatprep.subr.bf16.mxu0 0
      %3719 = vmatpush1.bf16.msra.mxu0 0
      %3720 = vmatprep.subr.bf16.mxu0 0
      %3721 = vmatpush1.bf16.msra.mxu0 0
      %3722 = vmatprep.subr.bf16.mxu0 0
      %3723 = vmatpush1.bf16.msra.mxu0 0
      %3724 = vmatprep.subr.bf16.mxu0 0
      %3725 = vmatpush1.bf16.msra.mxu0 0
      %3726 = vmatprep.subr.bf16.mxu0 0
      %3727 = vmatpush1.bf16.msra.mxu0 0
      %3728 = vmatprep.subr.bf16.mxu0 0
      %3729 = vmatpush1.bf16.msra.mxu0 0
      %3730 = vmatprep.subr.bf16.mxu0 0
      %3731 = vmatpush1.bf16.msra.mxu0 0
      %3732 = vmatprep.subr.bf16.mxu0 0
      %3733 = vmatpush1.bf16.msra.mxu0 0
      %3734 = vmatprep.subr.bf16.mxu0 0
      %3735 = vmatpush1.bf16.msra.mxu0 0
      %3736 = vmatprep.subr.bf16.mxu0 0
      %3737 = vmatpush1.bf16.msra.mxu0 0
      %3738 = vmatprep.subr.bf16.mxu0 0
      %3739 = vmatpush1.bf16.msra.mxu0 0
      %3740 = vmatprep.mubr.bf16.mxu0 0
      %3741 = vmatmul.mubr.bf16.gmra.mrb[0].mxu0 %v3694
      %v3742 = vpop.f32.mrb[0].mxu0
      %v3743 = vadd.f32 0.0, %v3742
      %v3744 = vpop.f32.mrb[0].mxu0
      %v3745 = vpop.f32.mrb[0].mxu0
      %v3746 = vadd.f32 0.0, %v3745
      %v3747 = vpop.f32.mrb[0].mxu0
      %3748 = vmatprep.mubr.bf16.mxu0 0
      %3749 = vmatmul.mubr.bf16.gmra.mrb[0].mxu0 %v3697
      %v3750 = vpop.f32.mrb[0].mxu0
      %v3751 = vadd.f32 0.0, %v3750
      %v3752 = vpop.f32.mrb[0].mxu0
      %v3753 = vpop.f32.mrb[0].mxu0
      %v3754 = vadd.f32 0.0, %v3753
      %v3755 = vpop.f32.mrb[0].mxu0
      %3756 = vmatprep.mubr.bf16.mxu0 0
      %3757 = vmatmul.mubr.bf16.gmra.mrb[0].mxu0 %v3700
      %v3758 = vpop.f32.mrb[0].mxu0
      %v3759 = vadd.f32 0.0, %v3758
      %v3760 = vpop.f32.mrb[0].mxu0
      %v3761 = vpop.f32.mrb[0].mxu0
      %v3762 = vadd.f32 0.0, %v3761
      %v3763 = vpop.f32.mrb[0].mxu0
      %3764 = vmatprep.mubr.bf16.mxu0 0
      %3765 = vmatmul.mubr.bf16.gmra.mrb[0].mxu0 %v3703
      %v3766 = vpop.f32.mrb[0].mxu0
      %v3767 = vadd.f32 0.0, %v3766
      %v3768 = vpop.f32.mrb[0].mxu0
      %v3769 = vpop.f32.mrb[0].mxu0
      %v3770 = vadd.f32 0.0, %v3769
      %v3771 = vpop.f32.mrb[0].mxu0
      %3772 = vmatprep.mubr.bf16.mxu0 0
      %3773 = vmatmul.mubr.bf16.gmra.mrb[0].mxu0 %v3706
      %v3774 = vpop.f32.mrb[0].mxu0
      %v3775 = vadd.f32 0.0, %v3774
      %v3776 = vpop.f32.mrb[0].mxu0
      %v3777 = vpop.f32.mrb[0].mxu0
      %v3778 = vadd.f32 0.0, %v3777
      %v3779 = vpop.f32.mrb[0].mxu0
      %3780 = vdwg.mxu0
      %v3797 = vunpack.c.l.b16 %v3621
      %v3798 = vunpack.c.l.b16 %v3622
      %v3799 = vunpack.c.l.b16 %v3623
      %v3800 = vunpack.c.l.b16 %v3624
      %v3801 = vunpack.c.l.b16 %v3625
      %v3802 = vunpack.c.l.b16 %v3626
      %v3803 = vunpack.c.l.b16 %v3627
      %v3804 = vunpack.c.l.b16 %v3628
      %v3805 = vunpack.c.l.b16 %v3629
      %v3806 = vunpack.c.l.b16 %v3630
      %v3807 = vunpack.c.l.b16 %v3631
      %v3808 = vunpack.c.l.b16 %v3632
      %v3809 = vunpack.c.l.b16 %v3633
      %v3810 = vunpack.c.l.b16 %v3634
      %v3811 = vunpack.c.l.b16 %v3635
      %v3812 = vunpack.c.l.b16 %v3636
      %v3813 = vpack.c.b16 %v3798, %v3797
      %v3814 = vpack.c.b16 %v3800, %v3799
      %v3815 = vpack.c.b16 %v3802, %v3801
      %v3816 = vpack.c.b16 %v3804, %v3803
      %v3817 = vpack.c.b16 %v3806, %v3805
      %v3818 = vpack.c.b16 %v3808, %v3807
      %v3819 = vpack.c.b16 %v3810, %v3809
      %v3820 = vpack.c.b16 %v3812, %v3811
      %3829 = vmatprep.subr.bf16.mxu0 0
      %3830 = vmatpush1.bf16.msra.mxu0 %v3813
      %3831 = vmatprep.subr.bf16.mxu0 0
      %3832 = vmatpush1.bf16.msra.mxu0 %v3814
      %3833 = vmatprep.subr.bf16.mxu0 0
      %3834 = vmatpush1.bf16.msra.mxu0 %v3815
      %3835 = vmatprep.subr.bf16.mxu0 0
      %3836 = vmatpush1.bf16.msra.mxu0 %v3816
      %3837 = vmatprep.subr.bf16.mxu0 0
      %3838 = vmatpush1.bf16.msra.mxu0 %v3817
      %3839 = vmatprep.subr.bf16.mxu0 0
      %3840 = vmatpush1.bf16.msra.mxu0 %v3818
      %3841 = vmatprep.subr.bf16.mxu0 0
      %3842 = vmatpush1.bf16.msra.mxu0 %v3819
      %3843 = vmatprep.subr.bf16.mxu0 0
      %3844 = vmatpush1.bf16.msra.mxu0 %v3820
      %3845 = vmatprep.subr.bf16.mxu0 0
      %3846 = vmatpush1.bf16.msra.mxu0 0
      %3847 = vmatprep.subr.bf16.mxu0 0
      %3848 = vmatpush1.bf16.msra.mxu0 0
      %3849 = vmatprep.subr.bf16.mxu0 0
      %3850 = vmatpush1.bf16.msra.mxu0 0
      %3851 = vmatprep.subr.bf16.mxu0 0
      %3852 = vmatpush1.bf16.msra.mxu0 0
      %3853 = vmatprep.subr.bf16.mxu0 0
      %3854 = vmatpush1.bf16.msra.mxu0 0
      %3855 = vmatprep.subr.bf16.mxu0 0
      %3856 = vmatpush1.bf16.msra.mxu0 0
      %3857 = vmatprep.subr.bf16.mxu0 0
      %3858 = vmatpush1.bf16.msra.mxu0 0
      %3859 = vmatprep.subr.bf16.mxu0 0
      %3860 = vmatpush1.bf16.msra.mxu0 0
      %3861 = vmatprep.mubr.bf16.mxu0 0
      %3862 = vmatmul.mubr.bf16.gmra.mrb[0].mxu0 %v3616
      %v3863 = vpop.f32.mrb[0].mxu0
      %v3864 = vadd.f32 %v3743, %v3863
      %v3865 = vpop.f32.mrb[0].mxu0
      %v3866 = vpop.f32.mrb[0].mxu0
      %v3867 = vadd.f32 %v3746, %v3866
      %v3868 = vpop.f32.mrb[0].mxu0
      %3869 = vmatprep.mubr.bf16.mxu0 0
      %3870 = vmatmul.mubr.bf16.gmra.mrb[0].mxu0 %v3617
      %v3871 = vpop.f32.mrb[0].mxu0
      %v3872 = vadd.f32 %v3751, %v3871
      %v3873 = vpop.f32.mrb[0].mxu0
      %v3874 = vpop.f32.mrb[0].mxu0
      %v3875 = vadd.f32 %v3754, %v3874
      %v3876 = vpop.f32.mrb[0].mxu0
      %3877 = vmatprep.mubr.bf16.mxu0 0
      %3878 = vmatmul.mubr.bf16.gmra.mrb[0].mxu0 %v3618
      %v3879 = vpop.f32.mrb[0].mxu0
      %v3880 = vadd.f32 %v3759, %v3879
      %v3881 = vpop.f32.mrb[0].mxu0
      %v3882 = vpop.f32.mrb[0].mxu0
      %v3883 = vadd.f32 %v3762, %v3882
      %v3884 = vpop.f32.mrb[0].mxu0
      %3885 = vmatprep.mubr.bf16.mxu0 0
      %3886 = vmatmul.mubr.bf16.gmra.mrb[0].mxu0 %v3619
      %v3887 = vpop.f32.mrb[0].mxu0
      %v3888 = vadd.f32 %v3767, %v3887
      %v3889 = vpop.f32.mrb[0].mxu0
      %v3890 = vpop.f32.mrb[0].mxu0
      %v3891 = vadd.f32 %v3770, %v3890
      %v3892 = vpop.f32.mrb[0].mxu0
      %3893 = vmatprep.mubr.bf16.mxu0 0
      %3894 = vmatmul.mubr.bf16.gmra.mrb[0].mxu0 %v3620
      %v3895 = vpop.f32.mrb[0].mxu0
      %v3896 = vadd.f32 %v3775, %v3895
      %v3897 = vpop.f32.mrb[0].mxu0
      %v3898 = vpop.f32.mrb[0].mxu0
      %v3899 = vadd.f32 %v3778, %v3898
      %v3900 = vpop.f32.mrb[0].mxu0
      %3901 = vdwg.mxu0
      %v3902 = vld [vmem:[%s10] sm:$0x1]
      %v3904 = vlaneseq
      %v3905 = vshrl.u32 %v3904, 7
      %v3906 = vsub.s32 0, %v3905
      %v3907 = vrot.slane %v3902, %v3906
      %v3909 = vadd.f32 %v3864, %v3907
      %v3910 = vadd.f32 %v3867, %v3907
      %v3911 = vadd.f32 %v3872, %v3907
      %v3912 = vadd.f32 %v3875, %v3907
      %v3913 = vadd.f32 %v3880, %v3907
      %v3914 = vadd.f32 %v3883, %v3907
      %v3915 = vadd.f32 %v3888, %v3907
      %v3916 = vadd.f32 %v3891, %v3907
      %v3917 = vadd.f32 %v3896, %v3907
      %v3918 = vadd.f32 %v3899, %v3907
      %v3919 = vmax.f32 %v3909, 0.0
      %v3920 = vmax.f32 %v3910, 0.0
      %v3921 = vmax.f32 %v3911, 0.0
      %v3922 = vmax.f32 %v3912, 0.0
      %v3923 = vmax.f32 %v3913, 0.0
      %v3924 = vmax.f32 %v3914, 0.0
      %v3925 = vmax.f32 %v3915, 0.0
      %v3926 = vmax.f32 %v3916, 0.0
      %v3927 = vmax.f32 %v3917, 0.0
      %v3928 = vmax.f32 %v3918, 0.0
      %3929 = vst.msk [vmem:[#allocation3] sm:$0xff] %vm1771, %v3919
      %3930 = vst.msk [vmem:[#allocation3 + $0x8] sm:$0xff] %vm1771, %v3920
      %3931 = vst.msk [vmem:[#allocation3 + $0x10] sm:$0xff] %vm1771, %v3921
      %3932 = vst.msk [vmem:[#allocation3 + $0x18] sm:$0xff] %vm1771, %v3922
      %3933 = vst.msk [vmem:[#allocation3 + $0x20] sm:$0xff] %vm1771, %v3923
      %3934 = vst.msk [vmem:[#allocation3 + $0x28] sm:$0xff] %vm1771, %v3924
      %3935 = vst.msk [vmem:[#allocation3 + $0x30] sm:$0xff] %vm1771, %v3925
      %3936 = vst.msk [vmem:[#allocation3 + $0x38] sm:$0xff] %vm1771, %v3926
      %3937 = vst.msk [vmem:[#allocation3 + $0x40] sm:$0xff] %vm1771, %v3927
      %3938 = vst.msk [vmem:[#allocation3 + $0x48] sm:$0x3f] %vm1781, %v3928
      %v3939 = vld [vmem:[#allocation3] ss:$4 sm:$0xff]
      %v3940 = vld [vmem:[%s1784] ss:$4 sm:$0xff]
      %v3941 = vld [vmem:[%s1786] ss:$4 sm:$0xf]
      %v3942 = vpack.c.bf16 %v3940, %v3939
      %v3943 = vpack.c.bf16 %v3941, %v3941
      %v3946 = vunpack.c.l.b16 %v3942
      %v3947 = vunpack.c.h.b16 %v3942
      %v3948 = vunpack.c.l.b16 %v3943
      %v3949 = vpack.c.b16 %v3946, %v3946
      %v3950 = vpack.c.b16 %v3947, %v3947
      %v3951 = vpack.c.b16 %v3948, %v3948
      %3955 = vst.msk [vmem:[#allocation4] sm:$0xf] %vm1801, %v3949
      %3956 = vst.msk [vmem:[#allocation4 + $0x8] sm:$0xf] %vm1801, %v3950
      %3957 = vst.msk [vmem:[#allocation4 + $0x10] sm:$0x3] %vm1804, %v3951
      %v3958 = vld [vmem:[%s1806] ss:$4 sm:$0xff]
      %v3959 = vld [vmem:[%s1808] ss:$4 sm:$0xff]
      %v3960 = vld [vmem:[%s1810] ss:$4 sm:$0xf]
      %v3961 = vpack.c.bf16 %v3959, %v3958
      %v3962 = vpack.c.bf16 %v3960, %v3960
      %v3965 = vunpack.c.l.b16 %v3961
      %v3966 = vunpack.c.h.b16 %v3961
      %v3967 = vunpack.c.l.b16 %v3962
      %v3968 = vpack.c.b16 %v3965, %v3965
      %v3969 = vpack.c.b16 %v3966, %v3966
      %v3970 = vpack.c.b16 %v3967, %v3967
      %3971 = vrot.lane.b32.xlu0 %v3968, 64
      %v3972 = vpop.permute.xlu0 %3971
      %3973 = vrot.lane.b32.xlu0 %v3969, 64
      %v3974 = vpop.permute.xlu0 %3973
      %3975 = vrot.lane.b32.xlu0 %v3970, 64
      %v3976 = vpop.permute.xlu0 %3975
      %3980 = vst.msk [vmem:[#allocation4] sm:$0xf] %vm1831, %v3972
      %3981 = vst.msk [vmem:[#allocation4 + $0x8] sm:$0xf] %vm1831, %v3974
      %3982 = vst.msk [vmem:[#allocation4 + $0x10] sm:$0x3] %vm1834, %v3976
      %v3983 = vld [vmem:[%s1836] ss:$4 sm:$0xff]
      %v3984 = vld [vmem:[%s1838] ss:$4 sm:$0xff]
      %v3985 = vld [vmem:[%s1840] ss:$4 sm:$0xf]
      %v3986 = vpack.c.bf16 %v3984, %v3983
      %v3987 = vpack.c.bf16 %v3985, %v3985
      %v3990 = vunpack.c.l.b16 %v3986
      %v3991 = vunpack.c.h.b16 %v3986
      %v3992 = vunpack.c.l.b16 %v3987
      %v3993 = vpack.c.b16 %v3990, %v3990
      %v3994 = vpack.c.b16 %v3991, %v3991
      %v3995 = vpack.c.b16 %v3992, %v3992
      %3999 = vst.msk [vmem:[#allocation4 + $0x4] sm:$0xf] %vm1801, %v3993
      %4000 = vst.msk [vmem:[#allocation4 + $0xc] sm:$0xf] %vm1801, %v3994
      %4001 = vst.msk [vmem:[#allocation4 + $0x14] sm:$0x3] %vm1804, %v3995
      %v4002 = vld [vmem:[%s1858] ss:$4 sm:$0xff]
      %v4003 = vld [vmem:[%s1860] ss:$4 sm:$0xff]
      %v4004 = vld [vmem:[%s1862] ss:$4 sm:$0xf]
      %v4005 = vpack.c.bf16 %v4003, %v4002
      %v4006 = vpack.c.bf16 %v4004, %v4004
      %v4009 = vunpack.c.l.b16 %v4005
      %v4010 = vunpack.c.h.b16 %v4005
      %v4011 = vunpack.c.l.b16 %v4006
      %v4012 = vpack.c.b16 %v4009, %v4009
      %v4013 = vpack.c.b16 %v4010, %v4010
      %v4014 = vpack.c.b16 %v4011, %v4011
      %4015 = vrot.lane.b32.xlu0 %v4012, 64
      %v4016 = vpop.permute.xlu0 %4015
      %4017 = vrot.lane.b32.xlu0 %v4013, 64
      %v4018 = vpop.permute.xlu0 %4017
      %4019 = vrot.lane.b32.xlu0 %v4014, 64
      %v4020 = vpop.permute.xlu0 %4019
      %4024 = vst.msk [vmem:[#allocation4 + $0x4] sm:$0xf] %vm1831, %v4016
      %4025 = vst.msk [vmem:[#allocation4 + $0xc] sm:$0xf] %vm1831, %v4018
      %4026 = vst.msk [vmem:[#allocation4 + $0x14] sm:$0x3] %vm1834, %v4020
      %v4027 = vld [vmem:[#allocation4] sm:$0xff]
      %v4028 = vld [vmem:[#allocation4 + $0x8] sm:$0xff]
      %v4029 = vld [vmem:[#allocation4 + $0x10] sm:$0x33]
      %v4030 = vld [vmem:[%s4] sm:$0xf]
      %v4031 = vld [vmem:[%s4 + $0x4] sm:$0xf]
      %v4032 = vld [vmem:[%s4 + $0x8] sm:$0xf]
      %v4033 = vld [vmem:[%s4 + $0xc] sm:$0xf]
      %v4034 = vld [vmem:[%s4 + $0x10] sm:$0xf]
      %v4035 = vld [vmem:[%s4 + $0x14] sm:$0xf]
      %v4036 = vld [vmem:[%s4 + $0x18] sm:$0xf]
      %v4037 = vld [vmem:[%s4 + $0x1c] sm:$0xf]
      %v4038 = vld [vmem:[%s4 + $0x20] sm:$0xf]
      %v4039 = vld [vmem:[%s4 + $0x24] sm:$0xf]
      %v4040 = vld [vmem:[%s4 + $0x28] sm:$0xf]
      %v4041 = vld [vmem:[%s4 + $0x2c] sm:$0xf]
      %v4042 = vld [vmem:[%s4 + $0x30] sm:$0xf]
      %v4043 = vld [vmem:[%s4 + $0x34] sm:$0xf]
      %v4044 = vld [vmem:[%s4 + $0x38] sm:$0xf]
      %v4045 = vld [vmem:[%s4 + $0x3c] sm:$0xf]
      %v4046 = vld [vmem:[%s4 + $0x40] sm:$0xf]
      %v4047 = vld [vmem:[%s4 + $0x44] sm:$0xf]
      %v4048 = vld [vmem:[%s4 + $0x48] sm:$0xf]
      %v4049 = vld [vmem:[%s4 + $0x4c] sm:$0xf]
      %v4050 = vld [vmem:[%s4 + $0x50] sm:$0xf]
      %v4051 = vld [vmem:[%s4 + $0x54] sm:$0xf]
      %v4052 = vld [vmem:[%s4 + $0x58] sm:$0xf]
      %v4053 = vld [vmem:[%s4 + $0x5c] sm:$0xf]
      %v4054 = vld [vmem:[%s4 + $0x60] sm:$0xf]
      %v4055 = vld [vmem:[%s4 + $0x64] sm:$0xf]
      %v4056 = vld [vmem:[%s4 + $0x68] sm:$0xf]
      %v4057 = vld [vmem:[%s4 + $0x6c] sm:$0xf]
      %v4058 = vld [vmem:[%s4 + $0x70] sm:$0xf]
      %v4059 = vld [vmem:[%s4 + $0x74] sm:$0xf]
      %v4060 = vld [vmem:[%s4 + $0x78] sm:$0xf]
      %v4061 = vld [vmem:[%s4 + $0x7c] sm:$0xf]
      %v4062 = vld [vmem:[#allocation4] sm:$0xf]
      %v4063 = vld [vmem:[#allocation4 + $0x8] sm:$0xf]
      %v4064 = vld [vmem:[#allocation4 + $0x10] sm:$0x3]
      %v4065 = vld [vmem:[%s5] sm:$0xf]
      %v4066 = vld [vmem:[%s5 + $0x4] sm:$0xf]
      %v4067 = vld [vmem:[%s5 + $0x8] sm:$0xf]
      %v4068 = vld [vmem:[%s5 + $0xc] sm:$0xf]
      %v4069 = vld [vmem:[%s5 + $0x10] sm:$0xf]
      %v4070 = vld [vmem:[%s5 + $0x14] sm:$0xf]
      %v4071 = vld [vmem:[%s5 + $0x18] sm:$0xf]
      %v4072 = vld [vmem:[%s5 + $0x1c] sm:$0xf]
      %v4073 = vld [vmem:[%s5 + $0x20] sm:$0xf]
      %v4074 = vld [vmem:[%s5 + $0x24] sm:$0xf]
      %v4075 = vld [vmem:[%s5 + $0x28] sm:$0xf]
      %v4076 = vld [vmem:[%s5 + $0x2c] sm:$0xf]
      %v4077 = vld [vmem:[%s5 + $0x30] sm:$0xf]
      %v4078 = vld [vmem:[%s5 + $0x34] sm:$0xf]
      %v4079 = vld [vmem:[%s5 + $0x38] sm:$0xf]
      %v4080 = vld [vmem:[%s5 + $0x3c] sm:$0xf]
      %v4084 = vunpack.c.l.b16 %v4062
      %v4085 = vunpack.c.l.b16 %v4063
      %v4086 = vunpack.c.l.b16 %v4064
      %v4087 = vpack.c.b16 %v4085, %v4084
      %v4088 = vpack.c.b16 %v4086, %v4086
      %v4090 = vshrl.u32 %v4087, 16
      %v4092 = vshll.u32 %v4087, 16
      %v4094 = vrot.slane %v4092, 1
      %v4095 = vor.u32 %v4090, %v4094
      %v4097 = vshll.u32 %v4088, 16
      %v4099 = vrot.slane %v4097, 1
      %v4100 = vsel %vm1482, %v4095, %v4099
      %v4101 = vshrl.u32 %v4088, 16
      %v4103 = vor.u32 %v4101, %v4099
      %v4122 = vunpack.c.l.b16 %v4065
      %v4123 = vunpack.c.l.b16 %v4066
      %v4124 = vunpack.c.l.b16 %v4067
      %v4125 = vunpack.c.l.b16 %v4068
      %v4126 = vunpack.c.l.b16 %v4069
      %v4127 = vunpack.c.l.b16 %v4070
      %v4128 = vunpack.c.l.b16 %v4071
      %v4129 = vunpack.c.l.b16 %v4072
      %v4130 = vunpack.c.l.b16 %v4073
      %v4131 = vunpack.c.l.b16 %v4074
      %v4132 = vunpack.c.l.b16 %v4075
      %v4133 = vunpack.c.l.b16 %v4076
      %v4134 = vunpack.c.l.b16 %v4077
      %v4135 = vunpack.c.l.b16 %v4078
      %v4136 = vunpack.c.l.b16 %v4079
      %v4137 = vunpack.c.l.b16 %v4080
      %v4138 = vpack.c.b16 %v4123, %v4122
      %v4139 = vpack.c.b16 %v4125, %v4124
      %v4140 = vpack.c.b16 %v4127, %v4126
      %v4141 = vpack.c.b16 %v4129, %v4128
      %v4142 = vpack.c.b16 %v4131, %v4130
      %v4143 = vpack.c.b16 %v4133, %v4132
      %v4144 = vpack.c.b16 %v4135, %v4134
      %v4145 = vpack.c.b16 %v4137, %v4136
      %4154 = vmatprep.subr.bf16.mxu0 0
      %4155 = vmatpush1.bf16.msra.mxu0 %v4138
      %4156 = vmatprep.subr.bf16.mxu0 0
      %4157 = vmatpush1.bf16.msra.mxu0 %v4139
      %4158 = vmatprep.subr.bf16.mxu0 0
      %4159 = vmatpush1.bf16.msra.mxu0 %v4140
      %4160 = vmatprep.subr.bf16.mxu0 0
      %4161 = vmatpush1.bf16.msra.mxu0 %v4141
      %4162 = vmatprep.subr.bf16.mxu0 0
      %4163 = vmatpush1.bf16.msra.mxu0 %v4142
      %4164 = vmatprep.subr.bf16.mxu0 0
      %4165 = vmatpush1.bf16.msra.mxu0 %v4143
      %4166 = vmatprep.subr.bf16.mxu0 0
      %4167 = vmatpush1.bf16.msra.mxu0 %v4144
      %4168 = vmatprep.subr.bf16.mxu0 0
      %4169 = vmatpush1.bf16.msra.mxu0 %v4145
      %4170 = vmatprep.subr.bf16.mxu0 0
      %4171 = vmatpush1.bf16.msra.mxu0 0
      %4172 = vmatprep.subr.bf16.mxu0 0
      %4173 = vmatpush1.bf16.msra.mxu0 0
      %4174 = vmatprep.subr.bf16.mxu0 0
      %4175 = vmatpush1.bf16.msra.mxu0 0
      %4176 = vmatprep.subr.bf16.mxu0 0
      %4177 = vmatpush1.bf16.msra.mxu0 0
      %4178 = vmatprep.subr.bf16.mxu0 0
      %4179 = vmatpush1.bf16.msra.mxu0 0
      %4180 = vmatprep.subr.bf16.mxu0 0
      %4181 = vmatpush1.bf16.msra.mxu0 0
      %4182 = vmatprep.subr.bf16.mxu0 0
      %4183 = vmatpush1.bf16.msra.mxu0 0
      %4184 = vmatprep.subr.bf16.mxu0 0
      %4185 = vmatpush1.bf16.msra.mxu0 0
      %4186 = vmatprep.mubr.bf16.mxu0 0
      %4187 = vmatmul.mubr.bf16.gmra.mrb[0].mxu0 %v4100
      %v4188 = vpop.f32.mrb[0].mxu0
      %v4189 = vadd.f32 0.0, %v4188
      %v4190 = vpop.f32.mrb[0].mxu0
      %v4191 = vpop.f32.mrb[0].mxu0
      %v4192 = vadd.f32 0.0, %v4191
      %v4193 = vpop.f32.mrb[0].mxu0
      %4194 = vmatprep.mubr.bf16.mxu0 0
      %4195 = vmatmul.mubr.bf16.gmra.mrb[0].mxu0 %v4103
      %v4196 = vpop.f32.mrb[0].mxu0
      %v4197 = vadd.f32 0.0, %v4196
      %v4198 = vpop.f32.mrb[0].mxu0
      %v4199 = vpop.f32.mrb[0].mxu0
      %v4200 = vpop.f32.mrb[0].mxu0
      %4201 = vdwg.mxu0
      %v4205 = vunpack.c.l.b16 %v4027
      %v4206 = vunpack.c.h.b16 %v4027
      %v4207 = vunpack.c.l.b16 %v4028
      %v4208 = vunpack.c.h.b16 %v4028
      %v4209 = vunpack.c.l.b16 %v4029
      %v4210 = vunpack.c.h.b16 %v4029
      %v4211 = vpack.c.b16 %v4207, %v4205
      %v4212 = vpack.c.b16 %v4208, %v4206
      %v4213 = vpack.c.b16 %v4209, %v4209
      %v4214 = vpack.c.b16 %v4210, %v4210
      %v4251 = vunpack.c.l.b16 %v4030
      %v4252 = vunpack.c.l.b16 %v4031
      %v4253 = vunpack.c.l.b16 %v4032
      %v4254 = vunpack.c.l.b16 %v4033
      %v4255 = vunpack.c.l.b16 %v4034
      %v4256 = vunpack.c.l.b16 %v4035
      %v4257 = vunpack.c.l.b16 %v4036
      %v4258 = vunpack.c.l.b16 %v4037
      %v4259 = vunpack.c.l.b16 %v4038
      %v4260 = vunpack.c.l.b16 %v4039
      %v4261 = vunpack.c.l.b16 %v4040
      %v4262 = vunpack.c.l.b16 %v4041
      %v4263 = vunpack.c.l.b16 %v4042
      %v4264 = vunpack.c.l.b16 %v4043
      %v4265 = vunpack.c.l.b16 %v4044
      %v4266 = vunpack.c.l.b16 %v4045
      %v4267 = vunpack.c.l.b16 %v4046
      %v4268 = vunpack.c.l.b16 %v4047
      %v4269 = vunpack.c.l.b16 %v4048
      %v4270 = vunpack.c.l.b16 %v4049
      %v4271 = vunpack.c.l.b16 %v4050
      %v4272 = vunpack.c.l.b16 %v4051
      %v4273 = vunpack.c.l.b16 %v4052
      %v4274 = vunpack.c.l.b16 %v4053
      %v4275 = vunpack.c.l.b16 %v4054
      %v4276 = vunpack.c.l.b16 %v4055
      %v4277 = vunpack.c.l.b16 %v4056
      %v4278 = vunpack.c.l.b16 %v4057
      %v4279 = vunpack.c.l.b16 %v4058
      %v4280 = vunpack.c.l.b16 %v4059
      %v4281 = vunpack.c.l.b16 %v4060
      %v4282 = vunpack.c.l.b16 %v4061
      %v4283 = vpack.c.b16 %v4252, %v4251
      %v4284 = vpack.c.b16 %v4254, %v4253
      %v4285 = vpack.c.b16 %v4256, %v4255
      %v4286 = vpack.c.b16 %v4258, %v4257
      %v4287 = vpack.c.b16 %v4260, %v4259
      %v4288 = vpack.c.b16 %v4262, %v4261
      %v4289 = vpack.c.b16 %v4264, %v4263
      %v4290 = vpack.c.b16 %v4266, %v4265
      %v4291 = vpack.c.b16 %v4268, %v4267
      %v4292 = vpack.c.b16 %v4270, %v4269
      %v4293 = vpack.c.b16 %v4272, %v4271
      %v4294 = vpack.c.b16 %v4274, %v4273
      %v4295 = vpack.c.b16 %v4276, %v4275
      %v4296 = vpack.c.b16 %v4278, %v4277
      %v4297 = vpack.c.b16 %v4280, %v4279
      %v4298 = vpack.c.b16 %v4282, %v4281
      %4315 = vmatprep.subr.bf16.mxu0 0
      %4316 = vmatpush1.bf16.msra.mxu0 %v4283
      %4317 = vmatprep.subr.bf16.mxu0 0
      %4318 = vmatpush1.bf16.msra.mxu0 %v4284
      %4319 = vmatprep.subr.bf16.mxu0 0
      %4320 = vmatpush1.bf16.msra.mxu0 %v4285
      %4321 = vmatprep.subr.bf16.mxu0 0
      %4322 = vmatpush1.bf16.msra.mxu0 %v4286
      %4323 = vmatprep.subr.bf16.mxu0 0
      %4324 = vmatpush1.bf16.msra.mxu0 %v4287
      %4325 = vmatprep.subr.bf16.mxu0 0
      %4326 = vmatpush1.bf16.msra.mxu0 %v4288
      %4327 = vmatprep.subr.bf16.mxu0 0
      %4328 = vmatpush1.bf16.msra.mxu0 %v4289
      %4329 = vmatprep.subr.bf16.mxu0 0
      %4330 = vmatpush1.bf16.msra.mxu0 %v4290
      %4331 = vmatprep.subr.bf16.mxu0 0
      %4332 = vmatpush1.bf16.msra.mxu0 %v4291
      %4333 = vmatprep.subr.bf16.mxu0 0
      %4334 = vmatpush1.bf16.msra.mxu0 %v4292
      %4335 = vmatprep.subr.bf16.mxu0 0
      %4336 = vmatpush1.bf16.msra.mxu0 %v4293
      %4337 = vmatprep.subr.bf16.mxu0 0
      %4338 = vmatpush1.bf16.msra.mxu0 %v4294
      %4339 = vmatprep.subr.bf16.mxu0 0
      %4340 = vmatpush1.bf16.msra.mxu0 %v4295
      %4341 = vmatprep.subr.bf16.mxu0 0
      %4342 = vmatpush1.bf16.msra.mxu0 %v4296
      %4343 = vmatprep.subr.bf16.mxu0 0
      %4344 = vmatpush1.bf16.msra.mxu0 %v4297
      %4345 = vmatprep.subr.bf16.mxu0 0
      %4346 = vmatpush1.bf16.msra.mxu0 %v4298
      %4347 = vmatprep.mubr.bf16.mxu0 %v4212
      %4348 = vmatmul.mubr.bf16.gmra.mrb[0].mxu0 %v4211
      %v4349 = vpop.f32.mrb[0].mxu0
      %v4350 = vadd.f32 %v4189, %v4349
      %v4351 = vpop.f32.mrb[0].mxu0
      %v4352 = vpop.f32.mrb[0].mxu0
      %v4353 = vadd.f32 %v4192, %v4352
      %v4354 = vpop.f32.mrb[0].mxu0
      %4355 = vmatprep.mubr.bf16.mxu0 %v4214
      %4356 = vmatmul.mubr.bf16.gmra.mrb[0].mxu0 %v4213
      %v4357 = vpop.f32.mrb[0].mxu0
      %v4358 = vadd.f32 %v4197, %v4357
      %v4359 = vpop.f32.mrb[0].mxu0
      %v4360 = vpop.f32.mrb[0].mxu0
      %v4361 = vpop.f32.mrb[0].mxu0
      %4362 = vdwg.mxu0
      %v4363 = vld [vmem:[%s11] sm:$0x1]
      %v4365 = vlaneseq
      %v4366 = vshrl.u32 %v4365, 7
      %v4367 = vsub.s32 0, %v4366
      %v4368 = vrot.slane %v4363, %v4367
      %v4370 = vadd.f32 %v4350, %v4368
      %v4371 = vadd.f32 %v4353, %v4368
      %v4372 = vadd.f32 %v4358, %v4368
      %v4373 = vmax.f32 %v4370, 0.0
      %v4374 = vmax.f32 %v4371, 0.0
      %v4375 = vmax.f32 %v4372, 0.0
      %4376 = vst [vmem:[#allocation5] sm:$0xff] %v4373
      %4377 = vst [vmem:[#allocation5 + $0x8] sm:$0xff] %v4374
      %4378 = vst [vmem:[#allocation5 + $0x10] sm:$0x7] %v4375
      %v4379 = vld [vmem:[#allocation5] ss:$2 sm:$0xff]
      %v4380 = vld [vmem:[%s2239] ss:$2 sm:$0x3]
      %v4381 = vpack.c.bf16 %v4380, %v4379
      %4382 = vst [vmem:[#allocation6] sm:$0x1f] %v4381
      %v4383 = vld [vmem:[%s2243] ss:$2 sm:$0xff]
      %v4384 = vld [vmem:[%s2245] ss:$2 sm:$0x3]
      %v4385 = vpack.c.bf16 %v4384, %v4383
      %4386 = vst [vmem:[#allocation6 + $0x8] sm:$0x1f] %v4385
      %v4387 = vld [vmem:[#allocation6] sm:$0x1f]
      %v4388 = vld [vmem:[#allocation6 + $0x8] sm:$0x1f]
      %v4389 = vld [vmem:[%s6] sm:$0xf]
      %v4390 = vld [vmem:[%s6 + $0x4] sm:$0xf]
      %v4391 = vld [vmem:[%s6 + $0x8] sm:$0xf]
      %v4392 = vld [vmem:[%s6 + $0xc] sm:$0xf]
      %v4393 = vld [vmem:[%s6 + $0x10] sm:$0xf]
      %v4394 = vld [vmem:[%s6 + $0x14] sm:$0xf]
      %v4395 = vld [vmem:[%s6 + $0x18] sm:$0xf]
      %v4396 = vld [vmem:[%s6 + $0x1c] sm:$0xf]
      %v4397 = vld [vmem:[%s6 + $0x20] sm:$0xf]
      %v4398 = vld [vmem:[%s6 + $0x24] sm:$0xf]
      %v4399 = vld [vmem:[%s6 + $0x28] sm:$0xf]
      %v4400 = vld [vmem:[%s6 + $0x2c] sm:$0xf]
      %v4401 = vld [vmem:[%s6 + $0x30] sm:$0xf]
      %v4402 = vld [vmem:[%s6 + $0x34] sm:$0xf]
      %v4403 = vld [vmem:[%s6 + $0x38] sm:$0xf]
      %v4404 = vld [vmem:[%s6 + $0x3c] sm:$0xf]
      %v4405 = vld [vmem:[%s6 + $0x40] sm:$0xf]
      %v4406 = vld [vmem:[%s6 + $0x44] sm:$0xf]
      %v4407 = vld [vmem:[%s6 + $0x48] sm:$0xf]
      %v4408 = vld [vmem:[%s6 + $0x4c] sm:$0xf]
      %v4409 = vld [vmem:[%s6 + $0x50] sm:$0xf]
      %v4410 = vld [vmem:[%s6 + $0x54] sm:$0xf]
      %v4411 = vld [vmem:[%s6 + $0x58] sm:$0xf]
      %v4412 = vld [vmem:[%s6 + $0x5c] sm:$0xf]
      %v4413 = vld [vmem:[%s6 + $0x60] sm:$0xf]
      %v4414 = vld [vmem:[%s6 + $0x64] sm:$0xf]
      %v4415 = vld [vmem:[%s6 + $0x68] sm:$0xf]
      %v4416 = vld [vmem:[%s6 + $0x6c] sm:$0xf]
      %v4417 = vld [vmem:[%s6 + $0x70] sm:$0xf]
      %v4418 = vld [vmem:[%s6 + $0x74] sm:$0xf]
      %v4419 = vld [vmem:[%s6 + $0x78] sm:$0xf]
      %v4420 = vld [vmem:[%s6 + $0x7c] sm:$0xf]
      %v4421 = vld [vmem:[#allocation6] sm:$0x1f]
      %v4422 = vld [vmem:[%s7] sm:$0xf]
      %v4423 = vld [vmem:[%s7 + $0x4] sm:$0xf]
      %v4424 = vld [vmem:[%s7 + $0x8] sm:$0xf]
      %v4425 = vld [vmem:[%s7 + $0xc] sm:$0xf]
      %v4426 = vld [vmem:[%s7 + $0x10] sm:$0xf]
      %v4427 = vld [vmem:[%s7 + $0x14] sm:$0xf]
      %v4428 = vld [vmem:[%s7 + $0x18] sm:$0xf]
      %v4429 = vld [vmem:[%s7 + $0x1c] sm:$0xf]
      %v4430 = vld [vmem:[%s7 + $0x20] sm:$0xf]
      %v4431 = vld [vmem:[%s7 + $0x24] sm:$0xf]
      %v4432 = vld [vmem:[%s7 + $0x28] sm:$0xf]
      %v4433 = vld [vmem:[%s7 + $0x2c] sm:$0xf]
      %v4434 = vld [vmem:[%s7 + $0x30] sm:$0xf]
      %v4435 = vld [vmem:[%s7 + $0x34] sm:$0xf]
      %v4436 = vld [vmem:[%s7 + $0x38] sm:$0xf]
      %v4437 = vld [vmem:[%s7 + $0x3c] sm:$0xf]
      %v4439 = vshrl.u32 %v4421, 16
      %v4441 = vshll.u32 %v4421, 16
      %v4443 = vrot.slane %v4441, 1
      %v4444 = vor.u32 %v4439, %v4443
      %v4462 = vunpack.c.l.b16 %v4422
      %v4463 = vunpack.c.l.b16 %v4423
      %v4464 = vunpack.c.l.b16 %v4424
      %v4465 = vunpack.c.l.b16 %v4425
      %v4466 = vunpack.c.l.b16 %v4426
      %v4467 = vunpack.c.l.b16 %v4427
      %v4468 = vunpack.c.l.b16 %v4428
      %v4469 = vunpack.c.l.b16 %v4429
      %v4470 = vunpack.c.l.b16 %v4430
      %v4471 = vunpack.c.l.b16 %v4431
      %v4472 = vunpack.c.l.b16 %v4432
      %v4473 = vunpack.c.l.b16 %v4433
      %v4474 = vunpack.c.l.b16 %v4434
      %v4475 = vunpack.c.l.b16 %v4435
      %v4476 = vunpack.c.l.b16 %v4436
      %v4477 = vunpack.c.l.b16 %v4437
      %v4478 = vpack.c.b16 %v4463, %v4462
      %v4479 = vpack.c.b16 %v4465, %v4464
      %v4480 = vpack.c.b16 %v4467, %v4466
      %v4481 = vpack.c.b16 %v4469, %v4468
      %v4482 = vpack.c.b16 %v4471, %v4470
      %v4483 = vpack.c.b16 %v4473, %v4472
      %v4484 = vpack.c.b16 %v4475, %v4474
      %v4485 = vpack.c.b16 %v4477, %v4476
      %4494 = vmatprep.subr.bf16.mxu0 0
      %4495 = vmatpush1.bf16.msra.mxu0 %v4478
      %4496 = vmatprep.subr.bf16.mxu0 0
      %4497 = vmatpush1.bf16.msra.mxu0 %v4479
      %4498 = vmatprep.subr.bf16.mxu0 0
      %4499 = vmatpush1.bf16.msra.mxu0 %v4480
      %4500 = vmatprep.subr.bf16.mxu0 0
      %4501 = vmatpush1.bf16.msra.mxu0 %v4481
      %4502 = vmatprep.subr.bf16.mxu0 0
      %4503 = vmatpush1.bf16.msra.mxu0 %v4482
      %4504 = vmatprep.subr.bf16.mxu0 0
      %4505 = vmatpush1.bf16.msra.mxu0 %v4483
      %4506 = vmatprep.subr.bf16.mxu0 0
      %4507 = vmatpush1.bf16.msra.mxu0 %v4484
      %4508 = vmatprep.subr.bf16.mxu0 0
      %4509 = vmatpush1.bf16.msra.mxu0 %v4485
      %4510 = vmatprep.subr.bf16.mxu0 0
      %4511 = vmatpush1.bf16.msra.mxu0 0
      %4512 = vmatprep.subr.bf16.mxu0 0
      %4513 = vmatpush1.bf16.msra.mxu0 0
      %4514 = vmatprep.subr.bf16.mxu0 0
      %4515 = vmatpush1.bf16.msra.mxu0 0
      %4516 = vmatprep.subr.bf16.mxu0 0
      %4517 = vmatpush1.bf16.msra.mxu0 0
      %4518 = vmatprep.subr.bf16.mxu0 0
      %4519 = vmatpush1.bf16.msra.mxu0 0
      %4520 = vmatprep.subr.bf16.mxu0 0
      %4521 = vmatpush1.bf16.msra.mxu0 0
      %4522 = vmatprep.subr.bf16.mxu0 0
      %4523 = vmatpush1.bf16.msra.mxu0 0
      %4524 = vmatprep.subr.bf16.mxu0 0
      %4525 = vmatpush1.bf16.msra.mxu0 0
      %4526 = vmatprep.mubr.bf16.mxu0 0
      %4527 = vmatmul.mubr.bf16.gmra.mrb[0].mxu0 %v4444
      %v4528 = vpop.f32.mrb[0].mxu0
      %v4529 = vadd.f32 0.0, %v4528
      %v4530 = vpop.f32.mrb[0].mxu0
      %v4531 = vpop.f32.mrb[0].mxu0
      %v4532 = vadd.f32 0.0, %v4531
      %v4533 = vpop.f32.mrb[0].mxu0
      %4534 = vdwg.mxu0
      %v4567 = vunpack.c.l.b16 %v4389
      %v4568 = vunpack.c.l.b16 %v4390
      %v4569 = vunpack.c.l.b16 %v4391
      %v4570 = vunpack.c.l.b16 %v4392
      %v4571 = vunpack.c.l.b16 %v4393
      %v4572 = vunpack.c.l.b16 %v4394
      %v4573 = vunpack.c.l.b16 %v4395
      %v4574 = vunpack.c.l.b16 %v4396
      %v4575 = vunpack.c.l.b16 %v4397
      %v4576 = vunpack.c.l.b16 %v4398
      %v4577 = vunpack.c.l.b16 %v4399
      %v4578 = vunpack.c.l.b16 %v4400
      %v4579 = vunpack.c.l.b16 %v4401
      %v4580 = vunpack.c.l.b16 %v4402
      %v4581 = vunpack.c.l.b16 %v4403
      %v4582 = vunpack.c.l.b16 %v4404
      %v4583 = vunpack.c.l.b16 %v4405
      %v4584 = vunpack.c.l.b16 %v4406
      %v4585 = vunpack.c.l.b16 %v4407
      %v4586 = vunpack.c.l.b16 %v4408
      %v4587 = vunpack.c.l.b16 %v4409
      %v4588 = vunpack.c.l.b16 %v4410
      %v4589 = vunpack.c.l.b16 %v4411
      %v4590 = vunpack.c.l.b16 %v4412
      %v4591 = vunpack.c.l.b16 %v4413
      %v4592 = vunpack.c.l.b16 %v4414
      %v4593 = vunpack.c.l.b16 %v4415
      %v4594 = vunpack.c.l.b16 %v4416
      %v4595 = vunpack.c.l.b16 %v4417
      %v4596 = vunpack.c.l.b16 %v4418
      %v4597 = vunpack.c.l.b16 %v4419
      %v4598 = vunpack.c.l.b16 %v4420
      %v4599 = vpack.c.b16 %v4568, %v4567
      %v4600 = vpack.c.b16 %v4570, %v4569
      %v4601 = vpack.c.b16 %v4572, %v4571
      %v4602 = vpack.c.b16 %v4574, %v4573
      %v4603 = vpack.c.b16 %v4576, %v4575
      %v4604 = vpack.c.b16 %v4578, %v4577
      %v4605 = vpack.c.b16 %v4580, %v4579
      %v4606 = vpack.c.b16 %v4582, %v4581
      %v4607 = vpack.c.b16 %v4584, %v4583
      %v4608 = vpack.c.b16 %v4586, %v4585
      %v4609 = vpack.c.b16 %v4588, %v4587
      %v4610 = vpack.c.b16 %v4590, %v4589
      %v4611 = vpack.c.b16 %v4592, %v4591
      %v4612 = vpack.c.b16 %v4594, %v4593
      %v4613 = vpack.c.b16 %v4596, %v4595
      %v4614 = vpack.c.b16 %v4598, %v4597
      %4631 = vmatprep.subr.bf16.mxu0 0
      %4632 = vmatpush1.bf16.msra.mxu0 %v4599
      %4633 = vmatprep.subr.bf16.mxu0 0
      %4634 = vmatpush1.bf16.msra.mxu0 %v4600
      %4635 = vmatprep.subr.bf16.mxu0 0
      %4636 = vmatpush1.bf16.msra.mxu0 %v4601
      %4637 = vmatprep.subr.bf16.mxu0 0
      %4638 = vmatpush1.bf16.msra.mxu0 %v4602
      %4639 = vmatprep.subr.bf16.mxu0 0
      %4640 = vmatpush1.bf16.msra.mxu0 %v4603
      %4641 = vmatprep.subr.bf16.mxu0 0
      %4642 = vmatpush1.bf16.msra.mxu0 %v4604
      %4643 = vmatprep.subr.bf16.mxu0 0
      %4644 = vmatpush1.bf16.msra.mxu0 %v4605
      %4645 = vmatprep.subr.bf16.mxu0 0
      %4646 = vmatpush1.bf16.msra.mxu0 %v4606
      %4647 = vmatprep.subr.bf16.mxu0 0
      %4648 = vmatpush1.bf16.msra.mxu0 %v4607
      %4649 = vmatprep.subr.bf16.mxu0 0
      %4650 = vmatpush1.bf16.msra.mxu0 %v4608
      %4651 = vmatprep.subr.bf16.mxu0 0
      %4652 = vmatpush1.bf16.msra.mxu0 %v4609
      %4653 = vmatprep.subr.bf16.mxu0 0
      %4654 = vmatpush1.bf16.msra.mxu0 %v4610
      %4655 = vmatprep.subr.bf16.mxu0 0
      %4656 = vmatpush1.bf16.msra.mxu0 %v4611
      %4657 = vmatprep.subr.bf16.mxu0 0
      %4658 = vmatpush1.bf16.msra.mxu0 %v4612
      %4659 = vmatprep.subr.bf16.mxu0 0
      %4660 = vmatpush1.bf16.msra.mxu0 %v4613
      %4661 = vmatprep.subr.bf16.mxu0 0
      %4662 = vmatpush1.bf16.msra.mxu0 %v4614
      %4663 = vmatprep.mubr.bf16.mxu0 %v4388
      %4664 = vmatmul.mubr.bf16.gmra.mrb[0].mxu0 %v4387
      %v4665 = vpop.f32.mrb[0].mxu0
      %v4666 = vadd.f32 %v4529, %v4665
      %v4667 = vpop.f32.mrb[0].mxu0
      %v4668 = vpop.f32.mrb[0].mxu0
      %v4669 = vadd.f32 %v4532, %v4668
      %v4670 = vpop.f32.mrb[0].mxu0
      %4671 = vdwg.mxu0
      %v4672 = vld [vmem:[%s12] sm:$0x1]
      %v4674 = vlaneseq
      %v4675 = vshrl.u32 %v4674, 7
      %v4676 = vsub.s32 0, %v4675
      %v4677 = vrot.slane %v4672, %v4676
      %v4679 = vadd.f32 %v4666, %v4677
      %v4680 = vadd.f32 %v4669, %v4677
      %v4681 = vmax.f32 %v4679, 0.0
      %v4682 = vmax.f32 %v4680, 0.0
      %4683 = vst [vmem:[#allocation7 + $0x20] sm:$0xff] %v4681
      %4684 = vst [vmem:[#allocation7 + $0x28] sm:$0x1] %v4682
      %v4685 = vld [vmem:[#allocation7] ss:$16 sm:$0x3]
      %v4686 = vld [vmem:[#allocation7] ss:$16 sm:$0x4]
      %v4687 = vor.u32 %v4685, %v4686
      %v4688 = vld [vmem:[%s8] sm:$0xff]
      %v4689 = vld [vmem:[%s8 + $0x8] sm:$0xff]
      %v4690 = vld [vmem:[%s8 + $0x10] sm:$0xff]
      %v4691 = vld [vmem:[%s8 + $0x18] sm:$0xff]
      %v4692 = vld [vmem:[%s8 + $0x20] sm:$0xff]
      %v4693 = vld [vmem:[%s8 + $0x28] sm:$0xff]
      %v4694 = vld [vmem:[%s8 + $0x30] sm:$0xff]
      %v4695 = vld [vmem:[%s8 + $0x38] sm:$0xff]
      %v4696 = vld [vmem:[%s8 + $0x40] sm:$0xff]
      %v4697 = vld [vmem:[%s8 + $0x48] sm:$0xff]
      %v4698 = vld [vmem:[%s8 + $0x50] sm:$0xff]
      %v4699 = vld [vmem:[%s8 + $0x58] sm:$0xff]
      %v4700 = vld [vmem:[%s8 + $0x60] sm:$0xff]
      %v4701 = vld [vmem:[%s8 + $0x68] sm:$0xff]
      %v4702 = vld [vmem:[%s8 + $0x70] sm:$0xff]
      %v4703 = vld [vmem:[%s8 + $0x78] sm:$0xff]
      %s4704 = scalar_lea.vmem [#allocation7], 1
      %v4705 = vld [vmem:[%s4704] ss:$16 sm:$0x3]
      %v4706 = vld [vmem:[%s4704] ss:$16 sm:$0x4]
      %v4707 = vor.u32 %v4705, %v4706
      %s4708 = scalar_lea.vmem %s8, 128
      %v4709 = vld [vmem:[%s4708] sm:$0xff]
      %v4710 = vld [vmem:[%s4708 + $0x8] sm:$0xff]
      %v4711 = vld [vmem:[%s4708 + $0x10] sm:$0xff]
      %v4712 = vld [vmem:[%s4708 + $0x18] sm:$0xff]
      %v4713 = vld [vmem:[%s4708 + $0x20] sm:$0xff]
      %v4714 = vld [vmem:[%s4708 + $0x28] sm:$0xff]
      %v4715 = vld [vmem:[%s4708 + $0x30] sm:$0xff]
      %v4716 = vld [vmem:[%s4708 + $0x38] sm:$0xff]
      %v4717 = vld [vmem:[%s4708 + $0x40] sm:$0xff]
      %v4718 = vld [vmem:[%s4708 + $0x48] sm:$0xff]
      %v4719 = vld [vmem:[%s4708 + $0x50] sm:$0xff]
      %v4720 = vld [vmem:[%s4708 + $0x58] sm:$0xff]
      %v4721 = vld [vmem:[%s4708 + $0x60] sm:$0xff]
      %v4722 = vld [vmem:[%s4708 + $0x68] sm:$0xff]
      %v4723 = vld [vmem:[%s4708 + $0x70] sm:$0xff]
      %v4724 = vld [vmem:[%s4708 + $0x78] sm:$0xff]
      %4725 = vmatprep.subr.mxu0 0.0
      %4726 = vmatpush1.msra.mxu0 %v4709
      %4727 = vmatprep.subr.mxu0 0.0
      %4728 = vmatpush1.msra.mxu0 %v4710
      %4729 = vmatprep.subr.mxu0 0.0
      %4730 = vmatpush1.msra.mxu0 %v4711
      %4731 = vmatprep.subr.mxu0 0.0
      %4732 = vmatpush1.msra.mxu0 %v4712
      %4733 = vmatprep.subr.mxu0 0.0
      %4734 = vmatpush1.msra.mxu0 %v4713
      %4735 = vmatprep.subr.mxu0 0.0
      %4736 = vmatpush1.msra.mxu0 %v4714
      %4737 = vmatprep.subr.mxu0 0.0
      %4738 = vmatpush1.msra.mxu0 %v4715
      %4739 = vmatprep.subr.mxu0 0.0
      %4740 = vmatpush1.msra.mxu0 %v4716
      %4741 = vmatprep.subr.mxu0 0.0
      %4742 = vmatpush1.msra.mxu0 %v4717
      %4743 = vmatprep.subr.mxu0 0.0
      %4744 = vmatpush1.msra.mxu0 %v4718
      %4745 = vmatprep.subr.mxu0 0.0
      %4746 = vmatpush1.msra.mxu0 %v4719
      %4747 = vmatprep.subr.mxu0 0.0
      %4748 = vmatpush1.msra.mxu0 %v4720
      %4749 = vmatprep.subr.mxu0 0.0
      %4750 = vmatpush1.msra.mxu0 %v4721
      %4751 = vmatprep.subr.mxu0 0.0
      %4752 = vmatpush1.msra.mxu0 %v4722
      %4753 = vmatprep.subr.mxu0 0.0
      %4754 = vmatpush1.msra.mxu0 %v4723
      %4755 = vmatprep.subr.mxu0 0.0
      %4756 = vmatpush1.msra.mxu0 %v4724
      %4757 = vmatprep.subr.mxu0 0.0
      %4758 = vmatpush1.msra.mxu0 0.0
      %4759 = vmatprep.subr.mxu0 0.0
      %4760 = vmatpush1.msra.mxu0 0.0
      %4761 = vmatprep.subr.mxu0 0.0
      %4762 = vmatpush1.msra.mxu0 0.0
      %4763 = vmatprep.subr.mxu0 0.0
      %4764 = vmatpush1.msra.mxu0 0.0
      %4765 = vmatprep.subr.mxu0 0.0
      %4766 = vmatpush1.msra.mxu0 0.0
      %4767 = vmatprep.subr.mxu0 0.0
      %4768 = vmatpush1.msra.mxu0 0.0
      %4769 = vmatprep.subr.mxu0 0.0
      %4770 = vmatpush1.msra.mxu0 0.0
      %4771 = vmatprep.subr.mxu0 0.0
      %4772 = vmatpush1.msra.mxu0 0.0
      %4773 = vmatprep.subr.mxu0 0.0
      %4774 = vmatpush1.msra.mxu0 0.0
      %4775 = vmatprep.subr.mxu0 0.0
      %4776 = vmatpush1.msra.mxu0 0.0
      %4777 = vmatprep.subr.mxu0 0.0
      %4778 = vmatpush1.msra.mxu0 0.0
      %4779 = vmatprep.subr.mxu0 0.0
      %4780 = vmatpush1.msra.mxu0 0.0
      %4781 = vmatprep.subr.mxu0 0.0
      %4782 = vmatpush1.msra.mxu0 0.0
      %4783 = vmatprep.subr.mxu0 0.0
      %4784 = vmatpush1.msra.mxu0 0.0
      %4785 = vmatprep.subr.mxu0 0.0
      %4786 = vmatpush1.msra.mxu0 0.0
      %4787 = vmatprep.subr.mxu0 0.0
      %4788 = vmatpush1.msra.mxu0 0.0
      %4789 = vmatprep.mubr.f32.mxu0 0.0
      %4790 = vmatmul.mubr.f32.gmra.mrb[0].mxu0 %v4707
      %v4791 = vpop.f32.mrb[0].mxu0
      %v4792 = vadd.f32 0.0, %v4791
      %v4793 = vpop.f32.mrb[0].mxu0
      %4794 = vdwg.mxu0
      %4795 = vmatprep.subr.mxu0 0.0
      %4796 = vmatpush1.msra.mxu0 %v4688
      %4797 = vmatprep.subr.mxu0 0.0
      %4798 = vmatpush1.msra.mxu0 %v4689
      %4799 = vmatprep.subr.mxu0 0.0
      %4800 = vmatpush1.msra.mxu0 %v4690
      %4801 = vmatprep.subr.mxu0 0.0
      %4802 = vmatpush1.msra.mxu0 %v4691
      %4803 = vmatprep.subr.mxu0 0.0
      %4804 = vmatpush1.msra.mxu0 %v4692
      %4805 = vmatprep.subr.mxu0 0.0
      %4806 = vmatpush1.msra.mxu0 %v4693
      %4807 = vmatprep.subr.mxu0 0.0
      %4808 = vmatpush1.msra.mxu0 %v4694
      %4809 = vmatprep.subr.mxu0 0.0
      %4810 = vmatpush1.msra.mxu0 %v4695
      %4811 = vmatprep.subr.mxu0 0.0
      %4812 = vmatpush1.msra.mxu0 %v4696
      %4813 = vmatprep.subr.mxu0 0.0
      %4814 = vmatpush1.msra.mxu0 %v4697
      %4815 = vmatprep.subr.mxu0 0.0
      %4816 = vmatpush1.msra.mxu0 %v4698
      %4817 = vmatprep.subr.mxu0 0.0
      %4818 = vmatpush1.msra.mxu0 %v4699
      %4819 = vmatprep.subr.mxu0 0.0
      %4820 = vmatpush1.msra.mxu0 %v4700
      %4821 = vmatprep.subr.mxu0 0.0
      %4822 = vmatpush1.msra.mxu0 %v4701
      %4823 = vmatprep.subr.mxu0 0.0
      %4824 = vmatpush1.msra.mxu0 %v4702
      %4825 = vmatprep.subr.mxu0 0.0
      %4826 = vmatpush1.msra.mxu0 %v4703
      %4827 = vmatprep.subr.mxu0 0.0
      %4828 = vmatpush1.msra.mxu0 0.0
      %4829 = vmatprep.subr.mxu0 0.0
      %4830 = vmatpush1.msra.mxu0 0.0
      %4831 = vmatprep.subr.mxu0 0.0
      %4832 = vmatpush1.msra.mxu0 0.0
      %4833 = vmatprep.subr.mxu0 0.0
      %4834 = vmatpush1.msra.mxu0 0.0
      %4835 = vmatprep.subr.mxu0 0.0
      %4836 = vmatpush1.msra.mxu0 0.0
      %4837 = vmatprep.subr.mxu0 0.0
      %4838 = vmatpush1.msra.mxu0 0.0
      %4839 = vmatprep.subr.mxu0 0.0
      %4840 = vmatpush1.msra.mxu0 0.0
      %4841 = vmatprep.subr.mxu0 0.0
      %4842 = vmatpush1.msra.mxu0 0.0
      %4843 = vmatprep.subr.mxu0 0.0
      %4844 = vmatpush1.msra.mxu0 0.0
      %4845 = vmatprep.subr.mxu0 0.0
      %4846 = vmatpush1.msra.mxu0 0.0
      %4847 = vmatprep.subr.mxu0 0.0
      %4848 = vmatpush1.msra.mxu0 0.0
      %4849 = vmatprep.subr.mxu0 0.0
      %4850 = vmatpush1.msra.mxu0 0.0
      %4851 = vmatprep.subr.mxu0 0.0
      %4852 = vmatpush1.msra.mxu0 0.0
      %4853 = vmatprep.subr.mxu0 0.0
      %4854 = vmatpush1.msra.mxu0 0.0
      %4855 = vmatprep.subr.mxu0 0.0
      %4856 = vmatpush1.msra.mxu0 0.0
      %4857 = vmatprep.subr.mxu0 0.0
      %4858 = vmatpush1.msra.mxu0 0.0
      %4859 = vmatprep.mubr.f32.mxu0 0.0
      %4860 = vmatmul.mubr.f32.gmra.mrb[0].mxu0 %v4687
      %v4861 = vpop.f32.mrb[0].mxu0
      %v4862 = vadd.f32 %v4792, %v4861
      %v4863 = vpop.f32.mrb[0].mxu0
      %4864 = vdwg.mxu0
      %s4865 = scalar_lea.vmem [#allocation7], 2
      %v4866 = vld [vmem:[%s4865] ss:$16 sm:$0x3]
      %v4867 = vld [vmem:[%s4865] ss:$16 sm:$0x4]
      %v4868 = vor.u32 %v4866, %v4867
      %s4869 = scalar_lea.vmem %s8, 256
      %v4870 = vld [vmem:[%s4869] sm:$0xff]
      %v4871 = vld [vmem:[%s4869 + $0x8] sm:$0xff]
      %v4872 = vld [vmem:[%s4869 + $0x10] sm:$0xff]
      %v4873 = vld [vmem:[%s4869 + $0x18] sm:$0xff]
      %v4874 = vld [vmem:[%s4869 + $0x20] sm:$0xff]
      %v4875 = vld [vmem:[%s4869 + $0x28] sm:$0xff]
      %v4876 = vld [vmem:[%s4869 + $0x30] sm:$0xff]
      %v4877 = vld [vmem:[%s4869 + $0x38] sm:$0xff]
      %v4878 = vld [vmem:[%s4869 + $0x40] sm:$0xff]
      %v4879 = vld [vmem:[%s4869 + $0x48] sm:$0xff]
      %v4880 = vld [vmem:[%s4869 + $0x50] sm:$0xff]
      %v4881 = vld [vmem:[%s4869 + $0x58] sm:$0xff]
      %v4882 = vld [vmem:[%s4869 + $0x60] sm:$0xff]
      %v4883 = vld [vmem:[%s4869 + $0x68] sm:$0xff]
      %v4884 = vld [vmem:[%s4869 + $0x70] sm:$0xff]
      %v4885 = vld [vmem:[%s4869 + $0x78] sm:$0xff]
      %4886 = vmatprep.subr.mxu0 0.0
      %4887 = vmatpush1.msra.mxu0 %v4870
      %4888 = vmatprep.subr.mxu0 0.0
      %4889 = vmatpush1.msra.mxu0 %v4871
      %4890 = vmatprep.subr.mxu0 0.0
      %4891 = vmatpush1.msra.mxu0 %v4872
      %4892 = vmatprep.subr.mxu0 0.0
      %4893 = vmatpush1.msra.mxu0 %v4873
      %4894 = vmatprep.subr.mxu0 0.0
      %4895 = vmatpush1.msra.mxu0 %v4874
      %4896 = vmatprep.subr.mxu0 0.0
      %4897 = vmatpush1.msra.mxu0 %v4875
      %4898 = vmatprep.subr.mxu0 0.0
      %4899 = vmatpush1.msra.mxu0 %v4876
      %4900 = vmatprep.subr.mxu0 0.0
      %4901 = vmatpush1.msra.mxu0 %v4877
      %4902 = vmatprep.subr.mxu0 0.0
      %4903 = vmatpush1.msra.mxu0 %v4878
      %4904 = vmatprep.subr.mxu0 0.0
      %4905 = vmatpush1.msra.mxu0 %v4879
      %4906 = vmatprep.subr.mxu0 0.0
      %4907 = vmatpush1.msra.mxu0 %v4880
      %4908 = vmatprep.subr.mxu0 0.0
      %4909 = vmatpush1.msra.mxu0 %v4881
      %4910 = vmatprep.subr.mxu0 0.0
      %4911 = vmatpush1.msra.mxu0 %v4882
      %4912 = vmatprep.subr.mxu0 0.0
      %4913 = vmatpush1.msra.mxu0 %v4883
      %4914 = vmatprep.subr.mxu0 0.0
      %4915 = vmatpush1.msra.mxu0 %v4884
      %4916 = vmatprep.subr.mxu0 0.0
      %4917 = vmatpush1.msra.mxu0 %v4885
      %4918 = vmatprep.subr.mxu0 0.0
      %4919 = vmatpush1.msra.mxu0 0.0
      %4920 = vmatprep.subr.mxu0 0.0
      %4921 = vmatpush1.msra.mxu0 0.0
      %4922 = vmatprep.subr.mxu0 0.0
      %4923 = vmatpush1.msra.mxu0 0.0
      %4924 = vmatprep.subr.mxu0 0.0
      %4925 = vmatpush1.msra.mxu0 0.0
      %4926 = vmatprep.subr.mxu0 0.0
      %4927 = vmatpush1.msra.mxu0 0.0
      %4928 = vmatprep.subr.mxu0 0.0
      %4929 = vmatpush1.msra.mxu0 0.0
      %4930 = vmatprep.subr.mxu0 0.0
      %4931 = vmatpush1.msra.mxu0 0.0
      %4932 = vmatprep.subr.mxu0 0.0
      %4933 = vmatpush1.msra.mxu0 0.0
      %4934 = vmatprep.subr.mxu0 0.0
      %4935 = vmatpush1.msra.mxu0 0.0
      %4936 = vmatprep.subr.mxu0 0.0
      %4937 = vmatpush1.msra.mxu0 0.0
      %4938 = vmatprep.subr.mxu0 0.0
      %4939 = vmatpush1.msra.mxu0 0.0
      %4940 = vmatprep.subr.mxu0 0.0
      %4941 = vmatpush1.msra.mxu0 0.0
      %4942 = vmatprep.subr.mxu0 0.0
      %4943 = vmatpush1.msra.mxu0 0.0
      %4944 = vmatprep.subr.mxu0 0.0
      %4945 = vmatpush1.msra.mxu0 0.0
      %4946 = vmatprep.subr.mxu0 0.0
      %4947 = vmatpush1.msra.mxu0 0.0
      %4948 = vmatprep.subr.mxu0 0.0
      %4949 = vmatpush1.msra.mxu0 0.0
      %4950 = vmatprep.mubr.f32.mxu0 0.0
      %4951 = vmatmul.mubr.f32.gmra.mrb[0].mxu0 %v4868
      %v4952 = vpop.f32.mrb[0].mxu0
      %v4953 = vadd.f32 0.0, %v4952
      %v4954 = vpop.f32.mrb[0].mxu0
      %4955 = vdwg.mxu0
      %v4956 = vadd.f32 %v4862, %v4953
      %s4957 = scalar_lea.vmem [#allocation7], 3
      %v4958 = vld [vmem:[%s4957] ss:$16 sm:$0x3]
      %v4959 = vld [vmem:[%s4957] ss:$16 sm:$0x4]
      %v4960 = vor.u32 %v4958, %v4959
      %s4961 = scalar_lea.vmem %s8, 384
      %v4962 = vld [vmem:[%s4961] sm:$0xff]
      %v4963 = vld [vmem:[%s4961 + $0x8] sm:$0xff]
      %v4964 = vld [vmem:[%s4961 + $0x10] sm:$0xff]
      %v4965 = vld [vmem:[%s4961 + $0x18] sm:$0xff]
      %v4966 = vld [vmem:[%s4961 + $0x20] sm:$0xff]
      %v4967 = vld [vmem:[%s4961 + $0x28] sm:$0xff]
      %v4968 = vld [vmem:[%s4961 + $0x30] sm:$0xff]
      %v4969 = vld [vmem:[%s4961 + $0x38] sm:$0xff]
      %v4970 = vld [vmem:[%s4961 + $0x40] sm:$0xff]
      %v4971 = vld [vmem:[%s4961 + $0x48] sm:$0xff]
      %v4972 = vld [vmem:[%s4961 + $0x50] sm:$0xff]
      %v4973 = vld [vmem:[%s4961 + $0x58] sm:$0xff]
      %v4974 = vld [vmem:[%s4961 + $0x60] sm:$0xff]
      %v4975 = vld [vmem:[%s4961 + $0x68] sm:$0xff]
      %v4976 = vld [vmem:[%s4961 + $0x70] sm:$0xff]
      %v4977 = vld [vmem:[%s4961 + $0x78] sm:$0xff]
      %4978 = vmatprep.subr.mxu0 0.0
      %4979 = vmatpush1.msra.mxu0 %v4962
      %4980 = vmatprep.subr.mxu0 0.0
      %4981 = vmatpush1.msra.mxu0 %v4963
      %4982 = vmatprep.subr.mxu0 0.0
      %4983 = vmatpush1.msra.mxu0 %v4964
      %4984 = vmatprep.subr.mxu0 0.0
      %4985 = vmatpush1.msra.mxu0 %v4965
      %4986 = vmatprep.subr.mxu0 0.0
      %4987 = vmatpush1.msra.mxu0 %v4966
      %4988 = vmatprep.subr.mxu0 0.0
      %4989 = vmatpush1.msra.mxu0 %v4967
      %4990 = vmatprep.subr.mxu0 0.0
      %4991 = vmatpush1.msra.mxu0 %v4968
      %4992 = vmatprep.subr.mxu0 0.0
      %4993 = vmatpush1.msra.mxu0 %v4969
      %4994 = vmatprep.subr.mxu0 0.0
      %4995 = vmatpush1.msra.mxu0 %v4970
      %4996 = vmatprep.subr.mxu0 0.0
      %4997 = vmatpush1.msra.mxu0 %v4971
      %4998 = vmatprep.subr.mxu0 0.0
      %4999 = vmatpush1.msra.mxu0 %v4972
      %5000 = vmatprep.subr.mxu0 0.0
      %5001 = vmatpush1.msra.mxu0 %v4973
      %5002 = vmatprep.subr.mxu0 0.0
      %5003 = vmatpush1.msra.mxu0 %v4974
      %5004 = vmatprep.subr.mxu0 0.0
      %5005 = vmatpush1.msra.mxu0 %v4975
      %5006 = vmatprep.subr.mxu0 0.0
      %5007 = vmatpush1.msra.mxu0 %v4976
      %5008 = vmatprep.subr.mxu0 0.0
      %5009 = vmatpush1.msra.mxu0 %v4977
      %5010 = vmatprep.subr.mxu0 0.0
      %5011 = vmatpush1.msra.mxu0 0.0
      %5012 = vmatprep.subr.mxu0 0.0
      %5013 = vmatpush1.msra.mxu0 0.0
      %5014 = vmatprep.subr.mxu0 0.0
      %5015 = vmatpush1.msra.mxu0 0.0
      %5016 = vmatprep.subr.mxu0 0.0
      %5017 = vmatpush1.msra.mxu0 0.0
      %5018 = vmatprep.subr.mxu0 0.0
      %5019 = vmatpush1.msra.mxu0 0.0
      %5020 = vmatprep.subr.mxu0 0.0
      %5021 = vmatpush1.msra.mxu0 0.0
      %5022 = vmatprep.subr.mxu0 0.0
      %5023 = vmatpush1.msra.mxu0 0.0
      %5024 = vmatprep.subr.mxu0 0.0
      %5025 = vmatpush1.msra.mxu0 0.0
      %5026 = vmatprep.subr.mxu0 0.0
      %5027 = vmatpush1.msra.mxu0 0.0
      %5028 = vmatprep.subr.mxu0 0.0
      %5029 = vmatpush1.msra.mxu0 0.0
      %5030 = vmatprep.subr.mxu0 0.0
      %5031 = vmatpush1.msra.mxu0 0.0
      %5032 = vmatprep.subr.mxu0 0.0
      %5033 = vmatpush1.msra.mxu0 0.0
      %5034 = vmatprep.subr.mxu0 0.0
      %5035 = vmatpush1.msra.mxu0 0.0
      %5036 = vmatprep.subr.mxu0 0.0
      %5037 = vmatpush1.msra.mxu0 0.0
      %5038 = vmatprep.subr.mxu0 0.0
      %5039 = vmatpush1.msra.mxu0 0.0
      %5040 = vmatprep.subr.mxu0 0.0
      %5041 = vmatpush1.msra.mxu0 0.0
      %5042 = vmatprep.mubr.f32.mxu0 0.0
      %5043 = vmatmul.mubr.f32.gmra.mrb[0].mxu0 %v4960
      %v5044 = vpop.f32.mrb[0].mxu0
      %v5045 = vadd.f32 0.0, %v5044
      %v5046 = vpop.f32.mrb[0].mxu0
      %5047 = vdwg.mxu0
      %v5048 = vadd.f32 %v4956, %v5045
      %s5049 = scalar_lea.vmem [#allocation7], 4
      %v5050 = vld [vmem:[%s5049] ss:$16 sm:$0x3]
      %v5051 = vld [vmem:[%s5049] ss:$16 sm:$0x4]
      %v5052 = vor.u32 %v5050, %v5051
      %s5053 = scalar_lea.vmem %s8, 512
      %v5054 = vld [vmem:[%s5053] sm:$0xff]
      %v5055 = vld [vmem:[%s5053 + $0x8] sm:$0xff]
      %v5056 = vld [vmem:[%s5053 + $0x10] sm:$0xff]
      %v5057 = vld [vmem:[%s5053 + $0x18] sm:$0xff]
      %v5058 = vld [vmem:[%s5053 + $0x20] sm:$0xff]
      %v5059 = vld [vmem:[%s5053 + $0x28] sm:$0xff]
      %v5060 = vld [vmem:[%s5053 + $0x30] sm:$0xff]
      %v5061 = vld [vmem:[%s5053 + $0x38] sm:$0xff]
      %v5062 = vld [vmem:[%s5053 + $0x40] sm:$0xff]
      %v5063 = vld [vmem:[%s5053 + $0x48] sm:$0xff]
      %v5064 = vld [vmem:[%s5053 + $0x50] sm:$0xff]
      %v5065 = vld [vmem:[%s5053 + $0x58] sm:$0xff]
      %v5066 = vld [vmem:[%s5053 + $0x60] sm:$0xff]
      %v5067 = vld [vmem:[%s5053 + $0x68] sm:$0xff]
      %v5068 = vld [vmem:[%s5053 + $0x70] sm:$0xff]
      %v5069 = vld [vmem:[%s5053 + $0x78] sm:$0xff]
      %5070 = vmatprep.subr.mxu0 0.0
      %5071 = vmatpush1.msra.mxu0 %v5054
      %5072 = vmatprep.subr.mxu0 0.0
      %5073 = vmatpush1.msra.mxu0 %v5055
      %5074 = vmatprep.subr.mxu0 0.0
      %5075 = vmatpush1.msra.mxu0 %v5056
      %5076 = vmatprep.subr.mxu0 0.0
      %5077 = vmatpush1.msra.mxu0 %v5057
      %5078 = vmatprep.subr.mxu0 0.0
      %5079 = vmatpush1.msra.mxu0 %v5058
      %5080 = vmatprep.subr.mxu0 0.0
      %5081 = vmatpush1.msra.mxu0 %v5059
      %5082 = vmatprep.subr.mxu0 0.0
      %5083 = vmatpush1.msra.mxu0 %v5060
      %5084 = vmatprep.subr.mxu0 0.0
      %5085 = vmatpush1.msra.mxu0 %v5061
      %5086 = vmatprep.subr.mxu0 0.0
      %5087 = vmatpush1.msra.mxu0 %v5062
      %5088 = vmatprep.subr.mxu0 0.0
      %5089 = vmatpush1.msra.mxu0 %v5063
      %5090 = vmatprep.subr.mxu0 0.0
      %5091 = vmatpush1.msra.mxu0 %v5064
      %5092 = vmatprep.subr.mxu0 0.0
      %5093 = vmatpush1.msra.mxu0 %v5065
      %5094 = vmatprep.subr.mxu0 0.0
      %5095 = vmatpush1.msra.mxu0 %v5066
      %5096 = vmatprep.subr.mxu0 0.0
      %5097 = vmatpush1.msra.mxu0 %v5067
      %5098 = vmatprep.subr.mxu0 0.0
      %5099 = vmatpush1.msra.mxu0 %v5068
      %5100 = vmatprep.subr.mxu0 0.0
      %5101 = vmatpush1.msra.mxu0 %v5069
      %5102 = vmatprep.subr.mxu0 0.0
      %5103 = vmatpush1.msra.mxu0 0.0
      %5104 = vmatprep.subr.mxu0 0.0
      %5105 = vmatpush1.msra.mxu0 0.0
      %5106 = vmatprep.subr.mxu0 0.0
      %5107 = vmatpush1.msra.mxu0 0.0
      %5108 = vmatprep.subr.mxu0 0.0
      %5109 = vmatpush1.msra.mxu0 0.0
      %5110 = vmatprep.subr.mxu0 0.0
      %5111 = vmatpush1.msra.mxu0 0.0
      %5112 = vmatprep.subr.mxu0 0.0
      %5113 = vmatpush1.msra.mxu0 0.0
      %5114 = vmatprep.subr.mxu0 0.0
      %5115 = vmatpush1.msra.mxu0 0.0
      %5116 = vmatprep.subr.mxu0 0.0
      %5117 = vmatpush1.msra.mxu0 0.0
      %5118 = vmatprep.subr.mxu0 0.0
      %5119 = vmatpush1.msra.mxu0 0.0
      %5120 = vmatprep.subr.mxu0 0.0
      %5121 = vmatpush1.msra.mxu0 0.0
      %5122 = vmatprep.subr.mxu0 0.0
      %5123 = vmatpush1.msra.mxu0 0.0
      %5124 = vmatprep.subr.mxu0 0.0
      %5125 = vmatpush1.msra.mxu0 0.0
      %5126 = vmatprep.subr.mxu0 0.0
      %5127 = vmatpush1.msra.mxu0 0.0
      %5128 = vmatprep.subr.mxu0 0.0
      %5129 = vmatpush1.msra.mxu0 0.0
      %5130 = vmatprep.subr.mxu0 0.0
      %5131 = vmatpush1.msra.mxu0 0.0
      %5132 = vmatprep.subr.mxu0 0.0
      %5133 = vmatpush1.msra.mxu0 0.0
      %5134 = vmatprep.mubr.f32.mxu0 0.0
      %5135 = vmatmul.mubr.f32.gmra.mrb[0].mxu0 %v5052
      %v5136 = vpop.f32.mrb[0].mxu0
      %v5137 = vadd.f32 0.0, %v5136
      %v5138 = vpop.f32.mrb[0].mxu0
      %5139 = vdwg.mxu0
      %v5140 = vadd.f32 %v5048, %v5137
      %s5141 = scalar_lea.vmem [#allocation7], 5
      %v5142 = vld [vmem:[%s5141] ss:$16 sm:$0x3]
      %v5143 = vld [vmem:[%s5141] ss:$16 sm:$0x4]
      %v5144 = vor.u32 %v5142, %v5143
      %s5145 = scalar_lea.vmem %s8, 640
      %v5146 = vld [vmem:[%s5145] sm:$0xff]
      %v5147 = vld [vmem:[%s5145 + $0x8] sm:$0xff]
      %v5148 = vld [vmem:[%s5145 + $0x10] sm:$0xff]
      %v5149 = vld [vmem:[%s5145 + $0x18] sm:$0xff]
      %v5150 = vld [vmem:[%s5145 + $0x20] sm:$0xff]
      %v5151 = vld [vmem:[%s5145 + $0x28] sm:$0xff]
      %v5152 = vld [vmem:[%s5145 + $0x30] sm:$0xff]
      %v5153 = vld [vmem:[%s5145 + $0x38] sm:$0xff]
      %v5154 = vld [vmem:[%s5145 + $0x40] sm:$0xff]
      %v5155 = vld [vmem:[%s5145 + $0x48] sm:$0xff]
      %v5156 = vld [vmem:[%s5145 + $0x50] sm:$0xff]
      %v5157 = vld [vmem:[%s5145 + $0x58] sm:$0xff]
      %v5158 = vld [vmem:[%s5145 + $0x60] sm:$0xff]
      %v5159 = vld [vmem:[%s5145 + $0x68] sm:$0xff]
      %v5160 = vld [vmem:[%s5145 + $0x70] sm:$0xff]
      %v5161 = vld [vmem:[%s5145 + $0x78] sm:$0xff]
      %5162 = vmatprep.subr.mxu0 0.0
      %5163 = vmatpush1.msra.mxu0 %v5146
      %5164 = vmatprep.subr.mxu0 0.0
      %5165 = vmatpush1.msra.mxu0 %v5147
      %5166 = vmatprep.subr.mxu0 0.0
      %5167 = vmatpush1.msra.mxu0 %v5148
      %5168 = vmatprep.subr.mxu0 0.0
      %5169 = vmatpush1.msra.mxu0 %v5149
      %5170 = vmatprep.subr.mxu0 0.0
      %5171 = vmatpush1.msra.mxu0 %v5150
      %5172 = vmatprep.subr.mxu0 0.0
      %5173 = vmatpush1.msra.mxu0 %v5151
      %5174 = vmatprep.subr.mxu0 0.0
      %5175 = vmatpush1.msra.mxu0 %v5152
      %5176 = vmatprep.subr.mxu0 0.0
      %5177 = vmatpush1.msra.mxu0 %v5153
      %5178 = vmatprep.subr.mxu0 0.0
      %5179 = vmatpush1.msra.mxu0 %v5154
      %5180 = vmatprep.subr.mxu0 0.0
      %5181 = vmatpush1.msra.mxu0 %v5155
      %5182 = vmatprep.subr.mxu0 0.0
      %5183 = vmatpush1.msra.mxu0 %v5156
      %5184 = vmatprep.subr.mxu0 0.0
      %5185 = vmatpush1.msra.mxu0 %v5157
      %5186 = vmatprep.subr.mxu0 0.0
      %5187 = vmatpush1.msra.mxu0 %v5158
      %5188 = vmatprep.subr.mxu0 0.0
      %5189 = vmatpush1.msra.mxu0 %v5159
      %5190 = vmatprep.subr.mxu0 0.0
      %5191 = vmatpush1.msra.mxu0 %v5160
      %5192 = vmatprep.subr.mxu0 0.0
      %5193 = vmatpush1.msra.mxu0 %v5161
      %5194 = vmatprep.subr.mxu0 0.0
      %5195 = vmatpush1.msra.mxu0 0.0
      %5196 = vmatprep.subr.mxu0 0.0
      %5197 = vmatpush1.msra.mxu0 0.0
      %5198 = vmatprep.subr.mxu0 0.0
      %5199 = vmatpush1.msra.mxu0 0.0
      %5200 = vmatprep.subr.mxu0 0.0
      %5201 = vmatpush1.msra.mxu0 0.0
      %5202 = vmatprep.subr.mxu0 0.0
      %5203 = vmatpush1.msra.mxu0 0.0
      %5204 = vmatprep.subr.mxu0 0.0
      %5205 = vmatpush1.msra.mxu0 0.0
      %5206 = vmatprep.subr.mxu0 0.0
      %5207 = vmatpush1.msra.mxu0 0.0
      %5208 = vmatprep.subr.mxu0 0.0
      %5209 = vmatpush1.msra.mxu0 0.0
      %5210 = vmatprep.subr.mxu0 0.0
      %5211 = vmatpush1.msra.mxu0 0.0
      %5212 = vmatprep.subr.mxu0 0.0
      %5213 = vmatpush1.msra.mxu0 0.0
      %5214 = vmatprep.subr.mxu0 0.0
      %5215 = vmatpush1.msra.mxu0 0.0
      %5216 = vmatprep.subr.mxu0 0.0
      %5217 = vmatpush1.msra.mxu0 0.0
      %5218 = vmatprep.subr.mxu0 0.0
      %5219 = vmatpush1.msra.mxu0 0.0
      %5220 = vmatprep.subr.mxu0 0.0
      %5221 = vmatpush1.msra.mxu0 0.0
      %5222 = vmatprep.subr.mxu0 0.0
      %5223 = vmatpush1.msra.mxu0 0.0
      %5224 = vmatprep.subr.mxu0 0.0
      %5225 = vmatpush1.msra.mxu0 0.0
      %5226 = vmatprep.mubr.f32.mxu0 0.0
      %5227 = vmatmul.mubr.f32.gmra.mrb[0].mxu0 %v5144
      %v5228 = vpop.f32.mrb[0].mxu0
      %v5229 = vadd.f32 0.0, %v5228
      %v5230 = vpop.f32.mrb[0].mxu0
      %5231 = vdwg.mxu0
      %v5232 = vadd.f32 %v5140, %v5229
      %s5233 = scalar_lea.vmem [#allocation7], 6
      %v5234 = vld [vmem:[%s5233] ss:$16 sm:$0x3]
      %v5235 = vld [vmem:[%s5233] ss:$16 sm:$0x4]
      %v5236 = vor.u32 %v5234, %v5235
      %s5237 = scalar_lea.vmem %s8, 768
      %v5238 = vld [vmem:[%s5237] sm:$0xff]
      %v5239 = vld [vmem:[%s5237 + $0x8] sm:$0xff]
      %v5240 = vld [vmem:[%s5237 + $0x10] sm:$0xff]
      %v5241 = vld [vmem:[%s5237 + $0x18] sm:$0xff]
      %v5242 = vld [vmem:[%s5237 + $0x20] sm:$0xff]
      %v5243 = vld [vmem:[%s5237 + $0x28] sm:$0xff]
      %v5244 = vld [vmem:[%s5237 + $0x30] sm:$0xff]
      %v5245 = vld [vmem:[%s5237 + $0x38] sm:$0xff]
      %v5246 = vld [vmem:[%s5237 + $0x40] sm:$0xff]
      %v5247 = vld [vmem:[%s5237 + $0x48] sm:$0xff]
      %v5248 = vld [vmem:[%s5237 + $0x50] sm:$0xff]
      %v5249 = vld [vmem:[%s5237 + $0x58] sm:$0xff]
      %v5250 = vld [vmem:[%s5237 + $0x60] sm:$0xff]
      %v5251 = vld [vmem:[%s5237 + $0x68] sm:$0xff]
      %v5252 = vld [vmem:[%s5237 + $0x70] sm:$0xff]
      %v5253 = vld [vmem:[%s5237 + $0x78] sm:$0xff]
      %5254 = vmatprep.subr.mxu0 0.0
      %5255 = vmatpush1.msra.mxu0 %v5238
      %5256 = vmatprep.subr.mxu0 0.0
      %5257 = vmatpush1.msra.mxu0 %v5239
      %5258 = vmatprep.subr.mxu0 0.0
      %5259 = vmatpush1.msra.mxu0 %v5240
      %5260 = vmatprep.subr.mxu0 0.0
      %5261 = vmatpush1.msra.mxu0 %v5241
      %5262 = vmatprep.subr.mxu0 0.0
      %5263 = vmatpush1.msra.mxu0 %v5242
      %5264 = vmatprep.subr.mxu0 0.0
      %5265 = vmatpush1.msra.mxu0 %v5243
      %5266 = vmatprep.subr.mxu0 0.0
      %5267 = vmatpush1.msra.mxu0 %v5244
      %5268 = vmatprep.subr.mxu0 0.0
      %5269 = vmatpush1.msra.mxu0 %v5245
      %5270 = vmatprep.subr.mxu0 0.0
      %5271 = vmatpush1.msra.mxu0 %v5246
      %5272 = vmatprep.subr.mxu0 0.0
      %5273 = vmatpush1.msra.mxu0 %v5247
      %5274 = vmatprep.subr.mxu0 0.0
      %5275 = vmatpush1.msra.mxu0 %v5248
      %5276 = vmatprep.subr.mxu0 0.0
      %5277 = vmatpush1.msra.mxu0 %v5249
      %5278 = vmatprep.subr.mxu0 0.0
      %5279 = vmatpush1.msra.mxu0 %v5250
      %5280 = vmatprep.subr.mxu0 0.0
      %5281 = vmatpush1.msra.mxu0 %v5251
      %5282 = vmatprep.subr.mxu0 0.0
      %5283 = vmatpush1.msra.mxu0 %v5252
      %5284 = vmatprep.subr.mxu0 0.0
      %5285 = vmatpush1.msra.mxu0 %v5253
      %5286 = vmatprep.subr.mxu0 0.0
      %5287 = vmatpush1.msra.mxu0 0.0
      %5288 = vmatprep.subr.mxu0 0.0
      %5289 = vmatpush1.msra.mxu0 0.0
      %5290 = vmatprep.subr.mxu0 0.0
      %5291 = vmatpush1.msra.mxu0 0.0
      %5292 = vmatprep.subr.mxu0 0.0
      %5293 = vmatpush1.msra.mxu0 0.0
      %5294 = vmatprep.subr.mxu0 0.0
      %5295 = vmatpush1.msra.mxu0 0.0
      %5296 = vmatprep.subr.mxu0 0.0
      %5297 = vmatpush1.msra.mxu0 0.0
      %5298 = vmatprep.subr.mxu0 0.0
      %5299 = vmatpush1.msra.mxu0 0.0
      %5300 = vmatprep.subr.mxu0 0.0
      %5301 = vmatpush1.msra.mxu0 0.0
      %5302 = vmatprep.subr.mxu0 0.0
      %5303 = vmatpush1.msra.mxu0 0.0
      %5304 = vmatprep.subr.mxu0 0.0
      %5305 = vmatpush1.msra.mxu0 0.0
      %5306 = vmatprep.subr.mxu0 0.0
      %5307 = vmatpush1.msra.mxu0 0.0
      %5308 = vmatprep.subr.mxu0 0.0
      %5309 = vmatpush1.msra.mxu0 0.0
      %5310 = vmatprep.subr.mxu0 0.0
      %5311 = vmatpush1.msra.mxu0 0.0
      %5312 = vmatprep.subr.mxu0 0.0
      %5313 = vmatpush1.msra.mxu0 0.0
      %5314 = vmatprep.subr.mxu0 0.0
      %5315 = vmatpush1.msra.mxu0 0.0
      %5316 = vmatprep.subr.mxu0 0.0
      %5317 = vmatpush1.msra.mxu0 0.0
      %5318 = vmatprep.mubr.f32.mxu0 0.0
      %5319 = vmatmul.mubr.f32.gmra.mrb[0].mxu0 %v5236
      %v5320 = vpop.f32.mrb[0].mxu0
      %v5321 = vadd.f32 0.0, %v5320
      %v5322 = vpop.f32.mrb[0].mxu0
      %5323 = vdwg.mxu0
      %v5324 = vadd.f32 %v5232, %v5321
      %s5325 = scalar_lea.vmem [#allocation7], 7
      %v5326 = vld [vmem:[%s5325] ss:$16 sm:$0x3]
      %v5327 = vld [vmem:[%s5325] ss:$16 sm:$0x4]
      %v5328 = vor.u32 %v5326, %v5327
      %s5329 = scalar_lea.vmem %s8, 896
      %v5330 = vld [vmem:[%s5329] sm:$0xff]
      %v5331 = vld [vmem:[%s5329 + $0x8] sm:$0xff]
      %v5332 = vld [vmem:[%s5329 + $0x10] sm:$0xff]
      %v5333 = vld [vmem:[%s5329 + $0x18] sm:$0xff]
      %v5334 = vld [vmem:[%s5329 + $0x20] sm:$0xff]
      %v5335 = vld [vmem:[%s5329 + $0x28] sm:$0xff]
      %v5336 = vld [vmem:[%s5329 + $0x30] sm:$0xff]
      %v5337 = vld [vmem:[%s5329 + $0x38] sm:$0xff]
      %v5338 = vld [vmem:[%s5329 + $0x40] sm:$0xff]
      %v5339 = vld [vmem:[%s5329 + $0x48] sm:$0xff]
      %v5340 = vld [vmem:[%s5329 + $0x50] sm:$0xff]
      %v5341 = vld [vmem:[%s5329 + $0x58] sm:$0xff]
      %v5342 = vld [vmem:[%s5329 + $0x60] sm:$0xff]
      %v5343 = vld [vmem:[%s5329 + $0x68] sm:$0xff]
      %v5344 = vld [vmem:[%s5329 + $0x70] sm:$0xff]
      %v5345 = vld [vmem:[%s5329 + $0x78] sm:$0xff]
      %5346 = vmatprep.subr.mxu0 0.0
      %5347 = vmatpush1.msra.mxu0 %v5330
      %5348 = vmatprep.subr.mxu0 0.0
      %5349 = vmatpush1.msra.mxu0 %v5331
      %5350 = vmatprep.subr.mxu0 0.0
      %5351 = vmatpush1.msra.mxu0 %v5332
      %5352 = vmatprep.subr.mxu0 0.0
      %5353 = vmatpush1.msra.mxu0 %v5333
      %5354 = vmatprep.subr.mxu0 0.0
      %5355 = vmatpush1.msra.mxu0 %v5334
      %5356 = vmatprep.subr.mxu0 0.0
      %5357 = vmatpush1.msra.mxu0 %v5335
      %5358 = vmatprep.subr.mxu0 0.0
      %5359 = vmatpush1.msra.mxu0 %v5336
      %5360 = vmatprep.subr.mxu0 0.0
      %5361 = vmatpush1.msra.mxu0 %v5337
      %5362 = vmatprep.subr.mxu0 0.0
      %5363 = vmatpush1.msra.mxu0 %v5338
      %5364 = vmatprep.subr.mxu0 0.0
      %5365 = vmatpush1.msra.mxu0 %v5339
      %5366 = vmatprep.subr.mxu0 0.0
      %5367 = vmatpush1.msra.mxu0 %v5340
      %5368 = vmatprep.subr.mxu0 0.0
      %5369 = vmatpush1.msra.mxu0 %v5341
      %5370 = vmatprep.subr.mxu0 0.0
      %5371 = vmatpush1.msra.mxu0 %v5342
      %5372 = vmatprep.subr.mxu0 0.0
      %5373 = vmatpush1.msra.mxu0 %v5343
      %5374 = vmatprep.subr.mxu0 0.0
      %5375 = vmatpush1.msra.mxu0 %v5344
      %5376 = vmatprep.subr.mxu0 0.0
      %5377 = vmatpush1.msra.mxu0 %v5345
      %5378 = vmatprep.subr.mxu0 0.0
      %5379 = vmatpush1.msra.mxu0 0.0
      %5380 = vmatprep.subr.mxu0 0.0
      %5381 = vmatpush1.msra.mxu0 0.0
      %5382 = vmatprep.subr.mxu0 0.0
      %5383 = vmatpush1.msra.mxu0 0.0
      %5384 = vmatprep.subr.mxu0 0.0
      %5385 = vmatpush1.msra.mxu0 0.0
      %5386 = vmatprep.subr.mxu0 0.0
      %5387 = vmatpush1.msra.mxu0 0.0
      %5388 = vmatprep.subr.mxu0 0.0
      %5389 = vmatpush1.msra.mxu0 0.0
      %5390 = vmatprep.subr.mxu0 0.0
      %5391 = vmatpush1.msra.mxu0 0.0
      %5392 = vmatprep.subr.mxu0 0.0
      %5393 = vmatpush1.msra.mxu0 0.0
      %5394 = vmatprep.subr.mxu0 0.0
      %5395 = vmatpush1.msra.mxu0 0.0
      %5396 = vmatprep.subr.mxu0 0.0
      %5397 = vmatpush1.msra.mxu0 0.0
      %5398 = vmatprep.subr.mxu0 0.0
      %5399 = vmatpush1.msra.mxu0 0.0
      %5400 = vmatprep.subr.mxu0 0.0
      %5401 = vmatpush1.msra.mxu0 0.0
      %5402 = vmatprep.subr.mxu0 0.0
      %5403 = vmatpush1.msra.mxu0 0.0
      %5404 = vmatprep.subr.mxu0 0.0
      %5405 = vmatpush1.msra.mxu0 0.0
      %5406 = vmatprep.subr.mxu0 0.0
      %5407 = vmatpush1.msra.mxu0 0.0
      %5408 = vmatprep.subr.mxu0 0.0
      %5409 = vmatpush1.msra.mxu0 0.0
      %5410 = vmatprep.mubr.f32.mxu0 0.0
      %5411 = vmatmul.mubr.f32.gmra.mrb[0].mxu0 %v5328
      %v5412 = vpop.f32.mrb[0].mxu0
      %v5413 = vadd.f32 0.0, %v5412
      %v5414 = vpop.f32.mrb[0].mxu0
      %5415 = vdwg.mxu0
      %v5416 = vadd.f32 %v5324, %v5413
      %s5417 = scalar_lea.vmem [#allocation7], 8
      %v5418 = vld [vmem:[%s5417] ss:$16 sm:$0x3]
      %v5419 = vld [vmem:[%s5417] ss:$16 sm:$0x4]
      %v5420 = vor.u32 %v5418, %v5419
      %s5421 = scalar_lea.vmem %s8, 1024
      %v5422 = vld [vmem:[%s5421] sm:$0xff]
      %v5423 = vld [vmem:[%s5421 + $0x8] sm:$0xff]
      %v5424 = vld [vmem:[%s5421 + $0x10] sm:$0xff]
      %v5425 = vld [vmem:[%s5421 + $0x18] sm:$0xff]
      %v5426 = vld [vmem:[%s5421 + $0x20] sm:$0xff]
      %v5427 = vld [vmem:[%s5421 + $0x28] sm:$0xff]
      %v5428 = vld [vmem:[%s5421 + $0x30] sm:$0xff]
      %v5429 = vld [vmem:[%s5421 + $0x38] sm:$0xff]
      %v5430 = vld [vmem:[%s5421 + $0x40] sm:$0xff]
      %v5431 = vld [vmem:[%s5421 + $0x48] sm:$0xff]
      %v5432 = vld [vmem:[%s5421 + $0x50] sm:$0xff]
      %v5433 = vld [vmem:[%s5421 + $0x58] sm:$0xff]
      %v5434 = vld [vmem:[%s5421 + $0x60] sm:$0xff]
      %v5435 = vld [vmem:[%s5421 + $0x68] sm:$0xff]
      %v5436 = vld [vmem:[%s5421 + $0x70] sm:$0xff]
      %v5437 = vld [vmem:[%s5421 + $0x78] sm:$0xff]
      %5438 = vmatprep.subr.mxu0 0.0
      %5439 = vmatpush1.msra.mxu0 %v5422
      %5440 = vmatprep.subr.mxu0 0.0
      %5441 = vmatpush1.msra.mxu0 %v5423
      %5442 = vmatprep.subr.mxu0 0.0
      %5443 = vmatpush1.msra.mxu0 %v5424
      %5444 = vmatprep.subr.mxu0 0.0
      %5445 = vmatpush1.msra.mxu0 %v5425
      %5446 = vmatprep.subr.mxu0 0.0
      %5447 = vmatpush1.msra.mxu0 %v5426
      %5448 = vmatprep.subr.mxu0 0.0
      %5449 = vmatpush1.msra.mxu0 %v5427
      %5450 = vmatprep.subr.mxu0 0.0
      %5451 = vmatpush1.msra.mxu0 %v5428
      %5452 = vmatprep.subr.mxu0 0.0
      %5453 = vmatpush1.msra.mxu0 %v5429
      %5454 = vmatprep.subr.mxu0 0.0
      %5455 = vmatpush1.msra.mxu0 %v5430
      %5456 = vmatprep.subr.mxu0 0.0
      %5457 = vmatpush1.msra.mxu0 %v5431
      %5458 = vmatprep.subr.mxu0 0.0
      %5459 = vmatpush1.msra.mxu0 %v5432
      %5460 = vmatprep.subr.mxu0 0.0
      %5461 = vmatpush1.msra.mxu0 %v5433
      %5462 = vmatprep.subr.mxu0 0.0
      %5463 = vmatpush1.msra.mxu0 %v5434
      %5464 = vmatprep.subr.mxu0 0.0
      %5465 = vmatpush1.msra.mxu0 %v5435
      %5466 = vmatprep.subr.mxu0 0.0
      %5467 = vmatpush1.msra.mxu0 %v5436
      %5468 = vmatprep.subr.mxu0 0.0
      %5469 = vmatpush1.msra.mxu0 %v5437
      %5470 = vmatprep.subr.mxu0 0.0
      %5471 = vmatpush1.msra.mxu0 0.0
      %5472 = vmatprep.subr.mxu0 0.0
      %5473 = vmatpush1.msra.mxu0 0.0
      %5474 = vmatprep.subr.mxu0 0.0
      %5475 = vmatpush1.msra.mxu0 0.0
      %5476 = vmatprep.subr.mxu0 0.0
      %5477 = vmatpush1.msra.mxu0 0.0
      %5478 = vmatprep.subr.mxu0 0.0
      %5479 = vmatpush1.msra.mxu0 0.0
      %5480 = vmatprep.subr.mxu0 0.0
      %5481 = vmatpush1.msra.mxu0 0.0
      %5482 = vmatprep.subr.mxu0 0.0
      %5483 = vmatpush1.msra.mxu0 0.0
      %5484 = vmatprep.subr.mxu0 0.0
      %5485 = vmatpush1.msra.mxu0 0.0
      %5486 = vmatprep.subr.mxu0 0.0
      %5487 = vmatpush1.msra.mxu0 0.0
      %5488 = vmatprep.subr.mxu0 0.0
      %5489 = vmatpush1.msra.mxu0 0.0
      %5490 = vmatprep.subr.mxu0 0.0
      %5491 = vmatpush1.msra.mxu0 0.0
      %5492 = vmatprep.subr.mxu0 0.0
      %5493 = vmatpush1.msra.mxu0 0.0
      %5494 = vmatprep.subr.mxu0 0.0
      %5495 = vmatpush1.msra.mxu0 0.0
      %5496 = vmatprep.subr.mxu0 0.0
      %5497 = vmatpush1.msra.mxu0 0.0
      %5498 = vmatprep.subr.mxu0 0.0
      %5499 = vmatpush1.msra.mxu0 0.0
      %5500 = vmatprep.subr.mxu0 0.0
      %5501 = vmatpush1.msra.mxu0 0.0
      %5502 = vmatprep.mubr.f32.mxu0 0.0
      %5503 = vmatmul.mubr.f32.gmra.mrb[0].mxu0 %v5420
      %v5504 = vpop.f32.mrb[0].mxu0
      %v5505 = vadd.f32 0.0, %v5504
      %v5506 = vpop.f32.mrb[0].mxu0
      %5507 = vdwg.mxu0
      %v5508 = vadd.f32 %v5416, %v5505
      %v5509 = vld [vmem:[%s13] sm:$0x1]
      %v5511 = vlaneseq
      %v5512 = vshrl.u32 %v5511, 7
      %v5513 = vsub.s32 0, %v5512
      %v5514 = vrot.slane %v5509, %v5513
      %v5516 = vadd.f32 %v5508, %v5514
      %v5517 = vtanh.pop %v5516
      %vm5518 = vcmask 124928
      %5519 = vst.msk [vmem:[%s465] sm:$0x7] %vm5518, %v5517
      %p5520 = scmp.lt.s32.totalorder %s25, 1
      %s5521 = scalar_select %p5520, %s25, 1
      %s5522 = smul.addr %s5521, 4
      %s5523 = scalar_lea.vmem %s14, %s5522
      // Predicated region
      $region77: #{time_encoder_forward.1} parent=75 // pred_check
        %p5524 = pneg %p342
      $region78: #{time_encoder_forward.1} parent=75 // pred_check_branch
        %5526 = sbr.rel (%p5524) target = $region80
      $region79: #{time_encoder_forward.1} parent=75 // pred_region
        _
      $region80: #{time_encoder_forward.1} parent=75 // pred_fallthru
        _
    $region76: #{time_encoder_forward.1} parent=5 // pred_fallthru
      _
    %p5527 = scmp.le.s32.totalorder 2, %s20
    // Predicated region
    $region81: #{time_encoder_forward.1} parent=5 // pred_check
      %p5528 = pneg %p5527
    $region82: #{time_encoder_forward.1} parent=5 // pred_check_branch
      %5530 = sbr.rel (%p5528) target = $region84
    $region83: #{time_encoder_forward.1} parent=5 // pred_region
      %s5531 = ssub.s32 %s20, 2
      // Predicated region
      $region85: #{time_encoder_forward.1} parent=83 // pred_check
        %p5532 = pneg %p348
      $region86: #{time_encoder_forward.1} parent=83 // pred_check_branch
        %5534 = sbr.rel (%p5532) target = $region88
      $region87: #{time_encoder_forward.1} parent=83 // pred_region
        %p5535 = scmp.lt.s32.totalorder %s26, 1
        %s5536 = scalar_select %p5535, %s26, 1
        %s5537 = smul.addr %s5536, 4
        %s5538 = scalar_lea.vmem %s14, %s5537
      $region88: #{time_encoder_forward.1} parent=83 // pred_fallthru
        _
    $region84: #{time_encoder_forward.1} parent=5 // pred_fallthru
      _
  $region6: #{time_encoder_forward.1} parent=0 // loop_footer
    %s24 = sadd.s32 1, %s20
  $region7: #{time_encoder_forward.1} parent=0 // loop_footer_branch
    %19 = sbr.rel target = $region3
  $region8: #{time_encoder_forward.1} parent=0 // loop_exit
    _

</llo_original>
